<compile_context>
chip_gen: v5e
topology: v5e:2x2
jax: 0.10.0
libtpu: 0.0.40
codegen_flags: <defaults>
</compile_context>

<pallas_src>
import jax
import jax.numpy as jnp
from jax import lax
from jax.experimental import pallas as pl
from jax.experimental.pallas import tpu as pltpu  # noqa: F401  (TPU backend)

GIN_EPS = 0.0      # GINConv eps (train_eps=False default)
PROTO_EPS = 1e-4   # self.epsilon in the reference
KL_EPS = 1e-7
PACK_W = 128       # lane-dense packed-output width


def _sigmoid(x):
  return 1.0 / (1.0 + jnp.exp(-x))


def _ginnet_kernel(
    # inputs
    x_ref, adj_ref, pool_ref, gdiff_ref, unif_ref,
    w_enc_ref, b_enc_ref,
    g1w1_ref, g1b1_ref, g1w2_ref, g1b2_ref,
    g2w1_ref, g2b1_ref, g2w2_ref, g2b2_ref,
    wfc1_ref, bfc1_ref, wfc2d_ref, bfc2d_ref,
    proto_t_ref, wlp_ref, wlg_ref,
    # outputs
    packed_ref, gemb_ref, active_ref):
  f32 = jnp.float32
  bf16 = jnp.bfloat16
  B = pool_ref.shape[0]
  BN = adj_ref.shape[0]
  D = w_enc_ref.shape[1]
  M = proto_t_ref.shape[1]
  C = wlg_ref.shape[1]

  adj16 = adj_ref[...]                                  # (BN,BN) bf16 0/1 block-diag

  # ---- atom encoder (dense stand-in).
  # TODO(synk): AtomEncoder sums categorical embedding tables; replaced by a
  # single dense projection of float node features.
  h = jnp.dot(x_ref[...].astype(bf16), w_enc_ref[...],
              preferred_element_type=f32) + b_enc_ref[...]          # (BN,D)

  # ---- GIN layers: h' = MLP((1+eps)h + sum_neigh h); bf16 MXU, f32 accum.
  # TODO(synk): GINConv BatchNorm / edge-attr encoder not in the reference
  # snippet; MLP = Linear -> ReLU -> Linear, eps = 0, edge_attr ignored.
  def gin_layer(h, w1, b1, w2, b2):
    agg = jnp.dot(adj16, h.astype(bf16), preferred_element_type=f32)
    z = (1.0 + GIN_EPS) * h + agg
    z = jnp.maximum(jnp.dot(z.astype(bf16), w1, preferred_element_type=f32) + b1, 0.0)
    return jnp.dot(z.astype(bf16), w2, preferred_element_type=f32) + b2

  h = gin_layer(h, g1w1_ref[...], g1b1_ref[...], g1w2_ref[...], g1b2_ref[...])
  h = gin_layer(h, g2w1_ref[...], g2b1_ref[...], g2w2_ref[...], g2b2_ref[...])
  node_feature = h                                                   # (BN,D) f32

  # ---- assignment head. 2-class softmax folded to sigmoid of the logit diff
  # (wfc2 difference column + bias diff folded on host).
  af1 = jnp.tanh(jnp.dot(node_feature.astype(bf16), wfc1_ref[...],
                         preferred_element_type=f32) + bfc1_ref[...])
  sdiff = jnp.dot(af1.astype(bf16), wfc2d_ref[...],
                  preferred_element_type=f32) + bfc2d_ref[...]       # (BN,1)
  a_pos = _sigmoid(sdiff)                                            # assignment[:,0]
  a_neg = 1.0 - a_pos

  # gumbel_softmax(tau=1) applied to the assignment *probs* (as the reference
  # does); also folded to a sigmoid of the pre-differenced gumbel noise.
  lambda_pos = _sigmoid((a_pos - a_neg) + gdiff_ref[...])            # (BN,1)
  lambda_neg = 1.0 - lambda_pos
  # TODO(synk): active_node_index is a ragged per-graph list in torch; emitted
  # as a dense per-node 0/1 mask instead.
  active_ref[...] = (lambda_pos > 0.5).astype(active_ref.dtype)

  # ---- whole-batch node statistics (torch.std_mean over dim=0, unbiased),
  # ones-row matmuls keep the reductions on the MXU.
  ones_row = jnp.ones((1, BN), f32)
  mean = jnp.dot(ones_row, node_feature, preferred_element_type=f32) / BN   # (1,D)
  centered = node_feature - mean
  c2 = centered * centered
  var = jnp.dot(ones_row, c2, preferred_element_type=f32) / (BN - 1)        # (1,D)
  std = jnp.sqrt(var)
  denom = std + KL_EPS
  denom2 = denom * denom

  # ---- KL loss. term1 factorizes: 0.5 * sum_n(ln_n^2) * sum_d(std_d^2/denom_d^2).
  sum_ln2 = jnp.sum(lambda_neg * lambda_neg, keepdims=True)                 # (1,1)
  ratio_sum = jnp.sum(var / denom2, keepdims=True)                          # (1,1)
  lp2 = lambda_pos * lambda_pos                                             # (BN,1)
  t2num = jnp.sum(lp2 * c2, axis=0, keepdims=True)                          # (1,D)
  kl = (0.5 * sum_ln2 * ratio_sum / (BN * D)
        + jnp.sum(t2num / denom2, keepdims=True) / D)                       # (1,1)

  # ---- noisy node features and per-graph mean-pool readout (host pool matrix).
  noisy = (lambda_pos * node_feature + lambda_neg * mean
           + unif_ref[...] * (lambda_neg * std))                            # (BN,D)
  graph_emb = jnp.dot(pool_ref[...], noisy, preferred_element_type=f32)     # (B,D)
  gemb_ref[...] = graph_emb.astype(gemb_ref.dtype)

  # ---- connectivity penalty: mse(diag(l1_normalize(A_s^T Adj A_s)), ones(2)),
  # computed from the two assignment columns without any 2x2 array literal.
  ones_col16 = jnp.ones((BN, 1), bf16)
  adj_apos = jnp.dot(adj16, a_pos.astype(bf16), preferred_element_type=f32)  # (BN,1)
  deg = jnp.dot(adj16, ones_col16, preferred_element_type=f32)               # (BN,1)
  adj_aneg = deg - adj_apos
  n00 = jnp.sum(a_pos * adj_apos, keepdims=True)
  n01 = jnp.sum(a_pos * adj_aneg, keepdims=True)
  n10 = jnp.sum(a_neg * adj_apos, keepdims=True)
  n11 = jnp.sum(a_neg * adj_aneg, keepdims=True)
  d0 = n00 / jnp.maximum(jnp.abs(n00) + jnp.abs(n01), 1e-12)
  d1 = n11 / jnp.maximum(jnp.abs(n10) + jnp.abs(n11), 1e-12)
  pos = 0.5 * ((d0 - 1.0) ** 2 + (d1 - 1.0) ** 2)                            # (1,1)

  # ---- prototype squared distances / log-similarity (prototypes pre-transposed).
  pt = proto_t_ref[...]                                                      # (D,M)
  xp = jnp.dot(graph_emb, pt, preferred_element_type=f32)                    # (B,M)
  g2 = jnp.sum(graph_emb * graph_emb, axis=1, keepdims=True)                 # (B,1)
  p2 = jnp.sum(pt * pt, axis=0, keepdims=True)                               # (1,M)
  # clamp at 0: mathematically distance >= 0; guards log against fp rounding.
  distance = jnp.maximum(-2.0 * xp + g2 + p2, 0.0)
  similarity = jnp.log((distance + 1.0) / (distance + PROTO_EPS))

  # ---- classifier over cat(similarity, graph_emb); weight pre-split on host.
  logits = (jnp.dot(similarity, wlp_ref[...], preferred_element_type=f32)
            + jnp.dot(graph_emb, wlg_ref[...], preferred_element_type=f32))  # (B,C)
  lmax = jnp.max(logits, axis=1, keepdims=True)
  e = jnp.exp(logits - lmax)
  probs = e / jnp.sum(e, axis=1, keepdims=True)

  # ---- lane-dense packed output slab: [logits | probs | sim | dist | kl | pos | 0...]
  packed_ref[...] = jnp.zeros(packed_ref.shape, packed_ref.dtype)
  o = 0
  packed_ref[:, o:o + C] = logits;      o += C
  packed_ref[:, o:o + C] = probs;       o += C
  packed_ref[:, o:o + M] = similarity;  o += M
  packed_ref[:, o:o + M] = distance;    o += M
  packed_ref[:, o:o + 1] = jnp.broadcast_to(kl, (B, 1));  o += 1
  packed_ref[:, o:o + 1] = jnp.broadcast_to(pos, (B, 1))


def ginnet_forward(params, x, adj, key):
  """Fused PGIB/GINNet forward (cont=True branch).

  x: [B, N, F] float32 node features, adj: [B, N, N] float32 0/1 adjacency
  (no self loops).  Returns (logits, probs, active_mask, graph_emb, KL_Loss,
  pos_penalty, prototype_activations, min_distance).
  NOTE: assumes every graph has exactly N real nodes (no padded/ragged graphs).
  """
  B, N, F = x.shape
  D = params["w_enc"].shape[1]
  M, C = params["w_last_p"].shape
  BN = B * N
  assert 2 * C + 2 * M + 2 <= PACK_W, "packed output slab too narrow"
  bf16 = jnp.bfloat16
  f32 = jnp.float32

  # Flat lane-dense node slab + block-diagonal batched adjacency (bf16, exact 0/1).
  x_flat = x.reshape(BN, F).astype(f32)
  adj_bd = jnp.einsum("bc,bij->bicj", jnp.eye(B, dtype=f32),
                      adj.astype(f32)).reshape(BN, BN).astype(bf16)
  # mean-pool segment matrix (global_mean_pool), built host-side.
  pool = jnp.kron(jnp.eye(B, dtype=f32), jnp.ones((1, N), f32)) / N          # (B,BN)

  # Host-side RNG draws (torch uses its global RNG for gumbel_softmax/rand_like).
  k_gum, k_unif = jax.random.split(key)
  g = jax.random.gumbel(k_gum, (BN, 2), f32)
  gdiff = g[:, 0:1] - g[:, 1:2]                                              # (BN,1)
  unif = jax.random.uniform(k_unif, (BN, D), f32)

  # fc2 folded to a single difference column (2-class softmax -> sigmoid).
  wfc2d = (params["w_fc2"][:, 0:1] - params["w_fc2"][:, 1:2]).astype(bf16)   # (D,1)
  bfc2d = (params["b_fc2"][:, 0:1] - params["b_fc2"][:, 1:2]).astype(f32)    # (1,1)
  proto_t = params["prototypes"].astype(f32).T                               # (D,M)

  out_shape = (
      jax.ShapeDtypeStruct((B, PACK_W), f32),   # packed: logits|probs|sim|dist|kl|pos
      jax.ShapeDtypeStruct((B, D), f32),        # graph_emb (lane-dense)
      jax.ShapeDtypeStruct((BN, 1), f32),       # active-node mask (flat)
  )

  packed, graph_emb, active = pl.pallas_call(
      _ginnet_kernel,
      out_shape=out_shape,
  )(x_flat, adj_bd, pool, gdiff, unif,
    params["w_enc"].astype(bf16), params["b_enc"],
    params["gin1_w1"].astype(bf16), params["gin1_b1"],
    params["gin1_w2"].astype(bf16), params["gin1_b2"],
    params["gin2_w1"].astype(bf16), params["gin2_b1"],
    params["gin2_w2"].astype(bf16), params["gin2_b2"],
    params["w_fc1"].astype(bf16), params["b_fc1"],
    wfc2d, bfc2d,
    proto_t, params["w_last_p"], params["w_last_g"])

  o = 0
  logits = packed[:, o:o + C]; o += C
  probs = packed[:, o:o + C]; o += C
  proto_act = packed[:, o:o + M]; o += M
  min_dist = packed[:, o:o + M]; o += M
  kl_loss = packed[0, o]; o += 1
  pos_penalty = packed[0, o]
  active_mask = active.reshape(B, N) > 0.5
  return (logits, probs, active_mask, graph_emb, kl_loss, pos_penalty,
          proto_act, min_dist)

# TODO(synk): the cont=False branch (prototype_predictor MSE loss) and the
# AtomEncoder embedding tables are not translated.


def make_params(key, fin, hidden, num_classes, num_prototypes_per_class):
  M = num_classes * num_prototypes_per_class
  ks = jax.random.split(key, 10)

  def lin(k, fan_in, fan_out):
    return (jax.random.normal(k, (fan_in, fan_out), jnp.float32)
            / jnp.sqrt(jnp.float32(fan_in)))

  zeros = lambda n: jnp.zeros((1, n), jnp.float32)
  proto_class = jnp.repeat(jnp.arange(num_classes), num_prototypes_per_class)
  onehot = jax.nn.one_hot(proto_class, num_classes, dtype=jnp.float32)       # (M,C)

  return {
      "w_enc": lin(ks[0], fin, hidden), "b_enc": zeros(hidden),
      "gin1_w1": lin(ks[1], hidden, hidden), "gin1_b1": zeros(hidden),
      "gin1_w2": lin(ks[2], hidden, hidden), "gin1_b2": zeros(hidden),
      "gin2_w1": lin(ks[3], hidden, hidden), "gin2_b1": zeros(hidden),
      "gin2_w2": lin(ks[4], hidden, hidden), "gin2_b2": zeros(hidden),
      "w_fc1": lin(ks[5], hidden, hidden), "b_fc1": zeros(hidden),
      "w_fc2": lin(ks[6], hidden, 2), "b_fc2": zeros(2),
      "prototypes": jax.random.uniform(ks[7], (M, hidden), jnp.float32),
      # last_layer weight pre-split: prototype half gets the +1 / -0.5
      # class-identity init, embedding half is random (default init).
      "w_last_p": 1.0 * onehot + (-0.5) * (1.0 - onehot),                    # (M,C)
      "w_last_g": (jax.random.normal(ks[8], (hidden, num_classes), jnp.float32)
                   / jnp.sqrt(jnp.float32(hidden + M))),                     # (D,C)
  }


if __name__ == "__main__":
  # B*N = 128 rows and hidden = 128 lanes: the node slab exactly fills MXU tiles.
  B, N, FIN, HIDDEN, C, PPC = 4, 32, 32, 128, 2, 4
  M = C * PPC

  key = jax.random.PRNGKey(0)
  k_x, k_a, k_p, k_noise = jax.random.split(key, 4)

  x = jax.random.normal(k_x, (B, N, FIN), jnp.float32)
  raw = jax.random.uniform(k_a, (B, N, N))
  adj = (raw + jnp.swapaxes(raw, 1, 2) > 1.4).astype(jnp.float32)
  adj = adj * (1.0 - jnp.eye(N, dtype=jnp.float32)[None, :, :])

  params = make_params(k_p, FIN, HIDDEN, C, PPC)

  out = jax.block_until_ready(ginnet_forward(params, x, adj, k_noise))
  (logits, probs, active_mask, graph_emb, kl_loss, pos_penalty,
   proto_act, min_dist) = out

  assert logits.shape == (B, C)
  assert probs.shape == (B, C)
  assert active_mask.shape == (B, N)
  assert graph_emb.shape == (B, HIDDEN)
  assert proto_act.shape == (B, M)
  assert min_dist.shape == (B, M)
  assert kl_loss.shape == () and pos_penalty.shape == ()
  assert bool(jnp.all(jnp.isfinite(logits)))
  assert bool(jnp.all(jnp.isfinite(probs)))
  assert bool(jnp.all(jnp.isfinite(graph_emb)))
  assert bool(jnp.all(jnp.isfinite(proto_act)))
  assert bool(jnp.isfinite(kl_loss)) and bool(jnp.isfinite(pos_penalty))
  assert bool(jnp.all(min_dist >= 0.0))
  assert bool(jnp.allclose(jnp.sum(probs, axis=-1), 1.0, atol=1e-5))
  assert bool(jnp.allclose(probs, jax.nn.softmax(logits, axis=-1), atol=1e-4))

  print("KERNEL_OK")
</pallas_src>

<mosaic_0001>
module attributes {stable_mosaic.version = 11 : i64} {
  func.func @_ginnet_kernel(%arg0: memref<128x32xf32, #tpu.memory_space<vmem>>, %arg1: memref<128x128xbf16, #tpu.memory_space<vmem>>, %arg2: memref<4x128xf32, #tpu.memory_space<vmem>>, %arg3: memref<128x1xf32, #tpu.memory_space<vmem>>, %arg4: memref<128x128xf32, #tpu.memory_space<vmem>>, %arg5: memref<32x128xbf16, #tpu.memory_space<vmem>>, %arg6: memref<1x128xf32, #tpu.memory_space<vmem>>, %arg7: memref<128x128xbf16, #tpu.memory_space<vmem>>, %arg8: memref<1x128xf32, #tpu.memory_space<vmem>>, %arg9: memref<128x128xbf16, #tpu.memory_space<vmem>>, %arg10: memref<1x128xf32, #tpu.memory_space<vmem>>, %arg11: memref<128x128xbf16, #tpu.memory_space<vmem>>, %arg12: memref<1x128xf32, #tpu.memory_space<vmem>>, %arg13: memref<128x128xbf16, #tpu.memory_space<vmem>>, %arg14: memref<1x128xf32, #tpu.memory_space<vmem>>, %arg15: memref<128x128xbf16, #tpu.memory_space<vmem>>, %arg16: memref<1x128xf32, #tpu.memory_space<vmem>>, %arg17: memref<128x1xbf16, #tpu.memory_space<vmem>>, %arg18: memref<1x1xf32, #tpu.memory_space<vmem>>, %arg19: memref<128x8xf32, #tpu.memory_space<vmem>>, %arg20: memref<8x2xf32, #tpu.memory_space<vmem>>, %arg21: memref<128x2xf32, #tpu.memory_space<vmem>>, %arg22: memref<4x128xf32, #tpu.memory_space<vmem>>, %arg23: memref<4x128xf32, #tpu.memory_space<vmem>>, %arg24: memref<128x1xf32, #tpu.memory_space<vmem>>) attributes {dimension_semantics = [], scalar_prefetch = 0 : i64, scratch_operands = 0 : i64, tpu.core_type = #tpu.core_type<tc>} {
    %c0 = arith.constant 0 : index
    %c0_0 = arith.constant 0 : index
    %0 = vector.load %arg1[%c0, %c0_0] : memref<128x128xbf16, #tpu.memory_space<vmem>>, vector<128x128xbf16>
    %c0_1 = arith.constant 0 : index
    %c0_2 = arith.constant 0 : index
    %1 = vector.load %arg0[%c0_1, %c0_2] : memref<128x32xf32, #tpu.memory_space<vmem>>, vector<128x32xf32>
    %2 = arith.truncf %1 : vector<128x32xf32> to vector<128x32xbf16>
    %c0_3 = arith.constant 0 : index
    %c0_4 = arith.constant 0 : index
    %3 = vector.load %arg5[%c0_3, %c0_4] : memref<32x128xbf16, #tpu.memory_space<vmem>>, vector<32x128xbf16>
    %cst = arith.constant dense<0.000000e+00> : vector<128x128xf32>
    %4 = tpu.matmul %2, %3, %cst {dimension_numbers = #tpu.dot_dimension_numbers<[1], [0], [0], [1], [0, 0, 1, 1], [], []>} : vector<128x32xbf16>, vector<32x128xbf16>, vector<128x128xf32> -> vector<128x128xf32>
    %c0_5 = arith.constant 0 : index
    %c0_6 = arith.constant 0 : index
    %5 = vector.load %arg6[%c0_5, %c0_6] : memref<1x128xf32, #tpu.memory_space<vmem>>, vector<1x128xf32>
    %6 = vector.broadcast %5 : vector<1x128xf32> to vector<128x128xf32>
    %7 = arith.addf %4, %6 : vector<128x128xf32>
    %c0_7 = arith.constant 0 : index
    %c0_8 = arith.constant 0 : index
    %8 = vector.load %arg7[%c0_7, %c0_8] : memref<128x128xbf16, #tpu.memory_space<vmem>>, vector<128x128xbf16>
    %c0_9 = arith.constant 0 : index
    %c0_10 = arith.constant 0 : index
    %9 = vector.load %arg8[%c0_9, %c0_10] : memref<1x128xf32, #tpu.memory_space<vmem>>, vector<1x128xf32>
    %c0_11 = arith.constant 0 : index
    %c0_12 = arith.constant 0 : index
    %10 = vector.load %arg9[%c0_11, %c0_12] : memref<128x128xbf16, #tpu.memory_space<vmem>>, vector<128x128xbf16>
    %c0_13 = arith.constant 0 : index
    %c0_14 = arith.constant 0 : index
    %11 = vector.load %arg10[%c0_13, %c0_14] : memref<1x128xf32, #tpu.memory_space<vmem>>, vector<1x128xf32>
    %12 = arith.truncf %7 : vector<128x128xf32> to vector<128x128xbf16>
    %cst_15 = arith.constant dense<0.000000e+00> : vector<128x128xf32>
    %13 = tpu.matmul %0, %12, %cst_15 {dimension_numbers = #tpu.dot_dimension_numbers<[1], [0], [0], [1], [0, 0, 1, 1], [], []>} : vector<128x128xbf16>, vector<128x128xbf16>, vector<128x128xf32> -> vector<128x128xf32>
    %cst_16 = arith.constant 1.000000e+00 : f32
    %14 = vector.broadcast %cst_16 : f32 to vector<128x128xf32>
    %15 = arith.mulf %14, %7 : vector<128x128xf32>
    %16 = arith.addf %15, %13 : vector<128x128xf32>
    %17 = arith.truncf %16 : vector<128x128xf32> to vector<128x128xbf16>
    %cst_17 = arith.constant dense<0.000000e+00> : vector<128x128xf32>
    %18 = tpu.matmul %17, %8, %cst_17 {dimension_numbers = #tpu.dot_dimension_numbers<[1], [0], [0], [1], [0, 0, 1, 1], [], []>} : vector<128x128xbf16>, vector<128x128xbf16>, vector<128x128xf32> -> vector<128x128xf32>
    %19 = vector.broadcast %9 : vector<1x128xf32> to vector<128x128xf32>
    %20 = arith.addf %18, %19 : vector<128x128xf32>
    %cst_18 = arith.constant 0.000000e+00 : f32
    %21 = vector.broadcast %cst_18 : f32 to vector<128x128xf32>
    %22 = arith.maximumf %20, %21 : vector<128x128xf32>
    %23 = arith.truncf %22 : vector<128x128xf32> to vector<128x128xbf16>
    %cst_19 = arith.constant dense<0.000000e+00> : vector<128x128xf32>
    %24 = tpu.matmul %23, %10, %cst_19 {dimension_numbers = #tpu.dot_dimension_numbers<[1], [0], [0], [1], [0, 0, 1, 1], [], []>} : vector<128x128xbf16>, vector<128x128xbf16>, vector<128x128xf32> -> vector<128x128xf32>
    %25 = vector.broadcast %11 : vector<1x128xf32> to vector<128x128xf32>
    %26 = arith.addf %24, %25 : vector<128x128xf32>
    %c0_20 = arith.constant 0 : index
    %c0_21 = arith.constant 0 : index
    %27 = vector.load %arg11[%c0_20, %c0_21] : memref<128x128xbf16, #tpu.memory_space<vmem>>, vector<128x128xbf16>
    %c0_22 = arith.constant 0 : index
    %c0_23 = arith.constant 0 : index
    %28 = vector.load %arg12[%c0_22, %c0_23] : memref<1x128xf32, #tpu.memory_space<vmem>>, vector<1x128xf32>
    %c0_24 = arith.constant 0 : index
    %c0_25 = arith.constant 0 : index
    %29 = vector.load %arg13[%c0_24, %c0_25] : memref<128x128xbf16, #tpu.memory_space<vmem>>, vector<128x128xbf16>
    %c0_26 = arith.constant 0 : index
    %c0_27 = arith.constant 0 : index
    %30 = vector.load %arg14[%c0_26, %c0_27] : memref<1x128xf32, #tpu.memory_space<vmem>>, vector<1x128xf32>
    %31 = arith.truncf %26 : vector<128x128xf32> to vector<128x128xbf16>
    %cst_28 = arith.constant dense<0.000000e+00> : vector<128x128xf32>
    %32 = tpu.matmul %0, %31, %cst_28 {dimension_numbers = #tpu.dot_dimension_numbers<[1], [0], [0], [1], [0, 0, 1, 1], [], []>} : vector<128x128xbf16>, vector<128x128xbf16>, vector<128x128xf32> -> vector<128x128xf32>
    %cst_29 = arith.constant 1.000000e+00 : f32
    %33 = vector.broadcast %cst_29 : f32 to vector<128x128xf32>
    %34 = arith.mulf %33, %26 : vector<128x128xf32>
    %35 = arith.addf %34, %32 : vector<128x128xf32>
    %36 = arith.truncf %35 : vector<128x128xf32> to vector<128x128xbf16>
    %cst_30 = arith.constant dense<0.000000e+00> : vector<128x128xf32>
    %37 = tpu.matmul %36, %27, %cst_30 {dimension_numbers = #tpu.dot_dimension_numbers<[1], [0], [0], [1], [0, 0, 1, 1], [], []>} : vector<128x128xbf16>, vector<128x128xbf16>, vector<128x128xf32> -> vector<128x128xf32>
    %38 = vector.broadcast %28 : vector<1x128xf32> to vector<128x128xf32>
    %39 = arith.addf %37, %38 : vector<128x128xf32>
    %cst_31 = arith.constant 0.000000e+00 : f32
    %40 = vector.broadcast %cst_31 : f32 to vector<128x128xf32>
    %41 = arith.maximumf %39, %40 : vector<128x128xf32>
    %42 = arith.truncf %41 : vector<128x128xf32> to vector<128x128xbf16>
    %cst_32 = arith.constant dense<0.000000e+00> : vector<128x128xf32>
    %43 = tpu.matmul %42, %29, %cst_32 {dimension_numbers = #tpu.dot_dimension_numbers<[1], [0], [0], [1], [0, 0, 1, 1], [], []>} : vector<128x128xbf16>, vector<128x128xbf16>, vector<128x128xf32> -> vector<128x128xf32>
    %44 = vector.broadcast %30 : vector<1x128xf32> to vector<128x128xf32>
    %45 = arith.addf %43, %44 : vector<128x128xf32>
    %46 = arith.truncf %45 : vector<128x128xf32> to vector<128x128xbf16>
    %c0_33 = arith.constant 0 : index
    %c0_34 = arith.constant 0 : index
    %47 = vector.load %arg15[%c0_33, %c0_34] : memref<128x128xbf16, #tpu.memory_space<vmem>>, vector<128x128xbf16>
    %cst_35 = arith.constant dense<0.000000e+00> : vector<128x128xf32>
    %48 = tpu.matmul %46, %47, %cst_35 {dimension_numbers = #tpu.dot_dimension_numbers<[1], [0], [0], [1], [0, 0, 1, 1], [], []>} : vector<128x128xbf16>, vector<128x128xbf16>, vector<128x128xf32> -> vector<128x128xf32>
    %c0_36 = arith.constant 0 : index
    %c0_37 = arith.constant 0 : index
    %49 = vector.load %arg16[%c0_36, %c0_37] : memref<1x128xf32, #tpu.memory_space<vmem>>, vector<1x128xf32>
    %50 = vector.broadcast %49 : vector<1x128xf32> to vector<128x128xf32>
    %51 = arith.addf %48, %50 : vector<128x128xf32>
    %52 = math.tanh %51 : vector<128x128xf32>
    %53 = arith.truncf %52 : vector<128x128xf32> to vector<128x128xbf16>
    %c0_38 = arith.constant 0 : index
    %c0_39 = arith.constant 0 : index
    %54 = vector.load %arg17[%c0_38, %c0_39] : memref<128x1xbf16, #tpu.memory_space<vmem>>, vector<128x1xbf16>
    %cst_40 = arith.constant dense<0.000000e+00> : vector<128x1xf32>
    %55 = tpu.matmul %53, %54, %cst_40 {dimension_numbers = #tpu.dot_dimension_numbers<[1], [0], [0], [1], [0, 0, 1, 1], [], []>} : vector<128x128xbf16>, vector<128x1xbf16>, vector<128x1xf32> -> vector<128x1xf32>
    %c0_41 = arith.constant 0 : index
    %c0_42 = arith.constant 0 : index
    %56 = vector.load %arg18[%c0_41, %c0_42] : memref<1x1xf32, #tpu.memory_space<vmem>>, vector<1x1xf32>
    %57 = vector.broadcast %56 : vector<1x1xf32> to vector<128x1xf32>
    %58 = arith.addf %55, %57 : vector<128x1xf32>
    %cst_43 = arith.constant 0.000000e+00 : f32
    %59 = vector.broadcast %cst_43 : f32 to vector<128x1xf32>
    %60 = arith.subf %59, %58 : vector<128x1xf32>
    %61 = math.exp %60 : vector<128x1xf32>
    %cst_44 = arith.constant 1.000000e+00 : f32
    %62 = vector.broadcast %cst_44 : f32 to vector<128x1xf32>
    %63 = arith.addf %62, %61 : vector<128x1xf32>
    %cst_45 = arith.constant 1.000000e+00 : f32
    %64 = vector.broadcast %cst_45 : f32 to vector<128x1xf32>
    %65 = arith.divf %64, %63 : vector<128x1xf32>
    %cst_46 = arith.constant 1.000000e+00 : f32
    %66 = vector.broadcast %cst_46 : f32 to vector<128x1xf32>
    %67 = arith.subf %66, %65 : vector<128x1xf32>
    %68 = arith.subf %65, %67 : vector<128x1xf32>
    %c0_47 = arith.constant 0 : index
    %c0_48 = arith.constant 0 : index
    %69 = vector.load %arg3[%c0_47, %c0_48] : memref<128x1xf32, #tpu.memory_space<vmem>>, vector<128x1xf32>
    %70 = arith.addf %68, %69 : vector<128x1xf32>
    %cst_49 = arith.constant 0.000000e+00 : f32
    %71 = vector.broadcast %cst_49 : f32 to vector<128x1xf32>
    %72 = arith.subf %71, %70 : vector<128x1xf32>
    %73 = math.exp %72 : vector<128x1xf32>
    %cst_50 = arith.constant 1.000000e+00 : f32
    %74 = vector.broadcast %cst_50 : f32 to vector<128x1xf32>
    %75 = arith.addf %74, %73 : vector<128x1xf32>
    %cst_51 = arith.constant 1.000000e+00 : f32
    %76 = vector.broadcast %cst_51 : f32 to vector<128x1xf32>
    %77 = arith.divf %76, %75 : vector<128x1xf32>
    %cst_52 = arith.constant 1.000000e+00 : f32
    %78 = vector.broadcast %cst_52 : f32 to vector<128x1xf32>
    %79 = arith.subf %78, %77 : vector<128x1xf32>
    %cst_53 = arith.constant 5.000000e-01 : f32
    %80 = vector.broadcast %cst_53 : f32 to vector<128x1xf32>
    %81 = arith.cmpf ogt, %77, %80 : vector<128x1xf32>
    %82 = arith.extui %81 : vector<128x1xi1> to vector<128x1xi32>
    %83 = arith.sitofp %82 : vector<128x1xi32> to vector<128x1xf32>
    %c0_54 = arith.constant 0 : index
    %c0_55 = arith.constant 0 : index
    %84 = vector.load %arg24[%c0_54, %c0_55] : memref<128x1xf32, #tpu.memory_space<vmem>>, vector<128x1xf32>
    tpu.vector_store %arg24[%c0_54, %c0_55], %83 {strides = array<i32>} : memref<128x1xf32, #tpu.memory_space<vmem>>, vector<128x1xf32>,
    %cst_56 = arith.constant 1.000000e+00 : f32
    %85 = vector.broadcast %cst_56 : f32 to vector<1x128xf32>
    %cst_57 = arith.constant dense<0.000000e+00> : vector<1x128xf32>
    %86 = tpu.matmul %85, %45, %cst_57 {dimension_numbers = #tpu.dot_dimension_numbers<[1], [0], [0], [1], [0, 0, 1, 1], [], []>} : vector<1x128xf32>, vector<128x128xf32>, vector<1x128xf32> -> vector<1x128xf32>
    %cst_58 = arith.constant 1.280000e+02 : f32
    %87 = vector.broadcast %cst_58 : f32 to vector<1x128xf32>
    %88 = arith.divf %86, %87 : vector<1x128xf32>
    %89 = vector.broadcast %88 : vector<1x128xf32> to vector<128x128xf32>
    %90 = arith.subf %45, %89 : vector<128x128xf32>
    %91 = arith.mulf %90, %90 : vector<128x128xf32>
    %cst_59 = arith.constant dense<0.000000e+00> : vector<1x128xf32>
    %92 = tpu.matmul %85, %91, %cst_59 {dimension_numbers = #tpu.dot_dimension_numbers<[1], [0], [0], [1], [0, 0, 1, 1], [], []>} : vector<1x128xf32>, vector<128x128xf32>, vector<1x128xf32> -> vector<1x128xf32>
    %cst_60 = arith.constant 1.270000e+02 : f32
    %93 = vector.broadcast %cst_60 : f32 to vector<1x128xf32>
    %94 = arith.divf %92, %93 : vector<1x128xf32>
    %95 = math.sqrt %94 : vector<1x128xf32>
    %cst_61 = arith.constant 1.000000e-07 : f32
    %96 = vector.broadcast %cst_61 : f32 to vector<1x128xf32>
    %97 = arith.addf %95, %96 : vector<1x128xf32>
    %98 = arith.mulf %97, %97 : vector<1x128xf32>
    %99 = arith.mulf %79, %79 : vector<128x1xf32>
    %100 = vector.shape_cast %99 : vector<128x1xf32> to vector<1x128x1xf32>
    %cst_62 = arith.constant dense<0.000000e+00> : vector<1xf32>
    %101 = vector.multi_reduction <add>, %100, %cst_62 [1, 2] : vector<1x128x1xf32> to vector<1xf32>
    %102 = vector.shape_cast %101 : vector<1xf32> to vector<1x1x1xf32>
    %103 = vector.extract %102[0, 0, 0] : f32 from vector<1x1x1xf32>
    %104 = vector.broadcast %103 : f32 to vector<1x1xf32>
    %105 = arith.divf %94, %98 : vector<1x128xf32>
    %106 = vector.shape_cast %105 : vector<1x128xf32> to vector<1x1x128xf32>
    %cst_63 = arith.constant dense<0.000000e+00> : vector<1xf32>
    %107 = vector.multi_reduction <add>, %106, %cst_63 [1, 2] : vector<1x1x128xf32> to vector<1xf32>
    %108 = vector.shape_cast %107 : vector<1xf32> to vector<1x1x1xf32>
    %109 = vector.extract %108[0, 0, 0] : f32 from vector<1x1x1xf32>
    %110 = vector.broadcast %109 : f32 to vector<1x1xf32>
    %111 = arith.mulf %77, %77 : vector<128x1xf32>
    %112 = vector.broadcast %111 : vector<128x1xf32> to vector<128x128xf32>
    %113 = arith.mulf %112, %91 : vector<128x128xf32>
    %cst_64 = arith.constant dense<0.000000e+00> : vector<128xf32>
    %114 = vector.multi_reduction <add>, %113, %cst_64 [0] : vector<128x128xf32> to vector<128xf32>
    %115 = vector.shape_cast %114 : vector<128xf32> to vector<1x128xf32>
    %cst_65 = arith.constant 5.000000e-01 : f32
    %116 = vector.broadcast %cst_65 : f32 to vector<1x1xf32>
    %117 = arith.mulf %116, %104 : vector<1x1xf32>
    %118 = arith.mulf %117, %110 : vector<1x1xf32>
    %cst_66 = arith.constant 1.638400e+04 : f32
    %119 = vector.broadcast %cst_66 : f32 to vector<1x1xf32>
    %120 = arith.divf %118, %119 : vector<1x1xf32>
    %121 = arith.divf %115, %98 : vector<1x128xf32>
    %122 = vector.shape_cast %121 : vector<1x128xf32> to vector<1x1x128xf32>
    %cst_67 = arith.constant dense<0.000000e+00> : vector<1xf32>
    %123 = vector.multi_reduction <add>, %122, %cst_67 [1, 2] : vector<1x1x128xf32> to vector<1xf32>
    %124 = vector.shape_cast %123 : vector<1xf32> to vector<1x1x1xf32>
    %125 = vector.extract %124[0, 0, 0] : f32 from vector<1x1x1xf32>
    %126 = vector.broadcast %125 : f32 to vector<1x1xf32>
    %cst_68 = arith.constant 1.280000e+02 : f32
    %127 = vector.broadcast %cst_68 : f32 to vector<1x1xf32>
    %128 = arith.divf %126, %127 : vector<1x1xf32>
    %129 = arith.addf %120, %128 : vector<1x1xf32>
    %130 = vector.broadcast %77 : vector<128x1xf32> to vector<128x128xf32>
    %131 = arith.mulf %130, %45 : vector<128x128xf32>
    %132 = vector.broadcast %79 : vector<128x1xf32> to vector<128x128xf32>
    %133 = vector.broadcast %88 : vector<1x128xf32> to vector<128x128xf32>
    %134 = arith.mulf %132, %133 : vector<128x128xf32>
    %135 = arith.addf %131, %134 : vector<128x128xf32>
    %c0_69 = arith.constant 0 : index
    %c0_70 = arith.constant 0 : index
    %136 = vector.load %arg4[%c0_69, %c0_70] : memref<128x128xf32, #tpu.memory_space<vmem>>, vector<128x128xf32>
    %137 = vector.broadcast %79 : vector<128x1xf32> to vector<128x128xf32>
    %138 = vector.broadcast %95 : vector<1x128xf32> to vector<128x128xf32>
    %139 = arith.mulf %137, %138 : vector<128x128xf32>
    %140 = arith.mulf %136, %139 : vector<128x128xf32>
    %141 = arith.addf %135, %140 : vector<128x128xf32>
    %c0_71 = arith.constant 0 : index
    %c0_72 = arith.constant 0 : index
    %142 = vector.load %arg2[%c0_71, %c0_72] : memref<4x128xf32, #tpu.memory_space<vmem>>, vector<4x128xf32>
    %cst_73 = arith.constant dense<0.000000e+00> : vector<4x128xf32>
    %143 = tpu.matmul %142, %141, %cst_73 {dimension_numbers = #tpu.dot_dimension_numbers<[1], [0], [0], [1], [0, 0, 1, 1], [], []>} : vector<4x128xf32>, vector<128x128xf32>, vector<4x128xf32> -> vector<4x128xf32>
    %c0_74 = arith.constant 0 : index
    %c0_75 = arith.constant 0 : index
    %144 = vector.load %arg23[%c0_74, %c0_75] : memref<4x128xf32, #tpu.memory_space<vmem>>, vector<4x128xf32>
    tpu.vector_store %arg23[%c0_74, %c0_75], %143 {strides = array<i32>} : memref<4x128xf32, #tpu.memory_space<vmem>>, vector<4x128xf32>,
    %cst_76 = arith.constant 1.000000e+00 : bf16
    %145 = vector.broadcast %cst_76 : bf16 to vector<128x1xbf16>
    %146 = arith.truncf %65 : vector<128x1xf32> to vector<128x1xbf16>
    %cst_77 = arith.constant dense<0.000000e+00> : vector<128x1xf32>
    %147 = tpu.matmul %0, %146, %cst_77 {dimension_numbers = #tpu.dot_dimension_numbers<[1], [0], [0], [1], [0, 0, 1, 1], [], []>} : vector<128x128xbf16>, vector<128x1xbf16>, vector<128x1xf32> -> vector<128x1xf32>
    %cst_78 = arith.constant dense<0.000000e+00> : vector<128x1xf32>
    %148 = tpu.matmul %0, %145, %cst_78 {dimension_numbers = #tpu.dot_dimension_numbers<[1], [0], [0], [1], [0, 0, 1, 1], [], []>} : vector<128x128xbf16>, vector<128x1xbf16>, vector<128x1xf32> -> vector<128x1xf32>
    %149 = arith.subf %148, %147 : vector<128x1xf32>
    %150 = arith.mulf %65, %147 : vector<128x1xf32>
    %151 = vector.shape_cast %150 : vector<128x1xf32> to vector<1x128x1xf32>
    %cst_79 = arith.constant dense<0.000000e+00> : vector<1xf32>
    %152 = vector.multi_reduction <add>, %151, %cst_79 [1, 2] : vector<1x128x1xf32> to vector<1xf32>
    %153 = vector.shape_cast %152 : vector<1xf32> to vector<1x1x1xf32>
    %154 = vector.extract %153[0, 0, 0] : f32 from vector<1x1x1xf32>
    %155 = vector.broadcast %154 : f32 to vector<1x1xf32>
    %156 = arith.mulf %65, %149 : vector<128x1xf32>
    %157 = vector.shape_cast %156 : vector<128x1xf32> to vector<1x128x1xf32>
    %cst_80 = arith.constant dense<0.000000e+00> : vector<1xf32>
    %158 = vector.multi_reduction <add>, %157, %cst_80 [1, 2] : vector<1x128x1xf32> to vector<1xf32>
    %159 = vector.shape_cast %158 : vector<1xf32> to vector<1x1x1xf32>
    %160 = vector.extract %159[0, 0, 0] : f32 from vector<1x1x1xf32>
    %161 = vector.broadcast %160 : f32 to vector<1x1xf32>
    %162 = arith.mulf %67, %147 : vector<128x1xf32>
    %163 = vector.shape_cast %162 : vector<128x1xf32> to vector<1x128x1xf32>
    %cst_81 = arith.constant dense<0.000000e+00> : vector<1xf32>
    %164 = vector.multi_reduction <add>, %163, %cst_81 [1, 2] : vector<1x128x1xf32> to vector<1xf32>
    %165 = vector.shape_cast %164 : vector<1xf32> to vector<1x1x1xf32>
    %166 = vector.extract %165[0, 0, 0] : f32 from vector<1x1x1xf32>
    %167 = vector.broadcast %166 : f32 to vector<1x1xf32>
    %168 = arith.mulf %67, %149 : vector<128x1xf32>
    %169 = vector.shape_cast %168 : vector<128x1xf32> to vector<1x128x1xf32>
    %cst_82 = arith.constant dense<0.000000e+00> : vector<1xf32>
    %170 = vector.multi_reduction <add>, %169, %cst_82 [1, 2] : vector<1x128x1xf32> to vector<1xf32>
    %171 = vector.shape_cast %170 : vector<1xf32> to vector<1x1x1xf32>
    %172 = vector.extract %171[0, 0, 0] : f32 from vector<1x1x1xf32>
    %173 = vector.broadcast %172 : f32 to vector<1x1xf32>
    %174 = math.absf %155 : vector<1x1xf32>
    %175 = math.absf %161 : vector<1x1xf32>
    %176 = arith.addf %174, %175 : vector<1x1xf32>
    %cst_83 = arith.constant 9.99999996E-13 : f32
    %177 = vector.broadcast %cst_83 : f32 to vector<1x1xf32>
    %178 = arith.maximumf %176, %177 : vector<1x1xf32>
    %179 = arith.divf %155, %178 : vector<1x1xf32>
    %180 = math.absf %167 : vector<1x1xf32>
    %181 = math.absf %173 : vector<1x1xf32>
    %182 = arith.addf %180, %181 : vector<1x1xf32>
    %cst_84 = arith.constant 9.99999996E-13 : f32
    %183 = vector.broadcast %cst_84 : f32 to vector<1x1xf32>
    %184 = arith.maximumf %182, %183 : vector<1x1xf32>
    %185 = arith.divf %173, %184 : vector<1x1xf32>
    %cst_85 = arith.constant 1.000000e+00 : f32
    %186 = vector.broadcast %cst_85 : f32 to vector<1x1xf32>
    %187 = arith.subf %179, %186 : vector<1x1xf32>
    %188 = arith.mulf %187, %187 : vector<1x1xf32>
    %cst_86 = arith.constant 1.000000e+00 : f32
    %189 = vector.broadcast %cst_86 : f32 to vector<1x1xf32>
    %190 = arith.subf %185, %189 : vector<1x1xf32>
    %191 = arith.mulf %190, %190 : vector<1x1xf32>
    %192 = arith.addf %188, %191 : vector<1x1xf32>
    %cst_87 = arith.constant 5.000000e-01 : f32
    %193 = vector.broadcast %cst_87 : f32 to vector<1x1xf32>
    %194 = arith.mulf %193, %192 : vector<1x1xf32>
    %c0_88 = arith.constant 0 : index
    %c0_89 = arith.constant 0 : index
    %195 = vector.load %arg19[%c0_88, %c0_89] : memref<128x8xf32, #tpu.memory_space<vmem>>, vector<128x8xf32>
    %cst_90 = arith.constant dense<0.000000e+00> : vector<4x8xf32>
    %196 = tpu.matmul %143, %195, %cst_90 {dimension_numbers = #tpu.dot_dimension_numbers<[1], [0], [0], [1], [0, 0, 1, 1], [], []>} : vector<4x128xf32>, vector<128x8xf32>, vector<4x8xf32> -> vector<4x8xf32>
    %197 = arith.mulf %143, %143 : vector<4x128xf32>
    %cst_91 = arith.constant dense<0.000000e+00> : vector<4xf32>
    %198 = vector.multi_reduction <add>, %197, %cst_91 [1] : vector<4x128xf32> to vector<4xf32>
    %199 = vector.shape_cast %198 : vector<4xf32> to vector<4x1xf32>
    %200 = arith.mulf %195, %195 : vector<128x8xf32>
    %cst_92 = arith.constant dense<0.000000e+00> : vector<8xf32>
    %201 = vector.multi_reduction <add>, %200, %cst_92 [0] : vector<128x8xf32> to vector<8xf32>
    %202 = vector.shape_cast %201 : vector<8xf32> to vector<1x8xf32>
    %cst_93 = arith.constant -2.000000e+00 : f32
    %203 = vector.broadcast %cst_93 : f32 to vector<4x8xf32>
    %204 = arith.mulf %203, %196 : vector<4x8xf32>
    %205 = vector.broadcast %199 : vector<4x1xf32> to vector<4x8xf32>
    %206 = arith.addf %204, %205 : vector<4x8xf32>
    %207 = vector.broadcast %202 : vector<1x8xf32> to vector<4x8xf32>
    %208 = arith.addf %206, %207 : vector<4x8xf32>
    %cst_94 = arith.constant 0.000000e+00 : f32
    %209 = vector.broadcast %cst_94 : f32 to vector<4x8xf32>
    %210 = arith.maximumf %208, %209 : vector<4x8xf32>
    %cst_95 = arith.constant 1.000000e+00 : f32
    %211 = vector.broadcast %cst_95 : f32 to vector<4x8xf32>
    %212 = arith.addf %210, %211 : vector<4x8xf32>
    %cst_96 = arith.constant 9.99999974E-5 : f32
    %213 = vector.broadcast %cst_96 : f32 to vector<4x8xf32>
    %214 = arith.addf %210, %213 : vector<4x8xf32>
    %215 = arith.divf %212, %214 : vector<4x8xf32>
    %216 = math.log %215 : vector<4x8xf32>
    %c0_97 = arith.constant 0 : index
    %c0_98 = arith.constant 0 : index
    %217 = vector.load %arg20[%c0_97, %c0_98] : memref<8x2xf32, #tpu.memory_space<vmem>>, vector<8x2xf32>
    %cst_99 = arith.constant dense<0.000000e+00> : vector<4x2xf32>
    %218 = tpu.matmul %216, %217, %cst_99 {dimension_numbers = #tpu.dot_dimension_numbers<[1], [0], [0], [1], [0, 0, 1, 1], [], []>} : vector<4x8xf32>, vector<8x2xf32>, vector<4x2xf32> -> vector<4x2xf32>
    %c0_100 = arith.constant 0 : index
    %c0_101 = arith.constant 0 : index
    %219 = vector.load %arg21[%c0_100, %c0_101] : memref<128x2xf32, #tpu.memory_space<vmem>>, vector<128x2xf32>
    %cst_102 = arith.constant dense<0.000000e+00> : vector<4x2xf32>
    %220 = tpu.matmul %143, %219, %cst_102 {dimension_numbers = #tpu.dot_dimension_numbers<[1], [0], [0], [1], [0, 0, 1, 1], [], []>} : vector<4x128xf32>, vector<128x2xf32>, vector<4x2xf32> -> vector<4x2xf32>
    %221 = arith.addf %218, %220 : vector<4x2xf32>
    %cst_103 = arith.constant dense<0xFF800000> : vector<4xf32>
    %222 = vector.multi_reduction <maximumf>, %221, %cst_103 [1] : vector<4x2xf32> to vector<4xf32>
    %223 = vector.shape_cast %222 : vector<4xf32> to vector<4x1xf32>
    %224 = vector.broadcast %223 : vector<4x1xf32> to vector<4x2xf32>
    %225 = arith.subf %221, %224 : vector<4x2xf32>
    %226 = math.exp %225 : vector<4x2xf32>
    %cst_104 = arith.constant dense<0.000000e+00> : vector<4xf32>
    %227 = vector.multi_reduction <add>, %226, %cst_104 [1] : vector<4x2xf32> to vector<4xf32>
    %228 = vector.shape_cast %227 : vector<4xf32> to vector<4x1xf32>
    %229 = vector.broadcast %228 : vector<4x1xf32> to vector<4x2xf32>
    %230 = arith.divf %226, %229 : vector<4x2xf32>
    %cst_105 = arith.constant 0.000000e+00 : f32
    %231 = vector.broadcast %cst_105 : f32 to vector<4x128xf32>
    %c0_106 = arith.constant 0 : index
    %c0_107 = arith.constant 0 : index
    %232 = vector.load %arg22[%c0_106, %c0_107] : memref<4x128xf32, #tpu.memory_space<vmem>>, vector<4x128xf32>
    tpu.vector_store %arg22[%c0_106, %c0_107], %231 {strides = array<i32>} : memref<4x128xf32, #tpu.memory_space<vmem>>, vector<4x128xf32>,
    %c0_108 = arith.constant 0 : index
    %c0_109 = arith.constant 0 : index
    %233 = vector.load %arg22[%c0_108, %c0_109] : memref<4x128xf32, #tpu.memory_space<vmem>>, vector<4x2xf32>
    tpu.vector_store %arg22[%c0_108, %c0_109], %221 {strides = array<i32>} : memref<4x128xf32, #tpu.memory_space<vmem>>, vector<4x2xf32>,
    %c0_110 = arith.constant 0 : index
    %c2 = arith.constant 2 : index
    %234 = vector.load %arg22[%c0_110, %c2] : memref<4x128xf32, #tpu.memory_space<vmem>>, vector<4x2xf32>
    tpu.vector_store %arg22[%c0_110, %c2], %230 {strides = array<i32>} : memref<4x128xf32, #tpu.memory_space<vmem>>, vector<4x2xf32>,
    %c0_111 = arith.constant 0 : index
    %c4 = arith.constant 4 : index
    %235 = vector.load %arg22[%c0_111, %c4] : memref<4x128xf32, #tpu.memory_space<vmem>>, vector<4x8xf32>
    tpu.vector_store %arg22[%c0_111, %c4], %216 {strides = array<i32>} : memref<4x128xf32, #tpu.memory_space<vmem>>, vector<4x8xf32>,
    %c0_112 = arith.constant 0 : index
    %c12 = arith.constant 12 : index
    %236 = vector.load %arg22[%c0_112, %c12] : memref<4x128xf32, #tpu.memory_space<vmem>>, vector<4x8xf32>
    tpu.vector_store %arg22[%c0_112, %c12], %210 {strides = array<i32>} : memref<4x128xf32, #tpu.memory_space<vmem>>, vector<4x8xf32>,
    %237 = vector.shape_cast %129 : vector<1x1xf32> to vector<1x1xf32>
    %238 = vector.broadcast %237 : vector<1x1xf32> to vector<4x1xf32>
    %c0_113 = arith.constant 0 : index
    %c20 = arith.constant 20 : index
    %239 = vector.load %arg22[%c0_113, %c20] : memref<4x128xf32, #tpu.memory_space<vmem>>, vector<4x1xf32>
    tpu.vector_store %arg22[%c0_113, %c20], %238 {strides = array<i32>} : memref<4x128xf32, #tpu.memory_space<vmem>>, vector<4x1xf32>,
    %240 = vector.shape_cast %194 : vector<1x1xf32> to vector<1x1xf32>
    %241 = vector.broadcast %240 : vector<1x1xf32> to vector<4x1xf32>
    %c0_114 = arith.constant 0 : index
    %c21 = arith.constant 21 : index
    %242 = vector.load %arg22[%c0_114, %c21] : memref<4x128xf32, #tpu.memory_space<vmem>>, vector<4x1xf32>
    tpu.vector_store %arg22[%c0_114, %c21], %241 {strides = array<i32>} : memref<4x128xf32, #tpu.memory_space<vmem>>, vector<4x1xf32>,
    return
  }
}

</mosaic_0001>

<llo_original>
// kernel: tpu_custom_call.1
$region0: #{tpu_custom_call.1}
  #allocation0 [shape = 'u32[]', space=smem, size = 0x4, offset = 0x4, fixed_abs, tag = 'smem constant byte address 0x4 - core index']
  #allocation1 [shape = 'u32[72,128]{1,0:T(1,128)}', space=vmem, size = 0x9000, scoped, tag = 'internal scratch']
  #allocation2 [shape = 'f32[1,1]{1,0:T(1,128)S(1)}', space=vmem, size = 0x200, scoped, tag = 'scoped memory for tpu_custom_call.1']
  %s0 = inlined_call_operand.vmem [shape: f32[128,32], index: 0, kind: input, shape index: {}]
  %s1 = inlined_call_operand.vmem [shape: bf16[128,128], index: 1, kind: input, shape index: {}]
  %s2 = inlined_call_operand.vmem [shape: f32[4,128], index: 2, kind: input, shape index: {}]
  %s3 = inlined_call_operand.vmem [shape: f32[128,1], index: 3, kind: input, shape index: {}]
  %s4 = inlined_call_operand.vmem [shape: f32[128,128], index: 4, kind: input, shape index: {}]
  %s5 = inlined_call_operand.vmem [shape: bf16[32,128], index: 5, kind: input, shape index: {}]
  %s6 = inlined_call_operand.vmem [shape: f32[1,128], index: 6, kind: input, shape index: {}]
  %s7 = inlined_call_operand.vmem [shape: bf16[128,128], index: 7, kind: input, shape index: {}]
  %s8 = inlined_call_operand.vmem [shape: f32[1,128], index: 8, kind: input, shape index: {}]
  %s9 = inlined_call_operand.vmem [shape: bf16[128,128], index: 9, kind: input, shape index: {}]
  %s10 = inlined_call_operand.vmem [shape: f32[1,128], index: 10, kind: input, shape index: {}]
  %s11 = inlined_call_operand.vmem [shape: bf16[128,128], index: 11, kind: input, shape index: {}]
  %s12 = inlined_call_operand.vmem [shape: f32[1,128], index: 12, kind: input, shape index: {}]
  %s13 = inlined_call_operand.vmem [shape: bf16[128,128], index: 13, kind: input, shape index: {}]
  %s14 = inlined_call_operand.vmem [shape: f32[1,128], index: 14, kind: input, shape index: {}]
  %s15 = inlined_call_operand.vmem [shape: bf16[128,128], index: 15, kind: input, shape index: {}]
  %s16 = inlined_call_operand.vmem [shape: f32[1,128], index: 16, kind: input, shape index: {}]
  %s17 = inlined_call_operand.vmem [shape: bf16[128,1], index: 17, kind: input, shape index: {}]
  %s18 = inlined_call_operand.<no memory space> [shape: f32[1,1], index: 18, kind: input, shape index: {}]
  %s19 = inlined_call_operand.vmem [shape: f32[128,8], index: 19, kind: input, shape index: {}]
  %s20 = inlined_call_operand.vmem [shape: f32[8,2], index: 20, kind: input, shape index: {}]
  %s21 = inlined_call_operand.vmem [shape: f32[128,2], index: 21, kind: input, shape index: {}]
  %s22 = inlined_call_operand.hbm [shape: f32[4,128], index: 22, kind: output, shape index: {0}]
  %s23 = inlined_call_operand.hbm [shape: f32[4,128], index: 23, kind: output, shape index: {1}]
  %s24 = inlined_call_operand.vmem [shape: f32[128,1], index: 24, kind: output, shape index: {2}]
  %25 = xla_tuple %s22, %s23, %s24
  %s26 = sld [smem:[#allocation0]]
  $region114: #{tpu_custom_call.1} parent=0
    _
  %s28 = ssub.s32 1, %s26
  %s29 = scalar_select 0, %s28, %s26
  %v30 = vstv %s18
  %31 = vst [vmem:[#allocation2] sm:$0x1] %v30
  $region1: #{tpu_custom_call.1} parent=0
    #allocation3 [shape = 'u8[2048]{0}', space=vmem, size = 0x800, scoped, tag = 'output window, operand 0, single buffered']
    #allocation4 [shape = 's32[1]{0}', space=sflag, size = 0x4, scoped, tag = 'scoped memory for tpu_custom_call.1']
    #allocation5 [shape = 'u8[2048]{0}', space=vmem, size = 0x800, scoped, tag = 'output window, operand 1, single buffered']
    #allocation6 [shape = 's32[1]{0}', space=sflag, size = 0x4, scoped, tag = 'scoped memory for tpu_custom_call.1']
    %32 = vsyncpa [#allocation4], 0
    %33 = vsyncpa [#allocation6], 0
    // Predicated region
    $region2: #{tpu_custom_call.1} parent=1 // pred_check
      _
    $region3: #{tpu_custom_call.1} parent=1 // pred_check_branch
      %35 = sbr.rel (0) target = $region5
    $region4: #{tpu_custom_call.1} parent=1 // pred_region
      _
    $region5: #{tpu_custom_call.1} parent=1 // pred_fallthru
      _
    // Predicated region
    $region6: #{tpu_custom_call.1} parent=1 // pred_check
      _
    $region7: #{tpu_custom_call.1} parent=1 // pred_check_branch
      %37 = sbr.rel (0) target = $region9
    $region8: #{tpu_custom_call.1} parent=1 // pred_region
      _
    $region9: #{tpu_custom_call.1} parent=1 // pred_fallthru
      _
    // Predicated region
    $region10: #{tpu_custom_call.1} parent=1 // pred_check
      _
    $region11: #{tpu_custom_call.1} parent=1 // pred_check_branch
      %39 = sbr.rel (0) target = $region13
    $region12: #{tpu_custom_call.1} parent=1 // pred_region
      _
    $region13: #{tpu_custom_call.1} parent=1 // pred_fallthru
      _
    // Predicated region
    $region14: #{tpu_custom_call.1} parent=1 // pred_check
      _
    $region15: #{tpu_custom_call.1} parent=1 // pred_check_branch
      %41 = sbr.rel (0) target = $region17
    $region16: #{tpu_custom_call.1} parent=1 // pred_region
      _
    $region17: #{tpu_custom_call.1} parent=1 // pred_fallthru
      _
    // Predicated region
    $region18: #{tpu_custom_call.1} parent=1 // pred_check
      _
    $region19: #{tpu_custom_call.1} parent=1 // pred_check_branch
      %43 = sbr.rel (0) target = $region21
    $region20: #{tpu_custom_call.1} parent=1 // pred_region
      _
    $region21: #{tpu_custom_call.1} parent=1 // pred_fallthru
      _
    // Predicated region
    $region22: #{tpu_custom_call.1} parent=1 // pred_check
      _
    $region23: #{tpu_custom_call.1} parent=1 // pred_check_branch
      %45 = sbr.rel (0) target = $region25
    $region24: #{tpu_custom_call.1} parent=1 // pred_region
      _
    $region25: #{tpu_custom_call.1} parent=1 // pred_fallthru
      _
    // Predicated region
    $region26: #{tpu_custom_call.1} parent=1 // pred_check
      _
    $region27: #{tpu_custom_call.1} parent=1 // pred_check_branch
      %47 = sbr.rel (0) target = $region29
    $region28: #{tpu_custom_call.1} parent=1 // pred_region
      _
    $region29: #{tpu_custom_call.1} parent=1 // pred_fallthru
      _
    // Predicated region
    $region30: #{tpu_custom_call.1} parent=1 // pred_check
      _
    $region31: #{tpu_custom_call.1} parent=1 // pred_check_branch
      %49 = sbr.rel (0) target = $region33
    $region32: #{tpu_custom_call.1} parent=1 // pred_region
      _
    $region33: #{tpu_custom_call.1} parent=1 // pred_fallthru
      _
    // Predicated region
    $region34: #{tpu_custom_call.1} parent=1 // pred_check
      _
    $region35: #{tpu_custom_call.1} parent=1 // pred_check_branch
      %51 = sbr.rel (0) target = $region37
    $region36: #{tpu_custom_call.1} parent=1 // pred_region
      _
    $region37: #{tpu_custom_call.1} parent=1 // pred_fallthru
      _
    // Predicated region
    $region38: #{tpu_custom_call.1} parent=1 // pred_check
      _
    $region39: #{tpu_custom_call.1} parent=1 // pred_check_branch
      %53 = sbr.rel (0) target = $region41
    $region40: #{tpu_custom_call.1} parent=1 // pred_region
      _
    $region41: #{tpu_custom_call.1} parent=1 // pred_fallthru
      _
    // Predicated region
    $region42: #{tpu_custom_call.1} parent=1 // pred_check
      _
    $region43: #{tpu_custom_call.1} parent=1 // pred_check_branch
      %55 = sbr.rel (0) target = $region45
    $region44: #{tpu_custom_call.1} parent=1 // pred_region
      _
    $region45: #{tpu_custom_call.1} parent=1 // pred_fallthru
      _
    // Predicated region
    $region46: #{tpu_custom_call.1} parent=1 // pred_check
      _
    $region47: #{tpu_custom_call.1} parent=1 // pred_check_branch
      %57 = sbr.rel (0) target = $region49
    $region48: #{tpu_custom_call.1} parent=1 // pred_region
      _
    $region49: #{tpu_custom_call.1} parent=1 // pred_fallthru
      _
    // Predicated region
    $region50: #{tpu_custom_call.1} parent=1 // pred_check
      _
    $region51: #{tpu_custom_call.1} parent=1 // pred_check_branch
      %59 = sbr.rel (0) target = $region53
    $region52: #{tpu_custom_call.1} parent=1 // pred_region
      _
    $region53: #{tpu_custom_call.1} parent=1 // pred_fallthru
      _
    // Predicated region
    $region54: #{tpu_custom_call.1} parent=1 // pred_check
      _
    $region55: #{tpu_custom_call.1} parent=1 // pred_check_branch
      %61 = sbr.rel (0) target = $region57
    $region56: #{tpu_custom_call.1} parent=1 // pred_region
      _
    $region57: #{tpu_custom_call.1} parent=1 // pred_fallthru
      _
    // Predicated region
    $region58: #{tpu_custom_call.1} parent=1 // pred_check
      _
    $region59: #{tpu_custom_call.1} parent=1 // pred_check_branch
      %63 = sbr.rel (0) target = $region61
    $region60: #{tpu_custom_call.1} parent=1 // pred_region
      _
    $region61: #{tpu_custom_call.1} parent=1 // pred_fallthru
      _
    // Predicated region
    $region62: #{tpu_custom_call.1} parent=1 // pred_check
      _
    $region63: #{tpu_custom_call.1} parent=1 // pred_check_branch
      %65 = sbr.rel (0) target = $region65
    $region64: #{tpu_custom_call.1} parent=1 // pred_region
      _
    $region65: #{tpu_custom_call.1} parent=1 // pred_fallthru
      _
    // Predicated region
    $region66: #{tpu_custom_call.1} parent=1 // pred_check
      _
    $region67: #{tpu_custom_call.1} parent=1 // pred_check_branch
      %67 = sbr.rel (0) target = $region69
    $region68: #{tpu_custom_call.1} parent=1 // pred_region
      _
    $region69: #{tpu_custom_call.1} parent=1 // pred_fallthru
      _
    // Predicated region
    $region70: #{tpu_custom_call.1} parent=1 // pred_check
      _
    $region71: #{tpu_custom_call.1} parent=1 // pred_check_branch
      %69 = sbr.rel (0) target = $region73
    $region72: #{tpu_custom_call.1} parent=1 // pred_region
      _
    $region73: #{tpu_custom_call.1} parent=1 // pred_fallthru
      _
    // Predicated region
    $region74: #{tpu_custom_call.1} parent=1 // pred_check
      _
    $region75: #{tpu_custom_call.1} parent=1 // pred_check_branch
      %71 = sbr.rel (0) target = $region77
    $region76: #{tpu_custom_call.1} parent=1 // pred_region
      _
    $region77: #{tpu_custom_call.1} parent=1 // pred_fallthru
      _
    // Predicated region
    $region78: #{tpu_custom_call.1} parent=1 // pred_check
      _
    $region79: #{tpu_custom_call.1} parent=1 // pred_check_branch
      %73 = sbr.rel (0) target = $region81
    $region80: #{tpu_custom_call.1} parent=1 // pred_region
      _
    $region81: #{tpu_custom_call.1} parent=1 // pred_fallthru
      _
    // Predicated region
    $region82: #{tpu_custom_call.1} parent=1 // pred_check
      _
    $region83: #{tpu_custom_call.1} parent=1 // pred_check_branch
      %75 = sbr.rel (0) target = $region85
    $region84: #{tpu_custom_call.1} parent=1 // pred_region
      _
    $region85: #{tpu_custom_call.1} parent=1 // pred_fallthru
      _
    // Predicated region
    $region86: #{tpu_custom_call.1} parent=1 // pred_check
      _
    $region87: #{tpu_custom_call.1} parent=1 // pred_check_branch
      %77 = sbr.rel (0) target = $region89
    $region88: #{tpu_custom_call.1} parent=1 // pred_region
      _
    $region89: #{tpu_custom_call.1} parent=1 // pred_fallthru
      _
    %v80 = vld [vmem:[%s1] sm:$0xf]
    %v81 = vld [vmem:[%s1 + $0x4] sm:$0xf]
    %v82 = vld [vmem:[%s1 + $0x8] sm:$0xf]
    %v83 = vld [vmem:[%s1 + $0xc] sm:$0xf]
    %v84 = vld [vmem:[%s1 + $0x10] sm:$0xf]
    %v85 = vld [vmem:[%s1 + $0x14] sm:$0xf]
    %v86 = vld [vmem:[%s1 + $0x18] sm:$0xf]
    %v87 = vld [vmem:[%s1 + $0x1c] sm:$0xf]
    %v88 = vld [vmem:[%s1 + $0x20] sm:$0xf]
    %v89 = vld [vmem:[%s1 + $0x24] sm:$0xf]
    %v90 = vld [vmem:[%s1 + $0x28] sm:$0xf]
    %v91 = vld [vmem:[%s1 + $0x2c] sm:$0xf]
    %v92 = vld [vmem:[%s1 + $0x30] sm:$0xf]
    %v93 = vld [vmem:[%s1 + $0x34] sm:$0xf]
    %v94 = vld [vmem:[%s1 + $0x38] sm:$0xf]
    %v95 = vld [vmem:[%s1 + $0x3c] sm:$0xf]
    %v96 = vld [vmem:[%s0] sm:$0xff]
    %v97 = vld [vmem:[%s0 + $0x8] sm:$0xff]
    %v98 = vld [vmem:[%s0 + $0x10] sm:$0xff]
    %v99 = vld [vmem:[%s0 + $0x18] sm:$0xff]
    %v100 = vld [vmem:[%s0 + $0x20] sm:$0xff]
    %v101 = vld [vmem:[%s0 + $0x28] sm:$0xff]
    %v102 = vld [vmem:[%s0 + $0x30] sm:$0xff]
    %v103 = vld [vmem:[%s0 + $0x38] sm:$0xff]
    %v104 = vld [vmem:[%s0 + $0x40] sm:$0xff]
    %v105 = vld [vmem:[%s0 + $0x48] sm:$0xff]
    %v106 = vld [vmem:[%s0 + $0x50] sm:$0xff]
    %v107 = vld [vmem:[%s0 + $0x58] sm:$0xff]
    %v108 = vld [vmem:[%s0 + $0x60] sm:$0xff]
    %v109 = vld [vmem:[%s0 + $0x68] sm:$0xff]
    %v110 = vld [vmem:[%s0 + $0x70] sm:$0xff]
    %v111 = vld [vmem:[%s0 + $0x78] sm:$0xff]
    %v112 = vpack.c.bf16 %v97, %v96
    %v113 = vpack.c.bf16 %v99, %v98
    %v114 = vpack.c.bf16 %v101, %v100
    %v115 = vpack.c.bf16 %v103, %v102
    %v116 = vpack.c.bf16 %v105, %v104
    %v117 = vpack.c.bf16 %v107, %v106
    %v118 = vpack.c.bf16 %v109, %v108
    %v119 = vpack.c.bf16 %v111, %v110
    %v120 = vld [vmem:[%s5] sm:$0xf]
    %v121 = vld [vmem:[%s5 + $0x4] sm:$0xf]
    %v122 = vld [vmem:[%s5 + $0x8] sm:$0xf]
    %v123 = vld [vmem:[%s5 + $0xc] sm:$0xf]
    %v124 = vld [vmem:[%s6] sm:$0x1]
    %v126 = vperm.slane %v124, 0
    %v132 = vunpack.c.l.b16 %v120
    %v133 = vunpack.c.l.b16 %v121
    %v134 = vunpack.c.l.b16 %v122
    %v135 = vunpack.c.l.b16 %v123
    %v136 = vpack.c.b16 %v133, %v132
    %v137 = vpack.c.b16 %v135, %v134
    %vm140 = vcmask 261120
    %v142 = vsel %vm140, %v112, 0
    %v145 = vsel %vm140, %v113, 0
    %v148 = vsel %vm140, %v114, 0
    %v151 = vsel %vm140, %v115, 0
    %v154 = vsel %vm140, %v116, 0
    %v157 = vsel %vm140, %v117, 0
    %v160 = vsel %vm140, %v118, 0
    %v163 = vsel %vm140, %v119, 0
    %165 = vmatpush.bf16.msra.mxu0 0
    %166 = vmatpush.bf16.msra.mxu0 0
    %167 = vmatpush.bf16.msra.mxu0 0
    %168 = vmatpush.bf16.msra.mxu0 0
    %169 = vmatpush.bf16.msra.mxu0 0
    %170 = vmatpush.bf16.msra.mxu0 0
    %171 = vmatpush.bf16.msra.mxu0 %v137
    %172 = vmatpush.bf16.msra.mxu0 %v136
    %173 = vmatmul.bf16.gmra.mxu0 %v142
    %v174 = vpop.f32.mrf.mxu0
    %v175 = vadd.f32 %v126, %v174
    %v176 = vpop.f32.mrf.mxu0
    %v177 = vadd.f32 %v126, %v176
    %178 = vmatmul.bf16.gmra.mxu0 %v145
    %v179 = vpop.f32.mrf.mxu0
    %v180 = vadd.f32 %v126, %v179
    %v181 = vpop.f32.mrf.mxu0
    %v182 = vadd.f32 %v126, %v181
    %183 = vmatmul.bf16.gmra.mxu0 %v148
    %v184 = vpop.f32.mrf.mxu0
    %v185 = vadd.f32 %v126, %v184
    %v186 = vpop.f32.mrf.mxu0
    %v187 = vadd.f32 %v126, %v186
    %188 = vmatmul.bf16.gmra.mxu0 %v151
    %v189 = vpop.f32.mrf.mxu0
    %v190 = vadd.f32 %v126, %v189
    %v191 = vpop.f32.mrf.mxu0
    %v192 = vadd.f32 %v126, %v191
    %193 = vmatmul.bf16.gmra.mxu0 %v154
    %v194 = vpop.f32.mrf.mxu0
    %v195 = vadd.f32 %v126, %v194
    %v196 = vpop.f32.mrf.mxu0
    %v197 = vadd.f32 %v126, %v196
    %198 = vmatmul.bf16.gmra.mxu0 %v157
    %v199 = vpop.f32.mrf.mxu0
    %v200 = vadd.f32 %v126, %v199
    %v201 = vpop.f32.mrf.mxu0
    %v202 = vadd.f32 %v126, %v201
    %203 = vmatmul.bf16.gmra.mxu0 %v160
    %v204 = vpop.f32.mrf.mxu0
    %v205 = vadd.f32 %v126, %v204
    %v206 = vpop.f32.mrf.mxu0
    %v207 = vadd.f32 %v126, %v206
    %208 = vmatmul.bf16.gmra.mxu0 %v163
    %v209 = vpop.f32.mrf.mxu0
    %v210 = vadd.f32 %v126, %v209
    %v211 = vpop.f32.mrf.mxu0
    %v212 = vadd.f32 %v126, %v211
    %213 = vdwg.mxu0
    %v214 = vld [vmem:[%s7] sm:$0xf]
    %v215 = vld [vmem:[%s7 + $0x4] sm:$0xf]
    %v216 = vld [vmem:[%s7 + $0x8] sm:$0xf]
    %v217 = vld [vmem:[%s7 + $0xc] sm:$0xf]
    %v218 = vld [vmem:[%s7 + $0x10] sm:$0xf]
    %v219 = vld [vmem:[%s7 + $0x14] sm:$0xf]
    %v220 = vld [vmem:[%s7 + $0x18] sm:$0xf]
    %v221 = vld [vmem:[%s7 + $0x1c] sm:$0xf]
    %v222 = vld [vmem:[%s7 + $0x20] sm:$0xf]
    %v223 = vld [vmem:[%s7 + $0x24] sm:$0xf]
    %v224 = vld [vmem:[%s7 + $0x28] sm:$0xf]
    %v225 = vld [vmem:[%s7 + $0x2c] sm:$0xf]
    %v226 = vld [vmem:[%s7 + $0x30] sm:$0xf]
    %v227 = vld [vmem:[%s7 + $0x34] sm:$0xf]
    %v228 = vld [vmem:[%s7 + $0x38] sm:$0xf]
    %v229 = vld [vmem:[%s7 + $0x3c] sm:$0xf]
    %v230 = vld [vmem:[%s8] sm:$0x1]
    %v231 = vld [vmem:[%s9] sm:$0xf]
    %v232 = vld [vmem:[%s9 + $0x4] sm:$0xf]
    %v233 = vld [vmem:[%s9 + $0x8] sm:$0xf]
    %v234 = vld [vmem:[%s9 + $0xc] sm:$0xf]
    %v235 = vld [vmem:[%s9 + $0x10] sm:$0xf]
    %v236 = vld [vmem:[%s9 + $0x14] sm:$0xf]
    %v237 = vld [vmem:[%s9 + $0x18] sm:$0xf]
    %v238 = vld [vmem:[%s9 + $0x1c] sm:$0xf]
    %v239 = vld [vmem:[%s9 + $0x20] sm:$0xf]
    %v240 = vld [vmem:[%s9 + $0x24] sm:$0xf]
    %v241 = vld [vmem:[%s9 + $0x28] sm:$0xf]
    %v242 = vld [vmem:[%s9 + $0x2c] sm:$0xf]
    %v243 = vld [vmem:[%s9 + $0x30] sm:$0xf]
    %v244 = vld [vmem:[%s9 + $0x34] sm:$0xf]
    %v245 = vld [vmem:[%s9 + $0x38] sm:$0xf]
    %v246 = vld [vmem:[%s9 + $0x3c] sm:$0xf]
    %v247 = vld [vmem:[%s10] sm:$0x1]
    %v248 = vpack.c.bf16 %v177, %v175
    %v249 = vpack.c.bf16 %v182, %v180
    %v250 = vpack.c.bf16 %v187, %v185
    %v251 = vpack.c.bf16 %v192, %v190
    %v252 = vpack.c.bf16 %v197, %v195
    %v253 = vpack.c.bf16 %v202, %v200
    %v254 = vpack.c.bf16 %v207, %v205
    %v255 = vpack.c.bf16 %v212, %v210
    %v272 = vunpack.c.l.b16 %v80
    %v273 = vunpack.c.l.b16 %v81
    %v274 = vunpack.c.l.b16 %v82
    %v275 = vunpack.c.l.b16 %v83
    %v276 = vunpack.c.l.b16 %v84
    %v277 = vunpack.c.l.b16 %v85
    %v278 = vunpack.c.l.b16 %v86
    %v279 = vunpack.c.l.b16 %v87
    %v280 = vunpack.c.l.b16 %v88
    %v281 = vunpack.c.l.b16 %v89
    %v282 = vunpack.c.l.b16 %v90
    %v283 = vunpack.c.l.b16 %v91
    %v284 = vunpack.c.l.b16 %v92
    %v285 = vunpack.c.l.b16 %v93
    %v286 = vunpack.c.l.b16 %v94
    %v287 = vunpack.c.l.b16 %v95
    %v288 = vpack.c.b16 %v273, %v272
    %v289 = vpack.c.b16 %v275, %v274
    %v290 = vpack.c.b16 %v277, %v276
    %v291 = vpack.c.b16 %v279, %v278
    %v292 = vpack.c.b16 %v281, %v280
    %v293 = vpack.c.b16 %v283, %v282
    %v294 = vpack.c.b16 %v285, %v284
    %v295 = vpack.c.b16 %v287, %v286
    %304 = vmatpush.bf16.msra.mxu0 %v255
    %305 = vmatpush.bf16.msra.mxu0 %v254
    %306 = vmatpush.bf16.msra.mxu0 %v253
    %307 = vmatpush.bf16.msra.mxu0 %v252
    %308 = vmatpush.bf16.msra.mxu0 %v251
    %309 = vmatpush.bf16.msra.mxu0 %v250
    %310 = vmatpush.bf16.msra.mxu0 %v249
    %311 = vmatpush.bf16.msra.mxu0 %v248
    %312 = vmatmul.bf16.gmra.mxu0 %v288
    %v313 = vpop.f32.mrf.mxu0
    %v314 = vadd.f32 0.0, %v313
    %v315 = vpop.f32.mrf.mxu0
    %v316 = vadd.f32 0.0, %v315
    %317 = vmatmul.bf16.gmra.mxu0 %v289
    %v318 = vpop.f32.mrf.mxu0
    %v319 = vadd.f32 0.0, %v318
    %v320 = vpop.f32.mrf.mxu0
    %v321 = vadd.f32 0.0, %v320
    %322 = vmatmul.bf16.gmra.mxu0 %v290
    %v323 = vpop.f32.mrf.mxu0
    %v324 = vadd.f32 0.0, %v323
    %v325 = vpop.f32.mrf.mxu0
    %v326 = vadd.f32 0.0, %v325
    %327 = vmatmul.bf16.gmra.mxu0 %v291
    %v328 = vpop.f32.mrf.mxu0
    %v329 = vadd.f32 0.0, %v328
    %v330 = vpop.f32.mrf.mxu0
    %v331 = vadd.f32 0.0, %v330
    %332 = vmatmul.bf16.gmra.mxu0 %v292
    %v333 = vpop.f32.mrf.mxu0
    %v334 = vadd.f32 0.0, %v333
    %v335 = vpop.f32.mrf.mxu0
    %v336 = vadd.f32 0.0, %v335
    %337 = vmatmul.bf16.gmra.mxu0 %v293
    %v338 = vpop.f32.mrf.mxu0
    %v339 = vadd.f32 0.0, %v338
    %v340 = vpop.f32.mrf.mxu0
    %v341 = vadd.f32 0.0, %v340
    %342 = vmatmul.bf16.gmra.mxu0 %v294
    %v343 = vpop.f32.mrf.mxu0
    %v344 = vadd.f32 0.0, %v343
    %v345 = vpop.f32.mrf.mxu0
    %v346 = vadd.f32 0.0, %v345
    %347 = vmatmul.bf16.gmra.mxu0 %v295
    %v348 = vpop.f32.mrf.mxu0
    %v349 = vadd.f32 0.0, %v348
    %v350 = vpop.f32.mrf.mxu0
    %v351 = vadd.f32 0.0, %v350
    %352 = vdwg.mxu0
    %v353 = vadd.f32 %v175, %v314
    %v354 = vadd.f32 %v177, %v316
    %v355 = vadd.f32 %v180, %v319
    %v356 = vadd.f32 %v182, %v321
    %v357 = vadd.f32 %v185, %v324
    %v358 = vadd.f32 %v187, %v326
    %v359 = vadd.f32 %v190, %v329
    %v360 = vadd.f32 %v192, %v331
    %v361 = vadd.f32 %v195, %v334
    %v362 = vadd.f32 %v197, %v336
    %v363 = vadd.f32 %v200, %v339
    %v364 = vadd.f32 %v202, %v341
    %v365 = vadd.f32 %v205, %v344
    %v366 = vadd.f32 %v207, %v346
    %v367 = vadd.f32 %v210, %v349
    %v368 = vadd.f32 %v212, %v351
    %v369 = vpack.c.bf16 %v354, %v353
    %v370 = vpack.c.bf16 %v356, %v355
    %v371 = vpack.c.bf16 %v358, %v357
    %v372 = vpack.c.bf16 %v360, %v359
    %v373 = vpack.c.bf16 %v362, %v361
    %v374 = vpack.c.bf16 %v364, %v363
    %v375 = vpack.c.bf16 %v366, %v365
    %v376 = vpack.c.bf16 %v368, %v367
    %v378 = vperm.slane %v230, 0
    %v396 = vunpack.c.l.b16 %v214
    %v397 = vunpack.c.l.b16 %v215
    %v398 = vunpack.c.l.b16 %v216
    %v399 = vunpack.c.l.b16 %v217
    %v400 = vunpack.c.l.b16 %v218
    %v401 = vunpack.c.l.b16 %v219
    %v402 = vunpack.c.l.b16 %v220
    %v403 = vunpack.c.l.b16 %v221
    %v404 = vunpack.c.l.b16 %v222
    %v405 = vunpack.c.l.b16 %v223
    %v406 = vunpack.c.l.b16 %v224
    %v407 = vunpack.c.l.b16 %v225
    %v408 = vunpack.c.l.b16 %v226
    %v409 = vunpack.c.l.b16 %v227
    %v410 = vunpack.c.l.b16 %v228
    %v411 = vunpack.c.l.b16 %v229
    %v412 = vpack.c.b16 %v397, %v396
    %v413 = vpack.c.b16 %v399, %v398
    %v414 = vpack.c.b16 %v401, %v400
    %v415 = vpack.c.b16 %v403, %v402
    %v416 = vpack.c.b16 %v405, %v404
    %v417 = vpack.c.b16 %v407, %v406
    %v418 = vpack.c.b16 %v409, %v408
    %v419 = vpack.c.b16 %v411, %v410
    %428 = vmatpush.bf16.msra.mxu0 %v419
    %429 = vmatpush.bf16.msra.mxu0 %v418
    %430 = vmatpush.bf16.msra.mxu0 %v417
    %431 = vmatpush.bf16.msra.mxu0 %v416
    %432 = vmatpush.bf16.msra.mxu0 %v415
    %433 = vmatpush.bf16.msra.mxu0 %v414
    %434 = vmatpush.bf16.msra.mxu0 %v413
    %435 = vmatpush.bf16.msra.mxu0 %v412
    %436 = vmatmul.bf16.gmra.mxu0 %v369
    %v437 = vpop.f32.mrf.mxu0
    %v438 = vadd.f32 %v378, %v437
    %v439 = vpop.f32.mrf.mxu0
    %v440 = vadd.f32 %v378, %v439
    %441 = vmatmul.bf16.gmra.mxu0 %v370
    %v442 = vpop.f32.mrf.mxu0
    %v443 = vadd.f32 %v378, %v442
    %v444 = vpop.f32.mrf.mxu0
    %v445 = vadd.f32 %v378, %v444
    %446 = vmatmul.bf16.gmra.mxu0 %v371
    %v447 = vpop.f32.mrf.mxu0
    %v448 = vadd.f32 %v378, %v447
    %v449 = vpop.f32.mrf.mxu0
    %v450 = vadd.f32 %v378, %v449
    %451 = vmatmul.bf16.gmra.mxu0 %v372
    %v452 = vpop.f32.mrf.mxu0
    %v453 = vadd.f32 %v378, %v452
    %v454 = vpop.f32.mrf.mxu0
    %v455 = vadd.f32 %v378, %v454
    %456 = vmatmul.bf16.gmra.mxu0 %v373
    %v457 = vpop.f32.mrf.mxu0
    %v458 = vadd.f32 %v378, %v457
    %v459 = vpop.f32.mrf.mxu0
    %v460 = vadd.f32 %v378, %v459
    %461 = vmatmul.bf16.gmra.mxu0 %v374
    %v462 = vpop.f32.mrf.mxu0
    %v463 = vadd.f32 %v378, %v462
    %v464 = vpop.f32.mrf.mxu0
    %v465 = vadd.f32 %v378, %v464
    %466 = vmatmul.bf16.gmra.mxu0 %v375
    %v467 = vpop.f32.mrf.mxu0
    %v468 = vadd.f32 %v378, %v467
    %v469 = vpop.f32.mrf.mxu0
    %v470 = vadd.f32 %v378, %v469
    %471 = vmatmul.bf16.gmra.mxu0 %v376
    %v472 = vpop.f32.mrf.mxu0
    %v473 = vadd.f32 %v378, %v472
    %v474 = vpop.f32.mrf.mxu0
    %v475 = vadd.f32 %v378, %v474
    %476 = vdwg.mxu0
    %v477 = vmax.f32 %v438, 0.0
    %v478 = vmax.f32 %v440, 0.0
    %v479 = vmax.f32 %v443, 0.0
    %v480 = vmax.f32 %v445, 0.0
    %v481 = vmax.f32 %v448, 0.0
    %v482 = vmax.f32 %v450, 0.0
    %v483 = vmax.f32 %v453, 0.0
    %v484 = vmax.f32 %v455, 0.0
    %v485 = vmax.f32 %v458, 0.0
    %v486 = vmax.f32 %v460, 0.0
    %v487 = vmax.f32 %v463, 0.0
    %v488 = vmax.f32 %v465, 0.0
    %v489 = vmax.f32 %v468, 0.0
    %v490 = vmax.f32 %v470, 0.0
    %v491 = vmax.f32 %v473, 0.0
    %v492 = vmax.f32 %v475, 0.0
    %v493 = vpack.c.bf16 %v478, %v477
    %v494 = vpack.c.bf16 %v480, %v479
    %v495 = vpack.c.bf16 %v482, %v481
    %v496 = vpack.c.bf16 %v484, %v483
    %v497 = vpack.c.bf16 %v486, %v485
    %v498 = vpack.c.bf16 %v488, %v487
    %v499 = vpack.c.bf16 %v490, %v489
    %v500 = vpack.c.bf16 %v492, %v491
    %v502 = vperm.slane %v247, 0
    %v520 = vunpack.c.l.b16 %v231
    %v521 = vunpack.c.l.b16 %v232
    %v522 = vunpack.c.l.b16 %v233
    %v523 = vunpack.c.l.b16 %v234
    %v524 = vunpack.c.l.b16 %v235
    %v525 = vunpack.c.l.b16 %v236
    %v526 = vunpack.c.l.b16 %v237
    %v527 = vunpack.c.l.b16 %v238
    %v528 = vunpack.c.l.b16 %v239
    %v529 = vunpack.c.l.b16 %v240
    %v530 = vunpack.c.l.b16 %v241
    %v531 = vunpack.c.l.b16 %v242
    %v532 = vunpack.c.l.b16 %v243
    %v533 = vunpack.c.l.b16 %v244
    %v534 = vunpack.c.l.b16 %v245
    %v535 = vunpack.c.l.b16 %v246
    %v536 = vpack.c.b16 %v521, %v520
    %v537 = vpack.c.b16 %v523, %v522
    %v538 = vpack.c.b16 %v525, %v524
    %v539 = vpack.c.b16 %v527, %v526
    %v540 = vpack.c.b16 %v529, %v528
    %v541 = vpack.c.b16 %v531, %v530
    %v542 = vpack.c.b16 %v533, %v532
    %v543 = vpack.c.b16 %v535, %v534
    %552 = vmatpush.bf16.msra.mxu0 %v543
    %553 = vmatpush.bf16.msra.mxu0 %v542
    %554 = vmatpush.bf16.msra.mxu0 %v541
    %555 = vmatpush.bf16.msra.mxu0 %v540
    %556 = vmatpush.bf16.msra.mxu0 %v539
    %557 = vmatpush.bf16.msra.mxu0 %v538
    %558 = vmatpush.bf16.msra.mxu0 %v537
    %559 = vmatpush.bf16.msra.mxu0 %v536
    %560 = vmatmul.bf16.gmra.mxu0 %v493
    %v561 = vpop.f32.mrf.mxu0
    %v562 = vadd.f32 %v502, %v561
    %v563 = vpop.f32.mrf.mxu0
    %v564 = vadd.f32 %v502, %v563
    %565 = vmatmul.bf16.gmra.mxu0 %v494
    %v566 = vpop.f32.mrf.mxu0
    %v567 = vadd.f32 %v502, %v566
    %v568 = vpop.f32.mrf.mxu0
    %v569 = vadd.f32 %v502, %v568
    %570 = vmatmul.bf16.gmra.mxu0 %v495
    %v571 = vpop.f32.mrf.mxu0
    %v572 = vadd.f32 %v502, %v571
    %v573 = vpop.f32.mrf.mxu0
    %v574 = vadd.f32 %v502, %v573
    %575 = vmatmul.bf16.gmra.mxu0 %v496
    %v576 = vpop.f32.mrf.mxu0
    %v577 = vadd.f32 %v502, %v576
    %v578 = vpop.f32.mrf.mxu0
    %v579 = vadd.f32 %v502, %v578
    %580 = vmatmul.bf16.gmra.mxu0 %v497
    %v581 = vpop.f32.mrf.mxu0
    %v582 = vadd.f32 %v502, %v581
    %v583 = vpop.f32.mrf.mxu0
    %v584 = vadd.f32 %v502, %v583
    %585 = vmatmul.bf16.gmra.mxu0 %v498
    %v586 = vpop.f32.mrf.mxu0
    %v587 = vadd.f32 %v502, %v586
    %v588 = vpop.f32.mrf.mxu0
    %v589 = vadd.f32 %v502, %v588
    %590 = vmatmul.bf16.gmra.mxu0 %v499
    %v591 = vpop.f32.mrf.mxu0
    %v592 = vadd.f32 %v502, %v591
    %v593 = vpop.f32.mrf.mxu0
    %v594 = vadd.f32 %v502, %v593
    %595 = vmatmul.bf16.gmra.mxu0 %v500
    %v596 = vpop.f32.mrf.mxu0
    %v597 = vadd.f32 %v502, %v596
    %v598 = vpop.f32.mrf.mxu0
    %v599 = vadd.f32 %v502, %v598
    %600 = vdwg.mxu0
    %v601 = vld [vmem:[%s11] sm:$0xf]
    %v602 = vld [vmem:[%s11 + $0x4] sm:$0xf]
    %v603 = vld [vmem:[%s11 + $0x8] sm:$0xf]
    %v604 = vld [vmem:[%s11 + $0xc] sm:$0xf]
    %v605 = vld [vmem:[%s11 + $0x10] sm:$0xf]
    %v606 = vld [vmem:[%s11 + $0x14] sm:$0xf]
    %v607 = vld [vmem:[%s11 + $0x18] sm:$0xf]
    %v608 = vld [vmem:[%s11 + $0x1c] sm:$0xf]
    %v609 = vld [vmem:[%s11 + $0x20] sm:$0xf]
    %v610 = vld [vmem:[%s11 + $0x24] sm:$0xf]
    %v611 = vld [vmem:[%s11 + $0x28] sm:$0xf]
    %v612 = vld [vmem:[%s11 + $0x2c] sm:$0xf]
    %v613 = vld [vmem:[%s11 + $0x30] sm:$0xf]
    %v614 = vld [vmem:[%s11 + $0x34] sm:$0xf]
    %v615 = vld [vmem:[%s11 + $0x38] sm:$0xf]
    %v616 = vld [vmem:[%s11 + $0x3c] sm:$0xf]
    %v617 = vld [vmem:[%s12] sm:$0x1]
    %v618 = vld [vmem:[%s13] sm:$0xf]
    %v619 = vld [vmem:[%s13 + $0x4] sm:$0xf]
    %v620 = vld [vmem:[%s13 + $0x8] sm:$0xf]
    %v621 = vld [vmem:[%s13 + $0xc] sm:$0xf]
    %v622 = vld [vmem:[%s13 + $0x10] sm:$0xf]
    %v623 = vld [vmem:[%s13 + $0x14] sm:$0xf]
    %v624 = vld [vmem:[%s13 + $0x18] sm:$0xf]
    %v625 = vld [vmem:[%s13 + $0x1c] sm:$0xf]
    %v626 = vld [vmem:[%s13 + $0x20] sm:$0xf]
    %v627 = vld [vmem:[%s13 + $0x24] sm:$0xf]
    %v628 = vld [vmem:[%s13 + $0x28] sm:$0xf]
    %v629 = vld [vmem:[%s13 + $0x2c] sm:$0xf]
    %v630 = vld [vmem:[%s13 + $0x30] sm:$0xf]
    %v631 = vld [vmem:[%s13 + $0x34] sm:$0xf]
    %v632 = vld [vmem:[%s13 + $0x38] sm:$0xf]
    %v633 = vld [vmem:[%s13 + $0x3c] sm:$0xf]
    %v634 = vld [vmem:[%s14] sm:$0x1]
    %v635 = vpack.c.bf16 %v564, %v562
    %v636 = vpack.c.bf16 %v569, %v567
    %v637 = vpack.c.bf16 %v574, %v572
    %v638 = vpack.c.bf16 %v579, %v577
    %v639 = vpack.c.bf16 %v584, %v582
    %v640 = vpack.c.bf16 %v589, %v587
    %v641 = vpack.c.bf16 %v594, %v592
    %v642 = vpack.c.bf16 %v599, %v597
    %643 = vmatpush.bf16.msra.mxu0 %v642
    %644 = vmatpush.bf16.msra.mxu0 %v641
    %645 = vmatpush.bf16.msra.mxu0 %v640
    %646 = vmatpush.bf16.msra.mxu0 %v639
    %647 = vmatpush.bf16.msra.mxu0 %v638
    %648 = vmatpush.bf16.msra.mxu0 %v637
    %649 = vmatpush.bf16.msra.mxu0 %v636
    %650 = vmatpush.bf16.msra.mxu0 %v635
    %651 = vmatmul.bf16.gmra.mxu0 %v288
    %v652 = vpop.f32.mrf.mxu0
    %v653 = vadd.f32 0.0, %v652
    %v654 = vpop.f32.mrf.mxu0
    %v655 = vadd.f32 0.0, %v654
    %656 = vmatmul.bf16.gmra.mxu0 %v289
    %v657 = vpop.f32.mrf.mxu0
    %v658 = vadd.f32 0.0, %v657
    %v659 = vpop.f32.mrf.mxu0
    %v660 = vadd.f32 0.0, %v659
    %661 = vmatmul.bf16.gmra.mxu0 %v290
    %v662 = vpop.f32.mrf.mxu0
    %v663 = vadd.f32 0.0, %v662
    %v664 = vpop.f32.mrf.mxu0
    %v665 = vadd.f32 0.0, %v664
    %666 = vmatmul.bf16.gmra.mxu0 %v291
    %v667 = vpop.f32.mrf.mxu0
    %v668 = vadd.f32 0.0, %v667
    %v669 = vpop.f32.mrf.mxu0
    %v670 = vadd.f32 0.0, %v669
    %671 = vmatmul.bf16.gmra.mxu0 %v292
    %v672 = vpop.f32.mrf.mxu0
    %v673 = vadd.f32 0.0, %v672
    %v674 = vpop.f32.mrf.mxu0
    %v675 = vadd.f32 0.0, %v674
    %676 = vmatmul.bf16.gmra.mxu0 %v293
    %v677 = vpop.f32.mrf.mxu0
    %v678 = vadd.f32 0.0, %v677
    %v679 = vpop.f32.mrf.mxu0
    %v680 = vadd.f32 0.0, %v679
    %681 = vmatmul.bf16.gmra.mxu0 %v294
    %v682 = vpop.f32.mrf.mxu0
    %v683 = vadd.f32 0.0, %v682
    %v684 = vpop.f32.mrf.mxu0
    %v685 = vadd.f32 0.0, %v684
    %686 = vmatmul.bf16.gmra.mxu0 %v295
    %v687 = vpop.f32.mrf.mxu0
    %v688 = vadd.f32 0.0, %v687
    %v689 = vpop.f32.mrf.mxu0
    %v690 = vadd.f32 0.0, %v689
    %691 = vdwg.mxu0
    %v692 = vadd.f32 %v562, %v653
    %v693 = vadd.f32 %v564, %v655
    %v694 = vadd.f32 %v567, %v658
    %v695 = vadd.f32 %v569, %v660
    %v696 = vadd.f32 %v572, %v663
    %v697 = vadd.f32 %v574, %v665
    %v698 = vadd.f32 %v577, %v668
    %v699 = vadd.f32 %v579, %v670
    %v700 = vadd.f32 %v582, %v673
    %v701 = vadd.f32 %v584, %v675
    %v702 = vadd.f32 %v587, %v678
    %v703 = vadd.f32 %v589, %v680
    %v704 = vadd.f32 %v592, %v683
    %v705 = vadd.f32 %v594, %v685
    %v706 = vadd.f32 %v597, %v688
    %v707 = vadd.f32 %v599, %v690
    %v708 = vpack.c.bf16 %v693, %v692
    %v709 = vpack.c.bf16 %v695, %v694
    %v710 = vpack.c.bf16 %v697, %v696
    %v711 = vpack.c.bf16 %v699, %v698
    %v712 = vpack.c.bf16 %v701, %v700
    %v713 = vpack.c.bf16 %v703, %v702
    %v714 = vpack.c.bf16 %v705, %v704
    %v715 = vpack.c.bf16 %v707, %v706
    %v717 = vperm.slane %v617, 0
    %v735 = vunpack.c.l.b16 %v601
    %v736 = vunpack.c.l.b16 %v602
    %v737 = vunpack.c.l.b16 %v603
    %v738 = vunpack.c.l.b16 %v604
    %v739 = vunpack.c.l.b16 %v605
    %v740 = vunpack.c.l.b16 %v606
    %v741 = vunpack.c.l.b16 %v607
    %v742 = vunpack.c.l.b16 %v608
    %v743 = vunpack.c.l.b16 %v609
    %v744 = vunpack.c.l.b16 %v610
    %v745 = vunpack.c.l.b16 %v611
    %v746 = vunpack.c.l.b16 %v612
    %v747 = vunpack.c.l.b16 %v613
    %v748 = vunpack.c.l.b16 %v614
    %v749 = vunpack.c.l.b16 %v615
    %v750 = vunpack.c.l.b16 %v616
    %v751 = vpack.c.b16 %v736, %v735
    %v752 = vpack.c.b16 %v738, %v737
    %v753 = vpack.c.b16 %v740, %v739
    %v754 = vpack.c.b16 %v742, %v741
    %v755 = vpack.c.b16 %v744, %v743
    %v756 = vpack.c.b16 %v746, %v745
    %v757 = vpack.c.b16 %v748, %v747
    %v758 = vpack.c.b16 %v750, %v749
    %767 = vmatpush.bf16.msra.mxu0 %v758
    %768 = vmatpush.bf16.msra.mxu0 %v757
    %769 = vmatpush.bf16.msra.mxu0 %v756
    %770 = vmatpush.bf16.msra.mxu0 %v755
    %771 = vmatpush.bf16.msra.mxu0 %v754
    %772 = vmatpush.bf16.msra.mxu0 %v753
    %773 = vmatpush.bf16.msra.mxu0 %v752
    %774 = vmatpush.bf16.msra.mxu0 %v751
    %775 = vmatmul.bf16.gmra.mxu0 %v708
    %v776 = vpop.f32.mrf.mxu0
    %v777 = vadd.f32 %v717, %v776
    %v778 = vpop.f32.mrf.mxu0
    %v779 = vadd.f32 %v717, %v778
    %780 = vmatmul.bf16.gmra.mxu0 %v709
    %v781 = vpop.f32.mrf.mxu0
    %v782 = vadd.f32 %v717, %v781
    %v783 = vpop.f32.mrf.mxu0
    %v784 = vadd.f32 %v717, %v783
    %785 = vmatmul.bf16.gmra.mxu0 %v710
    %v786 = vpop.f32.mrf.mxu0
    %v787 = vadd.f32 %v717, %v786
    %v788 = vpop.f32.mrf.mxu0
    %v789 = vadd.f32 %v717, %v788
    %790 = vmatmul.bf16.gmra.mxu0 %v711
    %v791 = vpop.f32.mrf.mxu0
    %v792 = vadd.f32 %v717, %v791
    %v793 = vpop.f32.mrf.mxu0
    %v794 = vadd.f32 %v717, %v793
    %795 = vmatmul.bf16.gmra.mxu0 %v712
    %v796 = vpop.f32.mrf.mxu0
    %v797 = vadd.f32 %v717, %v796
    %v798 = vpop.f32.mrf.mxu0
    %v799 = vadd.f32 %v717, %v798
    %800 = vmatmul.bf16.gmra.mxu0 %v713
    %v801 = vpop.f32.mrf.mxu0
    %v802 = vadd.f32 %v717, %v801
    %v803 = vpop.f32.mrf.mxu0
    %v804 = vadd.f32 %v717, %v803
    %805 = vmatmul.bf16.gmra.mxu0 %v714
    %v806 = vpop.f32.mrf.mxu0
    %v807 = vadd.f32 %v717, %v806
    %v808 = vpop.f32.mrf.mxu0
    %v809 = vadd.f32 %v717, %v808
    %810 = vmatmul.bf16.gmra.mxu0 %v715
    %v811 = vpop.f32.mrf.mxu0
    %v812 = vadd.f32 %v717, %v811
    %v813 = vpop.f32.mrf.mxu0
    %v814 = vadd.f32 %v717, %v813
    %815 = vdwg.mxu0
    %v816 = vmax.f32 %v777, 0.0
    %v817 = vmax.f32 %v779, 0.0
    %v818 = vmax.f32 %v782, 0.0
    %v819 = vmax.f32 %v784, 0.0
    %v820 = vmax.f32 %v787, 0.0
    %v821 = vmax.f32 %v789, 0.0
    %v822 = vmax.f32 %v792, 0.0
    %v823 = vmax.f32 %v794, 0.0
    %v824 = vmax.f32 %v797, 0.0
    %v825 = vmax.f32 %v799, 0.0
    %v826 = vmax.f32 %v802, 0.0
    %v827 = vmax.f32 %v804, 0.0
    %v828 = vmax.f32 %v807, 0.0
    %v829 = vmax.f32 %v809, 0.0
    %v830 = vmax.f32 %v812, 0.0
    %v831 = vmax.f32 %v814, 0.0
    %v832 = vpack.c.bf16 %v817, %v816
    %v833 = vpack.c.bf16 %v819, %v818
    %v834 = vpack.c.bf16 %v821, %v820
    %v835 = vpack.c.bf16 %v823, %v822
    %v836 = vpack.c.bf16 %v825, %v824
    %v837 = vpack.c.bf16 %v827, %v826
    %v838 = vpack.c.bf16 %v829, %v828
    %v839 = vpack.c.bf16 %v831, %v830
    %v841 = vperm.slane %v634, 0
    %v859 = vunpack.c.l.b16 %v618
    %v860 = vunpack.c.l.b16 %v619
    %v861 = vunpack.c.l.b16 %v620
    %v862 = vunpack.c.l.b16 %v621
    %v863 = vunpack.c.l.b16 %v622
    %v864 = vunpack.c.l.b16 %v623
    %v865 = vunpack.c.l.b16 %v624
    %v866 = vunpack.c.l.b16 %v625
    %v867 = vunpack.c.l.b16 %v626
    %v868 = vunpack.c.l.b16 %v627
    %v869 = vunpack.c.l.b16 %v628
    %v870 = vunpack.c.l.b16 %v629
    %v871 = vunpack.c.l.b16 %v630
    %v872 = vunpack.c.l.b16 %v631
    %v873 = vunpack.c.l.b16 %v632
    %v874 = vunpack.c.l.b16 %v633
    %v875 = vpack.c.b16 %v860, %v859
    %v876 = vpack.c.b16 %v862, %v861
    %v877 = vpack.c.b16 %v864, %v863
    %v878 = vpack.c.b16 %v866, %v865
    %v879 = vpack.c.b16 %v868, %v867
    %v880 = vpack.c.b16 %v870, %v869
    %v881 = vpack.c.b16 %v872, %v871
    %v882 = vpack.c.b16 %v874, %v873
    %891 = vmatpush.bf16.msra.mxu0 %v882
    %892 = vmatpush.bf16.msra.mxu0 %v881
    %893 = vmatpush.bf16.msra.mxu0 %v880
    %894 = vmatpush.bf16.msra.mxu0 %v879
    %895 = vmatpush.bf16.msra.mxu0 %v878
    %896 = vmatpush.bf16.msra.mxu0 %v877
    %897 = vmatpush.bf16.msra.mxu0 %v876
    %898 = vmatpush.bf16.msra.mxu0 %v875
    %899 = vmatmul.bf16.gmra.mxu0 %v832
    %v900 = vpop.f32.mrf.mxu0
    %v901 = vadd.f32 %v841, %v900
    %v902 = vpop.f32.mrf.mxu0
    %v903 = vadd.f32 %v841, %v902
    %904 = vmatmul.bf16.gmra.mxu0 %v833
    %v905 = vpop.f32.mrf.mxu0
    %v906 = vadd.f32 %v841, %v905
    %v907 = vpop.f32.mrf.mxu0
    %v908 = vadd.f32 %v841, %v907
    %909 = vmatmul.bf16.gmra.mxu0 %v834
    %v910 = vpop.f32.mrf.mxu0
    %v911 = vadd.f32 %v841, %v910
    %v912 = vpop.f32.mrf.mxu0
    %v913 = vadd.f32 %v841, %v912
    %914 = vmatmul.bf16.gmra.mxu0 %v835
    %v915 = vpop.f32.mrf.mxu0
    %v916 = vadd.f32 %v841, %v915
    %v917 = vpop.f32.mrf.mxu0
    %v918 = vadd.f32 %v841, %v917
    %919 = vmatmul.bf16.gmra.mxu0 %v836
    %v920 = vpop.f32.mrf.mxu0
    %v921 = vadd.f32 %v841, %v920
    %v922 = vpop.f32.mrf.mxu0
    %v923 = vadd.f32 %v841, %v922
    %924 = vmatmul.bf16.gmra.mxu0 %v837
    %v925 = vpop.f32.mrf.mxu0
    %v926 = vadd.f32 %v841, %v925
    %v927 = vpop.f32.mrf.mxu0
    %v928 = vadd.f32 %v841, %v927
    %929 = vmatmul.bf16.gmra.mxu0 %v838
    %v930 = vpop.f32.mrf.mxu0
    %v931 = vadd.f32 %v841, %v930
    %v932 = vpop.f32.mrf.mxu0
    %v933 = vadd.f32 %v841, %v932
    %934 = vmatmul.bf16.gmra.mxu0 %v839
    %v935 = vpop.f32.mrf.mxu0
    %v936 = vadd.f32 %v841, %v935
    %v937 = vpop.f32.mrf.mxu0
    %v938 = vadd.f32 %v841, %v937
    %939 = vdwg.mxu0
    %v940 = vpack.c.bf16 %v903, %v901
    %v941 = vpack.c.bf16 %v908, %v906
    %v942 = vpack.c.bf16 %v913, %v911
    %v943 = vpack.c.bf16 %v918, %v916
    %v944 = vpack.c.bf16 %v923, %v921
    %v945 = vpack.c.bf16 %v928, %v926
    %v946 = vpack.c.bf16 %v933, %v931
    %v947 = vpack.c.bf16 %v938, %v936
    %v948 = vld [vmem:[%s15] sm:$0xf]
    %v949 = vld [vmem:[%s15 + $0x4] sm:$0xf]
    %v950 = vld [vmem:[%s15 + $0x8] sm:$0xf]
    %v951 = vld [vmem:[%s15 + $0xc] sm:$0xf]
    %v952 = vld [vmem:[%s15 + $0x10] sm:$0xf]
    %v953 = vld [vmem:[%s15 + $0x14] sm:$0xf]
    %v954 = vld [vmem:[%s15 + $0x18] sm:$0xf]
    %v955 = vld [vmem:[%s15 + $0x1c] sm:$0xf]
    %v956 = vld [vmem:[%s15 + $0x20] sm:$0xf]
    %v957 = vld [vmem:[%s15 + $0x24] sm:$0xf]
    %v958 = vld [vmem:[%s15 + $0x28] sm:$0xf]
    %v959 = vld [vmem:[%s15 + $0x2c] sm:$0xf]
    %v960 = vld [vmem:[%s15 + $0x30] sm:$0xf]
    %v961 = vld [vmem:[%s15 + $0x34] sm:$0xf]
    %v962 = vld [vmem:[%s15 + $0x38] sm:$0xf]
    %v963 = vld [vmem:[%s15 + $0x3c] sm:$0xf]
    %v964 = vld [vmem:[%s16] sm:$0x1]
    %v966 = vperm.slane %v964, 0
    %v984 = vunpack.c.l.b16 %v948
    %v985 = vunpack.c.l.b16 %v949
    %v986 = vunpack.c.l.b16 %v950
    %v987 = vunpack.c.l.b16 %v951
    %v988 = vunpack.c.l.b16 %v952
    %v989 = vunpack.c.l.b16 %v953
    %v990 = vunpack.c.l.b16 %v954
    %v991 = vunpack.c.l.b16 %v955
    %v992 = vunpack.c.l.b16 %v956
    %v993 = vunpack.c.l.b16 %v957
    %v994 = vunpack.c.l.b16 %v958
    %v995 = vunpack.c.l.b16 %v959
    %v996 = vunpack.c.l.b16 %v960
    %v997 = vunpack.c.l.b16 %v961
    %v998 = vunpack.c.l.b16 %v962
    %v999 = vunpack.c.l.b16 %v963
    %v1000 = vpack.c.b16 %v985, %v984
    %v1001 = vpack.c.b16 %v987, %v986
    %v1002 = vpack.c.b16 %v989, %v988
    %v1003 = vpack.c.b16 %v991, %v990
    %v1004 = vpack.c.b16 %v993, %v992
    %v1005 = vpack.c.b16 %v995, %v994
    %v1006 = vpack.c.b16 %v997, %v996
    %v1007 = vpack.c.b16 %v999, %v998
    %1016 = vmatpush.bf16.msra.mxu0 %v1007
    %1017 = vmatpush.bf16.msra.mxu0 %v1006
    %1018 = vmatpush.bf16.msra.mxu0 %v1005
    %1019 = vmatpush.bf16.msra.mxu0 %v1004
    %1020 = vmatpush.bf16.msra.mxu0 %v1003
    %1021 = vmatpush.bf16.msra.mxu0 %v1002
    %1022 = vmatpush.bf16.msra.mxu0 %v1001
    %1023 = vmatpush.bf16.msra.mxu0 %v1000
    %1024 = vmatmul.bf16.gmra.mxu0 %v940
    %v1025 = vpop.f32.mrf.mxu0
    %v1026 = vadd.f32 %v966, %v1025
    %v1027 = vpop.f32.mrf.mxu0
    %v1028 = vadd.f32 %v966, %v1027
    %1029 = vmatmul.bf16.gmra.mxu0 %v941
    %v1030 = vpop.f32.mrf.mxu0
    %v1031 = vadd.f32 %v966, %v1030
    %v1032 = vpop.f32.mrf.mxu0
    %v1033 = vadd.f32 %v966, %v1032
    %1034 = vmatmul.bf16.gmra.mxu0 %v942
    %v1035 = vpop.f32.mrf.mxu0
    %v1036 = vadd.f32 %v966, %v1035
    %v1037 = vpop.f32.mrf.mxu0
    %v1038 = vadd.f32 %v966, %v1037
    %1039 = vmatmul.bf16.gmra.mxu0 %v943
    %v1040 = vpop.f32.mrf.mxu0
    %v1041 = vadd.f32 %v966, %v1040
    %v1042 = vpop.f32.mrf.mxu0
    %v1043 = vadd.f32 %v966, %v1042
    %1044 = vmatmul.bf16.gmra.mxu0 %v944
    %v1045 = vpop.f32.mrf.mxu0
    %v1046 = vadd.f32 %v966, %v1045
    %v1047 = vpop.f32.mrf.mxu0
    %v1048 = vadd.f32 %v966, %v1047
    %1049 = vmatmul.bf16.gmra.mxu0 %v945
    %v1050 = vpop.f32.mrf.mxu0
    %v1051 = vadd.f32 %v966, %v1050
    %v1052 = vpop.f32.mrf.mxu0
    %v1053 = vadd.f32 %v966, %v1052
    %1054 = vmatmul.bf16.gmra.mxu0 %v946
    %v1055 = vpop.f32.mrf.mxu0
    %v1056 = vadd.f32 %v966, %v1055
    %v1057 = vpop.f32.mrf.mxu0
    %v1058 = vadd.f32 %v966, %v1057
    %1059 = vmatmul.bf16.gmra.mxu0 %v947
    %v1060 = vpop.f32.mrf.mxu0
    %v1061 = vadd.f32 %v966, %v1060
    %v1062 = vpop.f32.mrf.mxu0
    %v1063 = vadd.f32 %v966, %v1062
    %1064 = vdwg.mxu0
    %v1065 = vtanh.pop %v1026
    %v1066 = vtanh.pop %v1028
    %v1067 = vtanh.pop %v1031
    %v1068 = vtanh.pop %v1033
    %v1069 = vtanh.pop %v1036
    %v1070 = vtanh.pop %v1038
    %v1071 = vtanh.pop %v1041
    %v1072 = vtanh.pop %v1043
    %v1073 = vtanh.pop %v1046
    %v1074 = vtanh.pop %v1048
    %v1075 = vtanh.pop %v1051
    %v1076 = vtanh.pop %v1053
    %v1077 = vtanh.pop %v1056
    %v1078 = vtanh.pop %v1058
    %v1079 = vtanh.pop %v1061
    %v1080 = vtanh.pop %v1063
    %v1081 = vpack.c.bf16 %v1066, %v1065
    %v1082 = vpack.c.bf16 %v1068, %v1067
    %v1083 = vpack.c.bf16 %v1070, %v1069
    %v1084 = vpack.c.bf16 %v1072, %v1071
    %v1085 = vpack.c.bf16 %v1074, %v1073
    %v1086 = vpack.c.bf16 %v1076, %v1075
    %v1087 = vpack.c.bf16 %v1078, %v1077
    %v1088 = vpack.c.bf16 %v1080, %v1079
    %v1089 = vld [vmem:[%s17] sm:$0xf]
    %v1090 = vld [vmem:[%s17 + $0x4] sm:$0xf]
    %v1091 = vld [vmem:[%s17 + $0x8] sm:$0xf]
    %v1092 = vld [vmem:[%s17 + $0xc] sm:$0xf]
    %v1093 = vld [vmem:[%s17 + $0x10] sm:$0xf]
    %v1094 = vld [vmem:[%s17 + $0x14] sm:$0xf]
    %v1095 = vld [vmem:[%s17 + $0x18] sm:$0xf]
    %v1096 = vld [vmem:[%s17 + $0x1c] sm:$0xf]
    %v1097 = vld [vmem:[%s17 + $0x20] sm:$0xf]
    %v1098 = vld [vmem:[%s17 + $0x24] sm:$0xf]
    %v1099 = vld [vmem:[%s17 + $0x28] sm:$0xf]
    %v1100 = vld [vmem:[%s17 + $0x2c] sm:$0xf]
    %v1101 = vld [vmem:[%s17 + $0x30] sm:$0xf]
    %v1102 = vld [vmem:[%s17 + $0x34] sm:$0xf]
    %v1103 = vld [vmem:[%s17 + $0x38] sm:$0xf]
    %v1104 = vld [vmem:[%s17 + $0x3c] sm:$0xf]
    %v1105 = vld [vmem:[#allocation2] sm:$0x1]
    %v1107 = vperm.slane %v1105, 0
    %v1125 = vunpack.c.l.b16 %v1089
    %v1126 = vunpack.c.l.b16 %v1090
    %v1127 = vunpack.c.l.b16 %v1091
    %v1128 = vunpack.c.l.b16 %v1092
    %v1129 = vunpack.c.l.b16 %v1093
    %v1130 = vunpack.c.l.b16 %v1094
    %v1131 = vunpack.c.l.b16 %v1095
    %v1132 = vunpack.c.l.b16 %v1096
    %v1133 = vunpack.c.l.b16 %v1097
    %v1134 = vunpack.c.l.b16 %v1098
    %v1135 = vunpack.c.l.b16 %v1099
    %v1136 = vunpack.c.l.b16 %v1100
    %v1137 = vunpack.c.l.b16 %v1101
    %v1138 = vunpack.c.l.b16 %v1102
    %v1139 = vunpack.c.l.b16 %v1103
    %v1140 = vunpack.c.l.b16 %v1104
    %v1141 = vpack.c.b16 %v1126, %v1125
    %v1142 = vpack.c.b16 %v1128, %v1127
    %v1143 = vpack.c.b16 %v1130, %v1129
    %v1144 = vpack.c.b16 %v1132, %v1131
    %v1145 = vpack.c.b16 %v1134, %v1133
    %v1146 = vpack.c.b16 %v1136, %v1135
    %v1147 = vpack.c.b16 %v1138, %v1137
    %v1148 = vpack.c.b16 %v1140, %v1139
    %1157 = vmatpush.bf16.msra.mxu0 %v1148
    %1158 = vmatpush.bf16.msra.mxu0 %v1147
    %1159 = vmatpush.bf16.msra.mxu0 %v1146
    %1160 = vmatpush.bf16.msra.mxu0 %v1145
    %1161 = vmatpush.bf16.msra.mxu0 %v1144
    %1162 = vmatpush.bf16.msra.mxu0 %v1143
    %1163 = vmatpush.bf16.msra.mxu0 %v1142
    %1164 = vmatpush.bf16.msra.mxu0 %v1141
    %1165 = vmatmul.bf16.gmra.mxu0 %v1081
    %v1166 = vpop.f32.mrf.mxu0
    %v1167 = vadd.f32 %v1107, %v1166
    %v1168 = vpop.f32.mrf.mxu0
    %v1169 = vadd.f32 %v1107, %v1168
    %1170 = vmatmul.bf16.gmra.mxu0 %v1082
    %v1171 = vpop.f32.mrf.mxu0
    %v1172 = vadd.f32 %v1107, %v1171
    %v1173 = vpop.f32.mrf.mxu0
    %v1174 = vadd.f32 %v1107, %v1173
    %1175 = vmatmul.bf16.gmra.mxu0 %v1083
    %v1176 = vpop.f32.mrf.mxu0
    %v1177 = vadd.f32 %v1107, %v1176
    %v1178 = vpop.f32.mrf.mxu0
    %v1179 = vadd.f32 %v1107, %v1178
    %1180 = vmatmul.bf16.gmra.mxu0 %v1084
    %v1181 = vpop.f32.mrf.mxu0
    %v1182 = vadd.f32 %v1107, %v1181
    %v1183 = vpop.f32.mrf.mxu0
    %v1184 = vadd.f32 %v1107, %v1183
    %1185 = vmatmul.bf16.gmra.mxu0 %v1085
    %v1186 = vpop.f32.mrf.mxu0
    %v1187 = vadd.f32 %v1107, %v1186
    %v1188 = vpop.f32.mrf.mxu0
    %v1189 = vadd.f32 %v1107, %v1188
    %1190 = vmatmul.bf16.gmra.mxu0 %v1086
    %v1191 = vpop.f32.mrf.mxu0
    %v1192 = vadd.f32 %v1107, %v1191
    %v1193 = vpop.f32.mrf.mxu0
    %v1194 = vadd.f32 %v1107, %v1193
    %1195 = vmatmul.bf16.gmra.mxu0 %v1087
    %v1196 = vpop.f32.mrf.mxu0
    %v1197 = vadd.f32 %v1107, %v1196
    %v1198 = vpop.f32.mrf.mxu0
    %v1199 = vadd.f32 %v1107, %v1198
    %1200 = vmatmul.bf16.gmra.mxu0 %v1088
    %v1201 = vpop.f32.mrf.mxu0
    %v1202 = vadd.f32 %v1107, %v1201
    %v1203 = vpop.f32.mrf.mxu0
    %v1204 = vadd.f32 %v1107, %v1203
    %1205 = vdwg.mxu0
    %v1206 = vsub.f32 0.0, %v1167
    %v1207 = vsub.f32 0.0, %v1169
    %v1208 = vsub.f32 0.0, %v1172
    %v1209 = vsub.f32 0.0, %v1174
    %v1210 = vsub.f32 0.0, %v1177
    %v1211 = vsub.f32 0.0, %v1179
    %v1212 = vsub.f32 0.0, %v1182
    %v1213 = vsub.f32 0.0, %v1184
    %v1214 = vsub.f32 0.0, %v1187
    %v1215 = vsub.f32 0.0, %v1189
    %v1216 = vsub.f32 0.0, %v1192
    %v1217 = vsub.f32 0.0, %v1194
    %v1218 = vsub.f32 0.0, %v1197
    %v1219 = vsub.f32 0.0, %v1199
    %v1220 = vsub.f32 0.0, %v1202
    %v1221 = vsub.f32 0.0, %v1204
    %v1222 = vmul.f32 %v1206, 1.442695
    %v1223 = vpow.pop %v1222
    %v1224 = vmul.f32 %v1207, 1.442695
    %v1225 = vpow.pop %v1224
    %v1226 = vmul.f32 %v1208, 1.442695
    %v1227 = vpow.pop %v1226
    %v1228 = vmul.f32 %v1209, 1.442695
    %v1229 = vpow.pop %v1228
    %v1230 = vmul.f32 %v1210, 1.442695
    %v1231 = vpow.pop %v1230
    %v1232 = vmul.f32 %v1211, 1.442695
    %v1233 = vpow.pop %v1232
    %v1234 = vmul.f32 %v1212, 1.442695
    %v1235 = vpow.pop %v1234
    %v1236 = vmul.f32 %v1213, 1.442695
    %v1237 = vpow.pop %v1236
    %v1238 = vmul.f32 %v1214, 1.442695
    %v1239 = vpow.pop %v1238
    %v1240 = vmul.f32 %v1215, 1.442695
    %v1241 = vpow.pop %v1240
    %v1242 = vmul.f32 %v1216, 1.442695
    %v1243 = vpow.pop %v1242
    %v1244 = vmul.f32 %v1217, 1.442695
    %v1245 = vpow.pop %v1244
    %v1246 = vmul.f32 %v1218, 1.442695
    %v1247 = vpow.pop %v1246
    %v1248 = vmul.f32 %v1219, 1.442695
    %v1249 = vpow.pop %v1248
    %v1250 = vmul.f32 %v1220, 1.442695
    %v1251 = vpow.pop %v1250
    %v1252 = vmul.f32 %v1221, 1.442695
    %v1253 = vpow.pop %v1252
    %v1254 = vadd.f32 %v1223, 1.0
    %v1255 = vadd.f32 %v1225, 1.0
    %v1256 = vadd.f32 %v1227, 1.0
    %v1257 = vadd.f32 %v1229, 1.0
    %v1258 = vadd.f32 %v1231, 1.0
    %v1259 = vadd.f32 %v1233, 1.0
    %v1260 = vadd.f32 %v1235, 1.0
    %v1261 = vadd.f32 %v1237, 1.0
    %v1262 = vadd.f32 %v1239, 1.0
    %v1263 = vadd.f32 %v1241, 1.0
    %v1264 = vadd.f32 %v1243, 1.0
    %v1265 = vadd.f32 %v1245, 1.0
    %v1266 = vadd.f32 %v1247, 1.0
    %v1267 = vadd.f32 %v1249, 1.0
    %v1268 = vadd.f32 %v1251, 1.0
    %v1269 = vadd.f32 %v1253, 1.0
    %v1270 = vrcp.pop %v1254
    %v1271 = vmul.f32 %v1254, %v1270
    %v1272 = vsub.f32 1.0, %v1271
    %v1273 = vmul.f32 %v1270, %v1272
    %v1274 = vadd.f32 %v1270, %v1273
    %vm1275 = vweird.f32 %v1254
    %vm1276 = vweird.f32 %v1270
    %vm1277 = vmor %vm1275, %vm1276
    %v1278 = vsel %vm1277, %v1270, %v1274
    %v1279 = vand.u32 2147483647, %v1254
    %vm1280 = vcmp.eq.f32.partialorder %v1279, 8.507059e+37
    %v1281 = vand.u32 %v1254, 2147483648
    %v1282 = vor.u32 1.1754944e-38, %v1281
    %v1283 = vsel %vm1280, %v1282, %v1278
    %v1284 = vmul.f32 1.0, %v1283
    %v1285 = vrcp.pop %v1255
    %v1286 = vmul.f32 %v1255, %v1285
    %v1287 = vsub.f32 1.0, %v1286
    %v1288 = vmul.f32 %v1285, %v1287
    %v1289 = vadd.f32 %v1285, %v1288
    %vm1290 = vweird.f32 %v1255
    %vm1291 = vweird.f32 %v1285
    %vm1292 = vmor %vm1290, %vm1291
    %v1293 = vsel %vm1292, %v1285, %v1289
    %v1294 = vand.u32 2147483647, %v1255
    %vm1295 = vcmp.eq.f32.partialorder %v1294, 8.507059e+37
    %v1296 = vand.u32 %v1255, 2147483648
    %v1297 = vor.u32 1.1754944e-38, %v1296
    %v1298 = vsel %vm1295, %v1297, %v1293
    %v1299 = vmul.f32 1.0, %v1298
    %v1300 = vrcp.pop %v1256
    %v1301 = vmul.f32 %v1256, %v1300
    %v1302 = vsub.f32 1.0, %v1301
    %v1303 = vmul.f32 %v1300, %v1302
    %v1304 = vadd.f32 %v1300, %v1303
    %vm1305 = vweird.f32 %v1256
    %vm1306 = vweird.f32 %v1300
    %vm1307 = vmor %vm1305, %vm1306
    %v1308 = vsel %vm1307, %v1300, %v1304
    %v1309 = vand.u32 2147483647, %v1256
    %vm1310 = vcmp.eq.f32.partialorder %v1309, 8.507059e+37
    %v1311 = vand.u32 %v1256, 2147483648
    %v1312 = vor.u32 1.1754944e-38, %v1311
    %v1313 = vsel %vm1310, %v1312, %v1308
    %v1314 = vmul.f32 1.0, %v1313
    %v1315 = vrcp.pop %v1257
    %v1316 = vmul.f32 %v1257, %v1315
    %v1317 = vsub.f32 1.0, %v1316
    %v1318 = vmul.f32 %v1315, %v1317
    %v1319 = vadd.f32 %v1315, %v1318
    %vm1320 = vweird.f32 %v1257
    %vm1321 = vweird.f32 %v1315
    %vm1322 = vmor %vm1320, %vm1321
    %v1323 = vsel %vm1322, %v1315, %v1319
    %v1324 = vand.u32 2147483647, %v1257
    %vm1325 = vcmp.eq.f32.partialorder %v1324, 8.507059e+37
    %v1326 = vand.u32 %v1257, 2147483648
    %v1327 = vor.u32 1.1754944e-38, %v1326
    %v1328 = vsel %vm1325, %v1327, %v1323
    %v1329 = vmul.f32 1.0, %v1328
    %v1330 = vrcp.pop %v1258
    %v1331 = vmul.f32 %v1258, %v1330
    %v1332 = vsub.f32 1.0, %v1331
    %v1333 = vmul.f32 %v1330, %v1332
    %v1334 = vadd.f32 %v1330, %v1333
    %vm1335 = vweird.f32 %v1258
    %vm1336 = vweird.f32 %v1330
    %vm1337 = vmor %vm1335, %vm1336
    %v1338 = vsel %vm1337, %v1330, %v1334
    %v1339 = vand.u32 2147483647, %v1258
    %vm1340 = vcmp.eq.f32.partialorder %v1339, 8.507059e+37
    %v1341 = vand.u32 %v1258, 2147483648
    %v1342 = vor.u32 1.1754944e-38, %v1341
    %v1343 = vsel %vm1340, %v1342, %v1338
    %v1344 = vmul.f32 1.0, %v1343
    %v1345 = vrcp.pop %v1259
    %v1346 = vmul.f32 %v1259, %v1345
    %v1347 = vsub.f32 1.0, %v1346
    %v1348 = vmul.f32 %v1345, %v1347
    %v1349 = vadd.f32 %v1345, %v1348
    %vm1350 = vweird.f32 %v1259
    %vm1351 = vweird.f32 %v1345
    %vm1352 = vmor %vm1350, %vm1351
    %v1353 = vsel %vm1352, %v1345, %v1349
    %v1354 = vand.u32 2147483647, %v1259
    %vm1355 = vcmp.eq.f32.partialorder %v1354, 8.507059e+37
    %v1356 = vand.u32 %v1259, 2147483648
    %v1357 = vor.u32 1.1754944e-38, %v1356
    %v1358 = vsel %vm1355, %v1357, %v1353
    %v1359 = vmul.f32 1.0, %v1358
    %v1360 = vrcp.pop %v1260
    %v1361 = vmul.f32 %v1260, %v1360
    %v1362 = vsub.f32 1.0, %v1361
    %v1363 = vmul.f32 %v1360, %v1362
    %v1364 = vadd.f32 %v1360, %v1363
    %vm1365 = vweird.f32 %v1260
    %vm1366 = vweird.f32 %v1360
    %vm1367 = vmor %vm1365, %vm1366
    %v1368 = vsel %vm1367, %v1360, %v1364
    %v1369 = vand.u32 2147483647, %v1260
    %vm1370 = vcmp.eq.f32.partialorder %v1369, 8.507059e+37
    %v1371 = vand.u32 %v1260, 2147483648
    %v1372 = vor.u32 1.1754944e-38, %v1371
    %v1373 = vsel %vm1370, %v1372, %v1368
    %v1374 = vmul.f32 1.0, %v1373
    %v1375 = vrcp.pop %v1261
    %v1376 = vmul.f32 %v1261, %v1375
    %v1377 = vsub.f32 1.0, %v1376
    %v1378 = vmul.f32 %v1375, %v1377
    %v1379 = vadd.f32 %v1375, %v1378
    %vm1380 = vweird.f32 %v1261
    %vm1381 = vweird.f32 %v1375
    %vm1382 = vmor %vm1380, %vm1381
    %v1383 = vsel %vm1382, %v1375, %v1379
    %v1384 = vand.u32 2147483647, %v1261
    %vm1385 = vcmp.eq.f32.partialorder %v1384, 8.507059e+37
    %v1386 = vand.u32 %v1261, 2147483648
    %v1387 = vor.u32 1.1754944e-38, %v1386
    %v1388 = vsel %vm1385, %v1387, %v1383
    %v1389 = vmul.f32 1.0, %v1388
    %v1390 = vrcp.pop %v1262
    %v1391 = vmul.f32 %v1262, %v1390
    %v1392 = vsub.f32 1.0, %v1391
    %v1393 = vmul.f32 %v1390, %v1392
    %v1394 = vadd.f32 %v1390, %v1393
    %vm1395 = vweird.f32 %v1262
    %vm1396 = vweird.f32 %v1390
    %vm1397 = vmor %vm1395, %vm1396
    %v1398 = vsel %vm1397, %v1390, %v1394
    %v1399 = vand.u32 2147483647, %v1262
    %vm1400 = vcmp.eq.f32.partialorder %v1399, 8.507059e+37
    %v1401 = vand.u32 %v1262, 2147483648
    %v1402 = vor.u32 1.1754944e-38, %v1401
    %v1403 = vsel %vm1400, %v1402, %v1398
    %v1404 = vmul.f32 1.0, %v1403
    %v1405 = vrcp.pop %v1263
    %v1406 = vmul.f32 %v1263, %v1405
    %v1407 = vsub.f32 1.0, %v1406
    %v1408 = vmul.f32 %v1405, %v1407
    %v1409 = vadd.f32 %v1405, %v1408
    %vm1410 = vweird.f32 %v1263
    %vm1411 = vweird.f32 %v1405
    %vm1412 = vmor %vm1410, %vm1411
    %v1413 = vsel %vm1412, %v1405, %v1409
    %v1414 = vand.u32 2147483647, %v1263
    %vm1415 = vcmp.eq.f32.partialorder %v1414, 8.507059e+37
    %v1416 = vand.u32 %v1263, 2147483648
    %v1417 = vor.u32 1.1754944e-38, %v1416
    %v1418 = vsel %vm1415, %v1417, %v1413
    %v1419 = vmul.f32 1.0, %v1418
    %v1420 = vrcp.pop %v1264
    %v1421 = vmul.f32 %v1264, %v1420
    %v1422 = vsub.f32 1.0, %v1421
    %v1423 = vmul.f32 %v1420, %v1422
    %v1424 = vadd.f32 %v1420, %v1423
    %vm1425 = vweird.f32 %v1264
    %vm1426 = vweird.f32 %v1420
    %vm1427 = vmor %vm1425, %vm1426
    %v1428 = vsel %vm1427, %v1420, %v1424
    %v1429 = vand.u32 2147483647, %v1264
    %vm1430 = vcmp.eq.f32.partialorder %v1429, 8.507059e+37
    %v1431 = vand.u32 %v1264, 2147483648
    %v1432 = vor.u32 1.1754944e-38, %v1431
    %v1433 = vsel %vm1430, %v1432, %v1428
    %v1434 = vmul.f32 1.0, %v1433
    %v1435 = vrcp.pop %v1265
    %v1436 = vmul.f32 %v1265, %v1435
    %v1437 = vsub.f32 1.0, %v1436
    %v1438 = vmul.f32 %v1435, %v1437
    %v1439 = vadd.f32 %v1435, %v1438
    %vm1440 = vweird.f32 %v1265
    %vm1441 = vweird.f32 %v1435
    %vm1442 = vmor %vm1440, %vm1441
    %v1443 = vsel %vm1442, %v1435, %v1439
    %v1444 = vand.u32 2147483647, %v1265
    %vm1445 = vcmp.eq.f32.partialorder %v1444, 8.507059e+37
    %v1446 = vand.u32 %v1265, 2147483648
    %v1447 = vor.u32 1.1754944e-38, %v1446
    %v1448 = vsel %vm1445, %v1447, %v1443
    %v1449 = vmul.f32 1.0, %v1448
    %v1450 = vrcp.pop %v1266
    %v1451 = vmul.f32 %v1266, %v1450
    %v1452 = vsub.f32 1.0, %v1451
    %v1453 = vmul.f32 %v1450, %v1452
    %v1454 = vadd.f32 %v1450, %v1453
    %vm1455 = vweird.f32 %v1266
    %vm1456 = vweird.f32 %v1450
    %vm1457 = vmor %vm1455, %vm1456
    %v1458 = vsel %vm1457, %v1450, %v1454
    %v1459 = vand.u32 2147483647, %v1266
    %vm1460 = vcmp.eq.f32.partialorder %v1459, 8.507059e+37
    %v1461 = vand.u32 %v1266, 2147483648
    %v1462 = vor.u32 1.1754944e-38, %v1461
    %v1463 = vsel %vm1460, %v1462, %v1458
    %v1464 = vmul.f32 1.0, %v1463
    %v1465 = vrcp.pop %v1267
    %v1466 = vmul.f32 %v1267, %v1465
    %v1467 = vsub.f32 1.0, %v1466
    %v1468 = vmul.f32 %v1465, %v1467
    %v1469 = vadd.f32 %v1465, %v1468
    %vm1470 = vweird.f32 %v1267
    %vm1471 = vweird.f32 %v1465
    %vm1472 = vmor %vm1470, %vm1471
    %v1473 = vsel %vm1472, %v1465, %v1469
    %v1474 = vand.u32 2147483647, %v1267
    %vm1475 = vcmp.eq.f32.partialorder %v1474, 8.507059e+37
    %v1476 = vand.u32 %v1267, 2147483648
    %v1477 = vor.u32 1.1754944e-38, %v1476
    %v1478 = vsel %vm1475, %v1477, %v1473
    %v1479 = vmul.f32 1.0, %v1478
    %v1480 = vrcp.pop %v1268
    %v1481 = vmul.f32 %v1268, %v1480
    %v1482 = vsub.f32 1.0, %v1481
    %v1483 = vmul.f32 %v1480, %v1482
    %v1484 = vadd.f32 %v1480, %v1483
    %vm1485 = vweird.f32 %v1268
    %vm1486 = vweird.f32 %v1480
    %vm1487 = vmor %vm1485, %vm1486
    %v1488 = vsel %vm1487, %v1480, %v1484
    %v1489 = vand.u32 2147483647, %v1268
    %vm1490 = vcmp.eq.f32.partialorder %v1489, 8.507059e+37
    %v1491 = vand.u32 %v1268, 2147483648
    %v1492 = vor.u32 1.1754944e-38, %v1491
    %v1493 = vsel %vm1490, %v1492, %v1488
    %v1494 = vmul.f32 1.0, %v1493
    %v1495 = vrcp.pop %v1269
    %v1496 = vmul.f32 %v1269, %v1495
    %v1497 = vsub.f32 1.0, %v1496
    %v1498 = vmul.f32 %v1495, %v1497
    %v1499 = vadd.f32 %v1495, %v1498
    %vm1500 = vweird.f32 %v1269
    %vm1501 = vweird.f32 %v1495
    %vm1502 = vmor %vm1500, %vm1501
    %v1503 = vsel %vm1502, %v1495, %v1499
    %v1504 = vand.u32 2147483647, %v1269
    %vm1505 = vcmp.eq.f32.partialorder %v1504, 8.507059e+37
    %v1506 = vand.u32 %v1269, 2147483648
    %v1507 = vor.u32 1.1754944e-38, %v1506
    %v1508 = vsel %vm1505, %v1507, %v1503
    %v1509 = vmul.f32 1.0, %v1508
    %v1510 = vsub.f32 1.0, %v1284
    %v1511 = vsub.f32 1.0, %v1299
    %v1512 = vsub.f32 1.0, %v1314
    %v1513 = vsub.f32 1.0, %v1329
    %v1514 = vsub.f32 1.0, %v1344
    %v1515 = vsub.f32 1.0, %v1359
    %v1516 = vsub.f32 1.0, %v1374
    %v1517 = vsub.f32 1.0, %v1389
    %v1518 = vsub.f32 1.0, %v1404
    %v1519 = vsub.f32 1.0, %v1419
    %v1520 = vsub.f32 1.0, %v1434
    %v1521 = vsub.f32 1.0, %v1449
    %v1522 = vsub.f32 1.0, %v1464
    %v1523 = vsub.f32 1.0, %v1479
    %v1524 = vsub.f32 1.0, %v1494
    %v1525 = vsub.f32 1.0, %v1509
    %v1526 = vsub.f32 %v1284, %v1510
    %v1527 = vsub.f32 %v1299, %v1511
    %v1528 = vsub.f32 %v1314, %v1512
    %v1529 = vsub.f32 %v1329, %v1513
    %v1530 = vsub.f32 %v1344, %v1514
    %v1531 = vsub.f32 %v1359, %v1515
    %v1532 = vsub.f32 %v1374, %v1516
    %v1533 = vsub.f32 %v1389, %v1517
    %v1534 = vsub.f32 %v1404, %v1518
    %v1535 = vsub.f32 %v1419, %v1519
    %v1536 = vsub.f32 %v1434, %v1520
    %v1537 = vsub.f32 %v1449, %v1521
    %v1538 = vsub.f32 %v1464, %v1522
    %v1539 = vsub.f32 %v1479, %v1523
    %v1540 = vsub.f32 %v1494, %v1524
    %v1541 = vsub.f32 %v1509, %v1525
    %v1542 = vld [vmem:[%s3] sm:$0xff]
    %v1543 = vld [vmem:[%s3 + $0x8] sm:$0xff]
    %v1544 = vld [vmem:[%s3 + $0x10] sm:$0xff]
    %v1545 = vld [vmem:[%s3 + $0x18] sm:$0xff]
    %v1546 = vld [vmem:[%s3 + $0x20] sm:$0xff]
    %v1547 = vld [vmem:[%s3 + $0x28] sm:$0xff]
    %v1548 = vld [vmem:[%s3 + $0x30] sm:$0xff]
    %v1549 = vld [vmem:[%s3 + $0x38] sm:$0xff]
    %v1550 = vld [vmem:[%s3 + $0x40] sm:$0xff]
    %v1551 = vld [vmem:[%s3 + $0x48] sm:$0xff]
    %v1552 = vld [vmem:[%s3 + $0x50] sm:$0xff]
    %v1553 = vld [vmem:[%s3 + $0x58] sm:$0xff]
    %v1554 = vld [vmem:[%s3 + $0x60] sm:$0xff]
    %v1555 = vld [vmem:[%s3 + $0x68] sm:$0xff]
    %v1556 = vld [vmem:[%s3 + $0x70] sm:$0xff]
    %v1557 = vld [vmem:[%s3 + $0x78] sm:$0xff]
    %v1558 = vadd.f32 %v1526, %v1542
    %v1559 = vadd.f32 %v1527, %v1543
    %v1560 = vadd.f32 %v1528, %v1544
    %v1561 = vadd.f32 %v1529, %v1545
    %v1562 = vadd.f32 %v1530, %v1546
    %v1563 = vadd.f32 %v1531, %v1547
    %v1564 = vadd.f32 %v1532, %v1548
    %v1565 = vadd.f32 %v1533, %v1549
    %v1566 = vadd.f32 %v1534, %v1550
    %v1567 = vadd.f32 %v1535, %v1551
    %v1568 = vadd.f32 %v1536, %v1552
    %v1569 = vadd.f32 %v1537, %v1553
    %v1570 = vadd.f32 %v1538, %v1554
    %v1571 = vadd.f32 %v1539, %v1555
    %v1572 = vadd.f32 %v1540, %v1556
    %v1573 = vadd.f32 %v1541, %v1557
    %v1574 = vsub.f32 0.0, %v1558
    %v1575 = vsub.f32 0.0, %v1559
    %v1576 = vsub.f32 0.0, %v1560
    %v1577 = vsub.f32 0.0, %v1561
    %v1578 = vsub.f32 0.0, %v1562
    %v1579 = vsub.f32 0.0, %v1563
    %v1580 = vsub.f32 0.0, %v1564
    %v1581 = vsub.f32 0.0, %v1565
    %v1582 = vsub.f32 0.0, %v1566
    %v1583 = vsub.f32 0.0, %v1567
    %v1584 = vsub.f32 0.0, %v1568
    %v1585 = vsub.f32 0.0, %v1569
    %v1586 = vsub.f32 0.0, %v1570
    %v1587 = vsub.f32 0.0, %v1571
    %v1588 = vsub.f32 0.0, %v1572
    %v1589 = vsub.f32 0.0, %v1573
    %v1590 = vmul.f32 %v1574, 1.442695
    %v1591 = vpow.pop %v1590
    %v1592 = vmul.f32 %v1575, 1.442695
    %v1593 = vpow.pop %v1592
    %v1594 = vmul.f32 %v1576, 1.442695
    %v1595 = vpow.pop %v1594
    %v1596 = vmul.f32 %v1577, 1.442695
    %v1597 = vpow.pop %v1596
    %v1598 = vmul.f32 %v1578, 1.442695
    %v1599 = vpow.pop %v1598
    %v1600 = vmul.f32 %v1579, 1.442695
    %v1601 = vpow.pop %v1600
    %v1602 = vmul.f32 %v1580, 1.442695
    %v1603 = vpow.pop %v1602
    %v1604 = vmul.f32 %v1581, 1.442695
    %v1605 = vpow.pop %v1604
    %v1606 = vmul.f32 %v1582, 1.442695
    %v1607 = vpow.pop %v1606
    %v1608 = vmul.f32 %v1583, 1.442695
    %v1609 = vpow.pop %v1608
    %v1610 = vmul.f32 %v1584, 1.442695
    %v1611 = vpow.pop %v1610
    %v1612 = vmul.f32 %v1585, 1.442695
    %v1613 = vpow.pop %v1612
    %v1614 = vmul.f32 %v1586, 1.442695
    %v1615 = vpow.pop %v1614
    %v1616 = vmul.f32 %v1587, 1.442695
    %v1617 = vpow.pop %v1616
    %v1618 = vmul.f32 %v1588, 1.442695
    %v1619 = vpow.pop %v1618
    %v1620 = vmul.f32 %v1589, 1.442695
    %v1621 = vpow.pop %v1620
    %v1622 = vadd.f32 %v1591, 1.0
    %v1623 = vadd.f32 %v1593, 1.0
    %v1624 = vadd.f32 %v1595, 1.0
    %v1625 = vadd.f32 %v1597, 1.0
    %v1626 = vadd.f32 %v1599, 1.0
    %v1627 = vadd.f32 %v1601, 1.0
    %v1628 = vadd.f32 %v1603, 1.0
    %v1629 = vadd.f32 %v1605, 1.0
    %v1630 = vadd.f32 %v1607, 1.0
    %v1631 = vadd.f32 %v1609, 1.0
    %v1632 = vadd.f32 %v1611, 1.0
    %v1633 = vadd.f32 %v1613, 1.0
    %v1634 = vadd.f32 %v1615, 1.0
    %v1635 = vadd.f32 %v1617, 1.0
    %v1636 = vadd.f32 %v1619, 1.0
    %v1637 = vadd.f32 %v1621, 1.0
    %v1638 = vrcp.pop %v1622
    %v1639 = vmul.f32 %v1622, %v1638
    %v1640 = vsub.f32 1.0, %v1639
    %v1641 = vmul.f32 %v1638, %v1640
    %v1642 = vadd.f32 %v1638, %v1641
    %vm1643 = vweird.f32 %v1622
    %vm1644 = vweird.f32 %v1638
    %vm1645 = vmor %vm1643, %vm1644
    %v1646 = vsel %vm1645, %v1638, %v1642
    %v1647 = vand.u32 2147483647, %v1622
    %vm1648 = vcmp.eq.f32.partialorder %v1647, 8.507059e+37
    %v1649 = vand.u32 %v1622, 2147483648
    %v1650 = vor.u32 1.1754944e-38, %v1649
    %v1651 = vsel %vm1648, %v1650, %v1646
    %v1652 = vmul.f32 1.0, %v1651
    %v1653 = vrcp.pop %v1623
    %v1654 = vmul.f32 %v1623, %v1653
    %v1655 = vsub.f32 1.0, %v1654
    %v1656 = vmul.f32 %v1653, %v1655
    %v1657 = vadd.f32 %v1653, %v1656
    %vm1658 = vweird.f32 %v1623
    %vm1659 = vweird.f32 %v1653
    %vm1660 = vmor %vm1658, %vm1659
    %v1661 = vsel %vm1660, %v1653, %v1657
    %v1662 = vand.u32 2147483647, %v1623
    %vm1663 = vcmp.eq.f32.partialorder %v1662, 8.507059e+37
    %v1664 = vand.u32 %v1623, 2147483648
    %v1665 = vor.u32 1.1754944e-38, %v1664
    %v1666 = vsel %vm1663, %v1665, %v1661
    %v1667 = vmul.f32 1.0, %v1666
    %v1668 = vrcp.pop %v1624
    %v1669 = vmul.f32 %v1624, %v1668
    %v1670 = vsub.f32 1.0, %v1669
    %v1671 = vmul.f32 %v1668, %v1670
    %v1672 = vadd.f32 %v1668, %v1671
    %vm1673 = vweird.f32 %v1624
    %vm1674 = vweird.f32 %v1668
    %vm1675 = vmor %vm1673, %vm1674
    %v1676 = vsel %vm1675, %v1668, %v1672
    %v1677 = vand.u32 2147483647, %v1624
    %vm1678 = vcmp.eq.f32.partialorder %v1677, 8.507059e+37
    %v1679 = vand.u32 %v1624, 2147483648
    %v1680 = vor.u32 1.1754944e-38, %v1679
    %v1681 = vsel %vm1678, %v1680, %v1676
    %v1682 = vmul.f32 1.0, %v1681
    %v1683 = vrcp.pop %v1625
    %v1684 = vmul.f32 %v1625, %v1683
    %v1685 = vsub.f32 1.0, %v1684
    %v1686 = vmul.f32 %v1683, %v1685
    %v1687 = vadd.f32 %v1683, %v1686
    %vm1688 = vweird.f32 %v1625
    %vm1689 = vweird.f32 %v1683
    %vm1690 = vmor %vm1688, %vm1689
    %v1691 = vsel %vm1690, %v1683, %v1687
    %v1692 = vand.u32 2147483647, %v1625
    %vm1693 = vcmp.eq.f32.partialorder %v1692, 8.507059e+37
    %v1694 = vand.u32 %v1625, 2147483648
    %v1695 = vor.u32 1.1754944e-38, %v1694
    %v1696 = vsel %vm1693, %v1695, %v1691
    %v1697 = vmul.f32 1.0, %v1696
    %v1698 = vrcp.pop %v1626
    %v1699 = vmul.f32 %v1626, %v1698
    %v1700 = vsub.f32 1.0, %v1699
    %v1701 = vmul.f32 %v1698, %v1700
    %v1702 = vadd.f32 %v1698, %v1701
    %vm1703 = vweird.f32 %v1626
    %vm1704 = vweird.f32 %v1698
    %vm1705 = vmor %vm1703, %vm1704
    %v1706 = vsel %vm1705, %v1698, %v1702
    %v1707 = vand.u32 2147483647, %v1626
    %vm1708 = vcmp.eq.f32.partialorder %v1707, 8.507059e+37
    %v1709 = vand.u32 %v1626, 2147483648
    %v1710 = vor.u32 1.1754944e-38, %v1709
    %v1711 = vsel %vm1708, %v1710, %v1706
    %v1712 = vmul.f32 1.0, %v1711
    %v1713 = vrcp.pop %v1627
    %v1714 = vmul.f32 %v1627, %v1713
    %v1715 = vsub.f32 1.0, %v1714
    %v1716 = vmul.f32 %v1713, %v1715
    %v1717 = vadd.f32 %v1713, %v1716
    %vm1718 = vweird.f32 %v1627
    %vm1719 = vweird.f32 %v1713
    %vm1720 = vmor %vm1718, %vm1719
    %v1721 = vsel %vm1720, %v1713, %v1717
    %v1722 = vand.u32 2147483647, %v1627
    %vm1723 = vcmp.eq.f32.partialorder %v1722, 8.507059e+37
    %v1724 = vand.u32 %v1627, 2147483648
    %v1725 = vor.u32 1.1754944e-38, %v1724
    %v1726 = vsel %vm1723, %v1725, %v1721
    %v1727 = vmul.f32 1.0, %v1726
    %v1728 = vrcp.pop %v1628
    %v1729 = vmul.f32 %v1628, %v1728
    %v1730 = vsub.f32 1.0, %v1729
    %v1731 = vmul.f32 %v1728, %v1730
    %v1732 = vadd.f32 %v1728, %v1731
    %vm1733 = vweird.f32 %v1628
    %vm1734 = vweird.f32 %v1728
    %vm1735 = vmor %vm1733, %vm1734
    %v1736 = vsel %vm1735, %v1728, %v1732
    %v1737 = vand.u32 2147483647, %v1628
    %vm1738 = vcmp.eq.f32.partialorder %v1737, 8.507059e+37
    %v1739 = vand.u32 %v1628, 2147483648
    %v1740 = vor.u32 1.1754944e-38, %v1739
    %v1741 = vsel %vm1738, %v1740, %v1736
    %v1742 = vmul.f32 1.0, %v1741
    %v1743 = vrcp.pop %v1629
    %v1744 = vmul.f32 %v1629, %v1743
    %v1745 = vsub.f32 1.0, %v1744
    %v1746 = vmul.f32 %v1743, %v1745
    %v1747 = vadd.f32 %v1743, %v1746
    %vm1748 = vweird.f32 %v1629
    %vm1749 = vweird.f32 %v1743
    %vm1750 = vmor %vm1748, %vm1749
    %v1751 = vsel %vm1750, %v1743, %v1747
    %v1752 = vand.u32 2147483647, %v1629
    %vm1753 = vcmp.eq.f32.partialorder %v1752, 8.507059e+37
    %v1754 = vand.u32 %v1629, 2147483648
    %v1755 = vor.u32 1.1754944e-38, %v1754
    %v1756 = vsel %vm1753, %v1755, %v1751
    %v1757 = vmul.f32 1.0, %v1756
    %v1758 = vrcp.pop %v1630
    %v1759 = vmul.f32 %v1630, %v1758
    %v1760 = vsub.f32 1.0, %v1759
    %v1761 = vmul.f32 %v1758, %v1760
    %v1762 = vadd.f32 %v1758, %v1761
    %vm1763 = vweird.f32 %v1630
    %vm1764 = vweird.f32 %v1758
    %vm1765 = vmor %vm1763, %vm1764
    %v1766 = vsel %vm1765, %v1758, %v1762
    %v1767 = vand.u32 2147483647, %v1630
    %vm1768 = vcmp.eq.f32.partialorder %v1767, 8.507059e+37
    %v1769 = vand.u32 %v1630, 2147483648
    %v1770 = vor.u32 1.1754944e-38, %v1769
    %v1771 = vsel %vm1768, %v1770, %v1766
    %v1772 = vmul.f32 1.0, %v1771
    %v1773 = vrcp.pop %v1631
    %v1774 = vmul.f32 %v1631, %v1773
    %v1775 = vsub.f32 1.0, %v1774
    %v1776 = vmul.f32 %v1773, %v1775
    %v1777 = vadd.f32 %v1773, %v1776
    %vm1778 = vweird.f32 %v1631
    %vm1779 = vweird.f32 %v1773
    %vm1780 = vmor %vm1778, %vm1779
    %v1781 = vsel %vm1780, %v1773, %v1777
    %v1782 = vand.u32 2147483647, %v1631
    %vm1783 = vcmp.eq.f32.partialorder %v1782, 8.507059e+37
    %v1784 = vand.u32 %v1631, 2147483648
    %v1785 = vor.u32 1.1754944e-38, %v1784
    %v1786 = vsel %vm1783, %v1785, %v1781
    %v1787 = vmul.f32 1.0, %v1786
    %v1788 = vrcp.pop %v1632
    %v1789 = vmul.f32 %v1632, %v1788
    %v1790 = vsub.f32 1.0, %v1789
    %v1791 = vmul.f32 %v1788, %v1790
    %v1792 = vadd.f32 %v1788, %v1791
    %vm1793 = vweird.f32 %v1632
    %vm1794 = vweird.f32 %v1788
    %vm1795 = vmor %vm1793, %vm1794
    %v1796 = vsel %vm1795, %v1788, %v1792
    %v1797 = vand.u32 2147483647, %v1632
    %vm1798 = vcmp.eq.f32.partialorder %v1797, 8.507059e+37
    %v1799 = vand.u32 %v1632, 2147483648
    %v1800 = vor.u32 1.1754944e-38, %v1799
    %v1801 = vsel %vm1798, %v1800, %v1796
    %v1802 = vmul.f32 1.0, %v1801
    %v1803 = vrcp.pop %v1633
    %v1804 = vmul.f32 %v1633, %v1803
    %v1805 = vsub.f32 1.0, %v1804
    %v1806 = vmul.f32 %v1803, %v1805
    %v1807 = vadd.f32 %v1803, %v1806
    %vm1808 = vweird.f32 %v1633
    %vm1809 = vweird.f32 %v1803
    %vm1810 = vmor %vm1808, %vm1809
    %v1811 = vsel %vm1810, %v1803, %v1807
    %v1812 = vand.u32 2147483647, %v1633
    %vm1813 = vcmp.eq.f32.partialorder %v1812, 8.507059e+37
    %v1814 = vand.u32 %v1633, 2147483648
    %v1815 = vor.u32 1.1754944e-38, %v1814
    %v1816 = vsel %vm1813, %v1815, %v1811
    %v1817 = vmul.f32 1.0, %v1816
    %v1818 = vrcp.pop %v1634
    %v1819 = vmul.f32 %v1634, %v1818
    %v1820 = vsub.f32 1.0, %v1819
    %v1821 = vmul.f32 %v1818, %v1820
    %v1822 = vadd.f32 %v1818, %v1821
    %vm1823 = vweird.f32 %v1634
    %vm1824 = vweird.f32 %v1818
    %vm1825 = vmor %vm1823, %vm1824
    %v1826 = vsel %vm1825, %v1818, %v1822
    %v1827 = vand.u32 2147483647, %v1634
    %vm1828 = vcmp.eq.f32.partialorder %v1827, 8.507059e+37
    %v1829 = vand.u32 %v1634, 2147483648
    %v1830 = vor.u32 1.1754944e-38, %v1829
    %v1831 = vsel %vm1828, %v1830, %v1826
    %v1832 = vmul.f32 1.0, %v1831
    %v1833 = vrcp.pop %v1635
    %v1834 = vmul.f32 %v1635, %v1833
    %v1835 = vsub.f32 1.0, %v1834
    %v1836 = vmul.f32 %v1833, %v1835
    %v1837 = vadd.f32 %v1833, %v1836
    %vm1838 = vweird.f32 %v1635
    %vm1839 = vweird.f32 %v1833
    %vm1840 = vmor %vm1838, %vm1839
    %v1841 = vsel %vm1840, %v1833, %v1837
    %v1842 = vand.u32 2147483647, %v1635
    %vm1843 = vcmp.eq.f32.partialorder %v1842, 8.507059e+37
    %v1844 = vand.u32 %v1635, 2147483648
    %v1845 = vor.u32 1.1754944e-38, %v1844
    %v1846 = vsel %vm1843, %v1845, %v1841
    %v1847 = vmul.f32 1.0, %v1846
    %v1848 = vrcp.pop %v1636
    %v1849 = vmul.f32 %v1636, %v1848
    %v1850 = vsub.f32 1.0, %v1849
    %v1851 = vmul.f32 %v1848, %v1850
    %v1852 = vadd.f32 %v1848, %v1851
    %vm1853 = vweird.f32 %v1636
    %vm1854 = vweird.f32 %v1848
    %vm1855 = vmor %vm1853, %vm1854
    %v1856 = vsel %vm1855, %v1848, %v1852
    %v1857 = vand.u32 2147483647, %v1636
    %vm1858 = vcmp.eq.f32.partialorder %v1857, 8.507059e+37
    %v1859 = vand.u32 %v1636, 2147483648
    %v1860 = vor.u32 1.1754944e-38, %v1859
    %v1861 = vsel %vm1858, %v1860, %v1856
    %v1862 = vmul.f32 1.0, %v1861
    %v1863 = vrcp.pop %v1637
    %v1864 = vmul.f32 %v1637, %v1863
    %v1865 = vsub.f32 1.0, %v1864
    %v1866 = vmul.f32 %v1863, %v1865
    %v1867 = vadd.f32 %v1863, %v1866
    %vm1868 = vweird.f32 %v1637
    %vm1869 = vweird.f32 %v1863
    %vm1870 = vmor %vm1868, %vm1869
    %v1871 = vsel %vm1870, %v1863, %v1867
    %v1872 = vand.u32 2147483647, %v1637
    %vm1873 = vcmp.eq.f32.partialorder %v1872, 8.507059e+37
    %v1874 = vand.u32 %v1637, 2147483648
    %v1875 = vor.u32 1.1754944e-38, %v1874
    %v1876 = vsel %vm1873, %v1875, %v1871
    %v1877 = vmul.f32 1.0, %v1876
    %v1878 = vsub.f32 1.0, %v1652
    %v1879 = vsub.f32 1.0, %v1667
    %v1880 = vsub.f32 1.0, %v1682
    %v1881 = vsub.f32 1.0, %v1697
    %v1882 = vsub.f32 1.0, %v1712
    %v1883 = vsub.f32 1.0, %v1727
    %v1884 = vsub.f32 1.0, %v1742
    %v1885 = vsub.f32 1.0, %v1757
    %v1886 = vsub.f32 1.0, %v1772
    %v1887 = vsub.f32 1.0, %v1787
    %v1888 = vsub.f32 1.0, %v1802
    %v1889 = vsub.f32 1.0, %v1817
    %v1890 = vsub.f32 1.0, %v1832
    %v1891 = vsub.f32 1.0, %v1847
    %v1892 = vsub.f32 1.0, %v1862
    %v1893 = vsub.f32 1.0, %v1877
    %vm1894 = vcmp.gt.f32.partialorder %v1652, 0.5
    %vm1895 = vcmp.gt.f32.partialorder %v1667, 0.5
    %vm1896 = vcmp.gt.f32.partialorder %v1682, 0.5
    %vm1897 = vcmp.gt.f32.partialorder %v1697, 0.5
    %vm1898 = vcmp.gt.f32.partialorder %v1712, 0.5
    %vm1899 = vcmp.gt.f32.partialorder %v1727, 0.5
    %vm1900 = vcmp.gt.f32.partialorder %v1742, 0.5
    %vm1901 = vcmp.gt.f32.partialorder %v1757, 0.5
    %vm1902 = vcmp.gt.f32.partialorder %v1772, 0.5
    %vm1903 = vcmp.gt.f32.partialorder %v1787, 0.5
    %vm1904 = vcmp.gt.f32.partialorder %v1802, 0.5
    %vm1905 = vcmp.gt.f32.partialorder %v1817, 0.5
    %vm1906 = vcmp.gt.f32.partialorder %v1832, 0.5
    %vm1907 = vcmp.gt.f32.partialorder %v1847, 0.5
    %vm1908 = vcmp.gt.f32.partialorder %v1862, 0.5
    %vm1909 = vcmp.gt.f32.partialorder %v1877, 0.5
    %v1910 = vsel %vm1894, 1, 0
    %v1911 = vsel %vm1895, 1, 0
    %v1912 = vsel %vm1896, 1, 0
    %v1913 = vsel %vm1897, 1, 0
    %v1914 = vsel %vm1898, 1, 0
    %v1915 = vsel %vm1899, 1, 0
    %v1916 = vsel %vm1900, 1, 0
    %v1917 = vsel %vm1901, 1, 0
    %v1918 = vsel %vm1902, 1, 0
    %v1919 = vsel %vm1903, 1, 0
    %v1920 = vsel %vm1904, 1, 0
    %v1921 = vsel %vm1905, 1, 0
    %v1922 = vsel %vm1906, 1, 0
    %v1923 = vsel %vm1907, 1, 0
    %v1924 = vsel %vm1908, 1, 0
    %v1925 = vsel %vm1909, 1, 0
    %v1926 = vcvt.s32.f32 %v1910
    %v1927 = vcvt.s32.f32 %v1911
    %v1928 = vcvt.s32.f32 %v1912
    %v1929 = vcvt.s32.f32 %v1913
    %v1930 = vcvt.s32.f32 %v1914
    %v1931 = vcvt.s32.f32 %v1915
    %v1932 = vcvt.s32.f32 %v1916
    %v1933 = vcvt.s32.f32 %v1917
    %v1934 = vcvt.s32.f32 %v1918
    %v1935 = vcvt.s32.f32 %v1919
    %v1936 = vcvt.s32.f32 %v1920
    %v1937 = vcvt.s32.f32 %v1921
    %v1938 = vcvt.s32.f32 %v1922
    %v1939 = vcvt.s32.f32 %v1923
    %v1940 = vcvt.s32.f32 %v1924
    %v1941 = vcvt.s32.f32 %v1925
    %vm1942 = vcmask 7168
    %1943 = vst.msk [vmem:[%s24] sm:$0xff] %vm1942, %v1926
    %1944 = vst.msk [vmem:[%s24 + $0x8] sm:$0xff] %vm1942, %v1927
    %1945 = vst.msk [vmem:[%s24 + $0x10] sm:$0xff] %vm1942, %v1928
    %1946 = vst.msk [vmem:[%s24 + $0x18] sm:$0xff] %vm1942, %v1929
    %1947 = vst.msk [vmem:[%s24 + $0x20] sm:$0xff] %vm1942, %v1930
    %1948 = vst.msk [vmem:[%s24 + $0x28] sm:$0xff] %vm1942, %v1931
    %1949 = vst.msk [vmem:[%s24 + $0x30] sm:$0xff] %vm1942, %v1932
    %1950 = vst.msk [vmem:[%s24 + $0x38] sm:$0xff] %vm1942, %v1933
    %1951 = vst.msk [vmem:[%s24 + $0x40] sm:$0xff] %vm1942, %v1934
    %1952 = vst.msk [vmem:[%s24 + $0x48] sm:$0xff] %vm1942, %v1935
    %1953 = vst.msk [vmem:[%s24 + $0x50] sm:$0xff] %vm1942, %v1936
    %1954 = vst.msk [vmem:[%s24 + $0x58] sm:$0xff] %vm1942, %v1937
    %1955 = vst.msk [vmem:[%s24 + $0x60] sm:$0xff] %vm1942, %v1938
    %1956 = vst.msk [vmem:[%s24 + $0x68] sm:$0xff] %vm1942, %v1939
    %1957 = vst.msk [vmem:[%s24 + $0x70] sm:$0xff] %vm1942, %v1940
    %1958 = vst.msk [vmem:[%s24 + $0x78] sm:$0xff] %vm1942, %v1941
    %1959 = vmatpush.msra.mxu0 %v938
    %1960 = vmatpush.msra.mxu0 %v936
    %1961 = vmatpush.msra.mxu0 %v933
    %1962 = vmatpush.msra.mxu0 %v931
    %1963 = vmatpush.msra.mxu0 %v928
    %1964 = vmatpush.msra.mxu0 %v926
    %1965 = vmatpush.msra.mxu0 %v923
    %1966 = vmatpush.msra.mxu0 %v921
    %1967 = vmatpush.msra.mxu0 %v918
    %1968 = vmatpush.msra.mxu0 %v916
    %1969 = vmatpush.msra.mxu0 %v913
    %1970 = vmatpush.msra.mxu0 %v911
    %1971 = vmatpush.msra.mxu0 %v908
    %1972 = vmatpush.msra.mxu0 %v906
    %1973 = vmatpush.msra.mxu0 %v903
    %1974 = vmatpush.msra.mxu0 %v901
    %1975 = vmatmul.f32.gmra.mxu0 1.0
    %v1976 = vpop.f32.mrf.mxu0
    %v1977 = vadd.f32 0.0, %v1976
    %1978 = vdwg.mxu0
    %v1979 = vrcp.pop 128.0
    %v1980 = vmul.f32 128.0, %v1979
    %v1981 = vsub.f32 1.0, %v1980
    %v1982 = vmul.f32 %v1979, %v1981
    %v1983 = vadd.f32 %v1979, %v1982
    %vm1984 = vweird.f32 %v1979
    %v1985 = vsel %vm1984, %v1979, %v1983
    %v1986 = vmul.f32 %v1977, %v1985
    %v1987 = vperm.slane %v1986, 0
    %v1988 = vsub.f32 %v901, %v1987
    %v1989 = vsub.f32 %v903, %v1987
    %v1990 = vsub.f32 %v906, %v1987
    %v1991 = vsub.f32 %v908, %v1987
    %v1992 = vsub.f32 %v911, %v1987
    %v1993 = vsub.f32 %v913, %v1987
    %v1994 = vsub.f32 %v916, %v1987
    %v1995 = vsub.f32 %v918, %v1987
    %v1996 = vsub.f32 %v921, %v1987
    %v1997 = vsub.f32 %v923, %v1987
    %v1998 = vsub.f32 %v926, %v1987
    %v1999 = vsub.f32 %v928, %v1987
    %v2000 = vsub.f32 %v931, %v1987
    %v2001 = vsub.f32 %v933, %v1987
    %v2002 = vsub.f32 %v936, %v1987
    %v2003 = vsub.f32 %v938, %v1987
    %v2004 = vmul.f32 %v1988, %v1988
    %v2005 = vmul.f32 %v1989, %v1989
    %v2006 = vmul.f32 %v1990, %v1990
    %v2007 = vmul.f32 %v1991, %v1991
    %v2008 = vmul.f32 %v1992, %v1992
    %v2009 = vmul.f32 %v1993, %v1993
    %v2010 = vmul.f32 %v1994, %v1994
    %v2011 = vmul.f32 %v1995, %v1995
    %v2012 = vmul.f32 %v1996, %v1996
    %v2013 = vmul.f32 %v1997, %v1997
    %v2014 = vmul.f32 %v1998, %v1998
    %v2015 = vmul.f32 %v1999, %v1999
    %v2016 = vmul.f32 %v2000, %v2000
    %v2017 = vmul.f32 %v2001, %v2001
    %v2018 = vmul.f32 %v2002, %v2002
    %v2019 = vmul.f32 %v2003, %v2003
    %2020 = vmatpush.msra.mxu0 %v2019
    %2021 = vmatpush.msra.mxu0 %v2018
    %2022 = vmatpush.msra.mxu0 %v2017
    %2023 = vmatpush.msra.mxu0 %v2016
    %2024 = vmatpush.msra.mxu0 %v2015
    %2025 = vmatpush.msra.mxu0 %v2014
    %2026 = vmatpush.msra.mxu0 %v2013
    %2027 = vmatpush.msra.mxu0 %v2012
    %2028 = vmatpush.msra.mxu0 %v2011
    %2029 = vmatpush.msra.mxu0 %v2010
    %2030 = vmatpush.msra.mxu0 %v2009
    %2031 = vmatpush.msra.mxu0 %v2008
    %2032 = vmatpush.msra.mxu0 %v2007
    %2033 = vmatpush.msra.mxu0 %v2006
    %2034 = vmatpush.msra.mxu0 %v2005
    %2035 = vmatpush.msra.mxu0 %v2004
    %2036 = vmatmul.f32.gmra.mxu0 1.0
    %v2037 = vpop.f32.mrf.mxu0
    %v2038 = vadd.f32 0.0, %v2037
    %2039 = vdwg.mxu0
    %v2040 = vrcp.pop 127.0
    %v2041 = vmul.f32 127.0, %v2040
    %v2042 = vsub.f32 1.0, %v2041
    %v2043 = vmul.f32 %v2040, %v2042
    %v2044 = vadd.f32 %v2040, %v2043
    %vm2045 = vweird.f32 %v2040
    %v2046 = vsel %vm2045, %v2040, %v2044
    %v2047 = vmul.f32 %v2038, %v2046
    %v2048 = vrsqrt.pop %v2047
    %v2049 = vmul.f32 %v2048, %v2047
    %v2050 = vmul.f32 %v2049, %v2048
    %v2051 = vmul.f32 0.5, %v2050
    %v2052 = vsub.f32 1.5, %v2051
    %v2053 = vmul.f32 %v2048, %v2052
    %v2054 = vmul.f32 %v2047, %v2053
    %vm2055 = vcmp.eq.f32.partialorder %v2047, inf
    %v2056 = vsel %vm2055, %v2047, %v2054
    %vm2057 = vcmp.eq.f32.partialorder %v2047, 0.0
    %v2058 = vand.u32 %v2047, 2147483648
    %v2059 = vsel %vm2057, %v2058, %v2056
    %v2060 = vadd.f32 %v2059, 1e-07
    %v2061 = vmul.f32 %v2060, %v2060
    %v2062 = vmul.f32 %v1878, %v1878
    %v2063 = vmul.f32 %v1879, %v1879
    %v2064 = vmul.f32 %v1880, %v1880
    %v2065 = vmul.f32 %v1881, %v1881
    %v2066 = vmul.f32 %v1882, %v1882
    %v2067 = vmul.f32 %v1883, %v1883
    %v2068 = vmul.f32 %v1884, %v1884
    %v2069 = vmul.f32 %v1885, %v1885
    %v2070 = vmul.f32 %v1886, %v1886
    %v2071 = vmul.f32 %v1887, %v1887
    %v2072 = vmul.f32 %v1888, %v1888
    %v2073 = vmul.f32 %v1889, %v1889
    %v2074 = vmul.f32 %v1890, %v1890
    %v2075 = vmul.f32 %v1891, %v1891
    %v2076 = vmul.f32 %v1892, %v1892
    %v2077 = vmul.f32 %v1893, %v1893
    %v2078 = vsel %vm1942, %v2062, 0.0
    %v2079 = vsel %vm1942, %v2063, 0.0
    %v2080 = vadd.f32 %v2078, %v2079
    %v2081 = vsel %vm1942, %v2064, 0.0
    %v2082 = vadd.f32 %v2080, %v2081
    %v2083 = vsel %vm1942, %v2065, 0.0
    %v2084 = vadd.f32 %v2082, %v2083
    %v2085 = vsel %vm1942, %v2066, 0.0
    %v2086 = vadd.f32 %v2084, %v2085
    %v2087 = vsel %vm1942, %v2067, 0.0
    %v2088 = vadd.f32 %v2086, %v2087
    %v2089 = vsel %vm1942, %v2068, 0.0
    %v2090 = vadd.f32 %v2088, %v2089
    %v2091 = vsel %vm1942, %v2069, 0.0
    %v2092 = vadd.f32 %v2090, %v2091
    %v2093 = vsel %vm1942, %v2070, 0.0
    %v2094 = vadd.f32 %v2092, %v2093
    %v2095 = vsel %vm1942, %v2071, 0.0
    %v2096 = vadd.f32 %v2094, %v2095
    %v2097 = vsel %vm1942, %v2072, 0.0
    %v2098 = vadd.f32 %v2096, %v2097
    %v2099 = vsel %vm1942, %v2073, 0.0
    %v2100 = vadd.f32 %v2098, %v2099
    %v2101 = vsel %vm1942, %v2074, 0.0
    %v2102 = vadd.f32 %v2100, %v2101
    %v2103 = vsel %vm1942, %v2075, 0.0
    %v2104 = vadd.f32 %v2102, %v2103
    %v2105 = vsel %vm1942, %v2076, 0.0
    %v2106 = vadd.f32 %v2104, %v2105
    %v2107 = vsel %vm1942, %v2077, 0.0
    %v2108 = vadd.f32 %v2106, %v2107
    %2109 = vadd.xlane.f32.xlu0 %v2108
    %v2110 = vpop.xlane.xlu0 %2109
    %v2111 = vrot.slane %v2110, 4
    %v2112 = vadd.f32 %v2110, %v2111
    %v2113 = vrot.slane %v2112, 2
    %v2114 = vadd.f32 %v2112, %v2113
    %v2115 = vrot.slane %v2114, 1
    %v2116 = vadd.f32 %v2114, %v2115
    %s2117 = vtos %v2116
    %v2118 = vstv %s2117
    %v2119 = vrcp.pop %v2061
    %v2120 = vmul.f32 %v2061, %v2119
    %v2121 = vsub.f32 1.0, %v2120
    %v2122 = vmul.f32 %v2119, %v2121
    %v2123 = vadd.f32 %v2119, %v2122
    %vm2124 = vweird.f32 %v2061
    %vm2125 = vweird.f32 %v2119
    %vm2126 = vmor %vm2124, %vm2125
    %v2127 = vsel %vm2126, %v2119, %v2123
    %v2128 = vand.u32 2147483647, %v2061
    %vm2129 = vcmp.eq.f32.partialorder %v2128, 8.507059e+37
    %v2130 = vand.u32 %v2061, 2147483648
    %v2131 = vor.u32 1.1754944e-38, %v2130
    %v2132 = vsel %vm2129, %v2131, %v2127
    %v2133 = vmul.f32 %v2047, %v2132
    %vm2134 = vcmask 1040384
    %v2135 = vsel %vm2134, %v2133, 0.0
    %2136 = vadd.xlane.f32.xlu0 %v2135
    %v2137 = vpop.xlane.xlu0 %2136
    %v2138 = vrot.slane %v2137, 4
    %v2139 = vadd.f32 %v2137, %v2138
    %v2140 = vrot.slane %v2139, 2
    %v2141 = vadd.f32 %v2139, %v2140
    %v2142 = vrot.slane %v2141, 1
    %v2143 = vadd.f32 %v2141, %v2142
    %s2144 = vtos %v2143
    %v2145 = vstv %s2144
    %v2146 = vmul.f32 %v1652, %v1652
    %v2147 = vmul.f32 %v1667, %v1667
    %v2148 = vmul.f32 %v1682, %v1682
    %v2149 = vmul.f32 %v1697, %v1697
    %v2150 = vmul.f32 %v1712, %v1712
    %v2151 = vmul.f32 %v1727, %v1727
    %v2152 = vmul.f32 %v1742, %v1742
    %v2153 = vmul.f32 %v1757, %v1757
    %v2154 = vmul.f32 %v1772, %v1772
    %v2155 = vmul.f32 %v1787, %v1787
    %v2156 = vmul.f32 %v1802, %v1802
    %v2157 = vmul.f32 %v1817, %v1817
    %v2158 = vmul.f32 %v1832, %v1832
    %v2159 = vmul.f32 %v1847, %v1847
    %v2160 = vmul.f32 %v1862, %v1862
    %v2161 = vmul.f32 %v1877, %v1877
    %2163 = vset.pattern.permute.xlu0 0
    %2164 = vperm.xlu0 %2163, %v2146
    %v2165 = vpop.permute.xlu0 %2164
    %2168 = vset.pattern.permute.xlu0 0
    %2169 = vperm.xlu0 %2168, %v2147
    %v2170 = vpop.permute.xlu0 %2169
    %2173 = vset.pattern.permute.xlu0 0
    %2174 = vperm.xlu0 %2173, %v2148
    %v2175 = vpop.permute.xlu0 %2174
    %2178 = vset.pattern.permute.xlu0 0
    %2179 = vperm.xlu0 %2178, %v2149
    %v2180 = vpop.permute.xlu0 %2179
    %2183 = vset.pattern.permute.xlu0 0
    %2184 = vperm.xlu0 %2183, %v2150
    %v2185 = vpop.permute.xlu0 %2184
    %2188 = vset.pattern.permute.xlu0 0
    %2189 = vperm.xlu0 %2188, %v2151
    %v2190 = vpop.permute.xlu0 %2189
    %2193 = vset.pattern.permute.xlu0 0
    %2194 = vperm.xlu0 %2193, %v2152
    %v2195 = vpop.permute.xlu0 %2194
    %2198 = vset.pattern.permute.xlu0 0
    %2199 = vperm.xlu0 %2198, %v2153
    %v2200 = vpop.permute.xlu0 %2199
    %2203 = vset.pattern.permute.xlu0 0
    %2204 = vperm.xlu0 %2203, %v2154
    %v2205 = vpop.permute.xlu0 %2204
    %2208 = vset.pattern.permute.xlu0 0
    %2209 = vperm.xlu0 %2208, %v2155
    %v2210 = vpop.permute.xlu0 %2209
    %2213 = vset.pattern.permute.xlu0 0
    %2214 = vperm.xlu0 %2213, %v2156
    %v2215 = vpop.permute.xlu0 %2214
    %2218 = vset.pattern.permute.xlu0 0
    %2219 = vperm.xlu0 %2218, %v2157
    %v2220 = vpop.permute.xlu0 %2219
    %2223 = vset.pattern.permute.xlu0 0
    %2224 = vperm.xlu0 %2223, %v2158
    %v2225 = vpop.permute.xlu0 %2224
    %2228 = vset.pattern.permute.xlu0 0
    %2229 = vperm.xlu0 %2228, %v2159
    %v2230 = vpop.permute.xlu0 %2229
    %2233 = vset.pattern.permute.xlu0 0
    %2234 = vperm.xlu0 %2233, %v2160
    %v2235 = vpop.permute.xlu0 %2234
    %2238 = vset.pattern.permute.xlu0 0
    %2239 = vperm.xlu0 %2238, %v2161
    %v2240 = vpop.permute.xlu0 %2239
    %v2242 = vmul.f32 %v2165, %v2004
    %v2243 = vmul.f32 %v2170, %v2005
    %v2244 = vmul.f32 %v2175, %v2006
    %v2245 = vmul.f32 %v2180, %v2007
    %v2246 = vmul.f32 %v2185, %v2008
    %v2247 = vmul.f32 %v2190, %v2009
    %v2248 = vmul.f32 %v2195, %v2010
    %v2249 = vmul.f32 %v2200, %v2011
    %v2250 = vmul.f32 %v2205, %v2012
    %v2251 = vmul.f32 %v2210, %v2013
    %v2252 = vmul.f32 %v2215, %v2014
    %v2253 = vmul.f32 %v2220, %v2015
    %v2254 = vmul.f32 %v2225, %v2016
    %v2255 = vmul.f32 %v2230, %v2017
    %v2256 = vmul.f32 %v2235, %v2018
    %v2257 = vmul.f32 %v2240, %v2019
    %v2258 = vadd.f32 %v2242, %v2243
    %v2259 = vadd.f32 %v2258, %v2244
    %v2260 = vadd.f32 %v2259, %v2245
    %v2261 = vadd.f32 %v2260, %v2246
    %v2262 = vadd.f32 %v2261, %v2247
    %v2263 = vadd.f32 %v2262, %v2248
    %v2264 = vadd.f32 %v2263, %v2249
    %v2265 = vadd.f32 %v2264, %v2250
    %v2266 = vadd.f32 %v2265, %v2251
    %v2267 = vadd.f32 %v2266, %v2252
    %v2268 = vadd.f32 %v2267, %v2253
    %v2269 = vadd.f32 %v2268, %v2254
    %v2270 = vadd.f32 %v2269, %v2255
    %v2271 = vadd.f32 %v2270, %v2256
    %v2272 = vadd.f32 %v2271, %v2257
    %v2273 = vrot.slane %v2272, 4
    %v2274 = vadd.f32 %v2272, %v2273
    %v2275 = vrot.slane %v2274, 2
    %v2276 = vadd.f32 %v2274, %v2275
    %v2277 = vrot.slane %v2276, 1
    %v2278 = vadd.f32 %v2276, %v2277
    %v2279 = vmul.f32 %v2118, 0.5
    %v2280 = vmul.f32 %v2279, %v2145
    %v2281 = vrcp.pop 16384.0
    %v2282 = vmul.f32 16384.0, %v2281
    %v2283 = vsub.f32 1.0, %v2282
    %v2284 = vmul.f32 %v2281, %v2283
    %v2285 = vadd.f32 %v2281, %v2284
    %vm2286 = vweird.f32 %v2281
    %v2287 = vsel %vm2286, %v2281, %v2285
    %v2288 = vmul.f32 %v2280, %v2287
    %v2289 = vmul.f32 %v2278, %v2132
    %v2290 = vsel %vm2134, %v2289, 0.0
    %2291 = vadd.xlane.f32.xlu0 %v2290
    %v2292 = vpop.xlane.xlu0 %2291
    %v2293 = vrot.slane %v2292, 4
    %v2294 = vadd.f32 %v2292, %v2293
    %v2295 = vrot.slane %v2294, 2
    %v2296 = vadd.f32 %v2294, %v2295
    %v2297 = vrot.slane %v2296, 1
    %v2298 = vadd.f32 %v2296, %v2297
    %s2299 = vtos %v2298
    %v2300 = vstv %s2299
    %v2301 = vmul.f32 %v2300, %v1985
    %v2302 = vadd.f32 %v2288, %v2301
    %2304 = vset.pattern.permute.xlu0 0
    %2305 = vperm.xlu0 %2304, %v1652
    %v2306 = vpop.permute.xlu0 %2305
    %2309 = vset.pattern.permute.xlu0 0
    %2310 = vperm.xlu0 %2309, %v1667
    %v2311 = vpop.permute.xlu0 %2310
    %2314 = vset.pattern.permute.xlu0 0
    %2315 = vperm.xlu0 %2314, %v1682
    %v2316 = vpop.permute.xlu0 %2315
    %2319 = vset.pattern.permute.xlu0 0
    %2320 = vperm.xlu0 %2319, %v1697
    %v2321 = vpop.permute.xlu0 %2320
    %2324 = vset.pattern.permute.xlu0 0
    %2325 = vperm.xlu0 %2324, %v1712
    %v2326 = vpop.permute.xlu0 %2325
    %2329 = vset.pattern.permute.xlu0 0
    %2330 = vperm.xlu0 %2329, %v1727
    %v2331 = vpop.permute.xlu0 %2330
    %2334 = vset.pattern.permute.xlu0 0
    %2335 = vperm.xlu0 %2334, %v1742
    %v2336 = vpop.permute.xlu0 %2335
    %2339 = vset.pattern.permute.xlu0 0
    %2340 = vperm.xlu0 %2339, %v1757
    %v2341 = vpop.permute.xlu0 %2340
    %2344 = vset.pattern.permute.xlu0 0
    %2345 = vperm.xlu0 %2344, %v1772
    %v2346 = vpop.permute.xlu0 %2345
    %2349 = vset.pattern.permute.xlu0 0
    %2350 = vperm.xlu0 %2349, %v1787
    %v2351 = vpop.permute.xlu0 %2350
    %2354 = vset.pattern.permute.xlu0 0
    %2355 = vperm.xlu0 %2354, %v1802
    %v2356 = vpop.permute.xlu0 %2355
    %2359 = vset.pattern.permute.xlu0 0
    %2360 = vperm.xlu0 %2359, %v1817
    %v2361 = vpop.permute.xlu0 %2360
    %2364 = vset.pattern.permute.xlu0 0
    %2365 = vperm.xlu0 %2364, %v1832
    %v2366 = vpop.permute.xlu0 %2365
    %2369 = vset.pattern.permute.xlu0 0
    %2370 = vperm.xlu0 %2369, %v1847
    %v2371 = vpop.permute.xlu0 %2370
    %2374 = vset.pattern.permute.xlu0 0
    %2375 = vperm.xlu0 %2374, %v1862
    %v2376 = vpop.permute.xlu0 %2375
    %2379 = vset.pattern.permute.xlu0 0
    %2380 = vperm.xlu0 %2379, %v1877
    %v2381 = vpop.permute.xlu0 %2380
    %v2383 = vmul.f32 %v2306, %v901
    %v2384 = vmul.f32 %v2311, %v903
    %v2385 = vmul.f32 %v2316, %v906
    %v2386 = vmul.f32 %v2321, %v908
    %v2387 = vmul.f32 %v2326, %v911
    %v2388 = vmul.f32 %v2331, %v913
    %v2389 = vmul.f32 %v2336, %v916
    %v2390 = vmul.f32 %v2341, %v918
    %v2391 = vmul.f32 %v2346, %v921
    %v2392 = vmul.f32 %v2351, %v923
    %v2393 = vmul.f32 %v2356, %v926
    %v2394 = vmul.f32 %v2361, %v928
    %v2395 = vmul.f32 %v2366, %v931
    %v2396 = vmul.f32 %v2371, %v933
    %v2397 = vmul.f32 %v2376, %v936
    %v2398 = vmul.f32 %v2381, %v938
    %2400 = vset.pattern.permute.xlu0 0
    %2401 = vperm.xlu0 %2400, %v1878
    %v2402 = vpop.permute.xlu0 %2401
    %2405 = vset.pattern.permute.xlu0 0
    %2406 = vperm.xlu0 %2405, %v1879
    %v2407 = vpop.permute.xlu0 %2406
    %2410 = vset.pattern.permute.xlu0 0
    %2411 = vperm.xlu0 %2410, %v1880
    %v2412 = vpop.permute.xlu0 %2411
    %2415 = vset.pattern.permute.xlu0 0
    %2416 = vperm.xlu0 %2415, %v1881
    %v2417 = vpop.permute.xlu0 %2416
    %2420 = vset.pattern.permute.xlu0 0
    %2421 = vperm.xlu0 %2420, %v1882
    %v2422 = vpop.permute.xlu0 %2421
    %2425 = vset.pattern.permute.xlu0 0
    %2426 = vperm.xlu0 %2425, %v1883
    %v2427 = vpop.permute.xlu0 %2426
    %2430 = vset.pattern.permute.xlu0 0
    %2431 = vperm.xlu0 %2430, %v1884
    %v2432 = vpop.permute.xlu0 %2431
    %2435 = vset.pattern.permute.xlu0 0
    %2436 = vperm.xlu0 %2435, %v1885
    %v2437 = vpop.permute.xlu0 %2436
    %2440 = vset.pattern.permute.xlu0 0
    %2441 = vperm.xlu0 %2440, %v1886
    %v2442 = vpop.permute.xlu0 %2441
    %2445 = vset.pattern.permute.xlu0 0
    %2446 = vperm.xlu0 %2445, %v1887
    %v2447 = vpop.permute.xlu0 %2446
    %2450 = vset.pattern.permute.xlu0 0
    %2451 = vperm.xlu0 %2450, %v1888
    %v2452 = vpop.permute.xlu0 %2451
    %2455 = vset.pattern.permute.xlu0 0
    %2456 = vperm.xlu0 %2455, %v1889
    %v2457 = vpop.permute.xlu0 %2456
    %2460 = vset.pattern.permute.xlu0 0
    %2461 = vperm.xlu0 %2460, %v1890
    %v2462 = vpop.permute.xlu0 %2461
    %2465 = vset.pattern.permute.xlu0 0
    %2466 = vperm.xlu0 %2465, %v1891
    %v2467 = vpop.permute.xlu0 %2466
    %2470 = vset.pattern.permute.xlu0 0
    %2471 = vperm.xlu0 %2470, %v1892
    %v2472 = vpop.permute.xlu0 %2471
    %2475 = vset.pattern.permute.xlu0 0
    %2476 = vperm.xlu0 %2475, %v1893
    %v2477 = vpop.permute.xlu0 %2476
    %v2479 = vmul.f32 %v2402, %v1987
    %v2480 = vmul.f32 %v2407, %v1987
    %v2481 = vmul.f32 %v2412, %v1987
    %v2482 = vmul.f32 %v2417, %v1987
    %v2483 = vmul.f32 %v2422, %v1987
    %v2484 = vmul.f32 %v2427, %v1987
    %v2485 = vmul.f32 %v2432, %v1987
    %v2486 = vmul.f32 %v2437, %v1987
    %v2487 = vmul.f32 %v2442, %v1987
    %v2488 = vmul.f32 %v2447, %v1987
    %v2489 = vmul.f32 %v2452, %v1987
    %v2490 = vmul.f32 %v2457, %v1987
    %v2491 = vmul.f32 %v2462, %v1987
    %v2492 = vmul.f32 %v2467, %v1987
    %v2493 = vmul.f32 %v2472, %v1987
    %v2494 = vmul.f32 %v2477, %v1987
    %v2495 = vadd.f32 %v2383, %v2479
    %v2496 = vadd.f32 %v2384, %v2480
    %v2497 = vadd.f32 %v2385, %v2481
    %v2498 = vadd.f32 %v2386, %v2482
    %v2499 = vadd.f32 %v2387, %v2483
    %v2500 = vadd.f32 %v2388, %v2484
    %v2501 = vadd.f32 %v2389, %v2485
    %v2502 = vadd.f32 %v2390, %v2486
    %v2503 = vadd.f32 %v2391, %v2487
    %v2504 = vadd.f32 %v2392, %v2488
    %v2505 = vadd.f32 %v2393, %v2489
    %v2506 = vadd.f32 %v2394, %v2490
    %v2507 = vadd.f32 %v2395, %v2491
    %v2508 = vadd.f32 %v2396, %v2492
    %v2509 = vadd.f32 %v2397, %v2493
    %v2510 = vadd.f32 %v2398, %v2494
    %v2511 = vld [vmem:[%s4] sm:$0xff]
    %v2512 = vld [vmem:[%s4 + $0x8] sm:$0xff]
    %v2513 = vld [vmem:[%s4 + $0x10] sm:$0xff]
    %v2514 = vld [vmem:[%s4 + $0x18] sm:$0xff]
    %v2515 = vld [vmem:[%s4 + $0x20] sm:$0xff]
    %v2516 = vld [vmem:[%s4 + $0x28] sm:$0xff]
    %v2517 = vld [vmem:[%s4 + $0x30] sm:$0xff]
    %v2518 = vld [vmem:[%s4 + $0x38] sm:$0xff]
    %v2519 = vld [vmem:[%s4 + $0x40] sm:$0xff]
    %v2520 = vld [vmem:[%s4 + $0x48] sm:$0xff]
    %v2521 = vld [vmem:[%s4 + $0x50] sm:$0xff]
    %v2522 = vld [vmem:[%s4 + $0x58] sm:$0xff]
    %v2523 = vld [vmem:[%s4 + $0x60] sm:$0xff]
    %v2524 = vld [vmem:[%s4 + $0x68] sm:$0xff]
    %v2525 = vld [vmem:[%s4 + $0x70] sm:$0xff]
    %v2526 = vld [vmem:[%s4 + $0x78] sm:$0xff]
    %v2527 = vperm.slane %v2059, 0
    %v2528 = vmul.f32 %v2402, %v2527
    %v2529 = vmul.f32 %v2407, %v2527
    %v2530 = vmul.f32 %v2412, %v2527
    %v2531 = vmul.f32 %v2417, %v2527
    %v2532 = vmul.f32 %v2422, %v2527
    %v2533 = vmul.f32 %v2427, %v2527
    %v2534 = vmul.f32 %v2432, %v2527
    %v2535 = vmul.f32 %v2437, %v2527
    %v2536 = vmul.f32 %v2442, %v2527
    %v2537 = vmul.f32 %v2447, %v2527
    %v2538 = vmul.f32 %v2452, %v2527
    %v2539 = vmul.f32 %v2457, %v2527
    %v2540 = vmul.f32 %v2462, %v2527
    %v2541 = vmul.f32 %v2467, %v2527
    %v2542 = vmul.f32 %v2472, %v2527
    %v2543 = vmul.f32 %v2477, %v2527
    %v2544 = vmul.f32 %v2511, %v2528
    %v2545 = vmul.f32 %v2512, %v2529
    %v2546 = vmul.f32 %v2513, %v2530
    %v2547 = vmul.f32 %v2514, %v2531
    %v2548 = vmul.f32 %v2515, %v2532
    %v2549 = vmul.f32 %v2516, %v2533
    %v2550 = vmul.f32 %v2517, %v2534
    %v2551 = vmul.f32 %v2518, %v2535
    %v2552 = vmul.f32 %v2519, %v2536
    %v2553 = vmul.f32 %v2520, %v2537
    %v2554 = vmul.f32 %v2521, %v2538
    %v2555 = vmul.f32 %v2522, %v2539
    %v2556 = vmul.f32 %v2523, %v2540
    %v2557 = vmul.f32 %v2524, %v2541
    %v2558 = vmul.f32 %v2525, %v2542
    %v2559 = vmul.f32 %v2526, %v2543
    %v2560 = vadd.f32 %v2495, %v2544
    %v2561 = vadd.f32 %v2496, %v2545
    %v2562 = vadd.f32 %v2497, %v2546
    %v2563 = vadd.f32 %v2498, %v2547
    %v2564 = vadd.f32 %v2499, %v2548
    %v2565 = vadd.f32 %v2500, %v2549
    %v2566 = vadd.f32 %v2501, %v2550
    %v2567 = vadd.f32 %v2502, %v2551
    %v2568 = vadd.f32 %v2503, %v2552
    %v2569 = vadd.f32 %v2504, %v2553
    %v2570 = vadd.f32 %v2505, %v2554
    %v2571 = vadd.f32 %v2506, %v2555
    %v2572 = vadd.f32 %v2507, %v2556
    %v2573 = vadd.f32 %v2508, %v2557
    %v2574 = vadd.f32 %v2509, %v2558
    %v2575 = vadd.f32 %v2510, %v2559
    %v2576 = vld [vmem:[%s2] sm:$0xf]
    %2577 = vmatpush.msra.mxu0 %v2575
    %2578 = vmatpush.msra.mxu0 %v2574
    %2579 = vmatpush.msra.mxu0 %v2573
    %2580 = vmatpush.msra.mxu0 %v2572
    %2581 = vmatpush.msra.mxu0 %v2571
    %2582 = vmatpush.msra.mxu0 %v2570
    %2583 = vmatpush.msra.mxu0 %v2569
    %2584 = vmatpush.msra.mxu0 %v2568
    %2585 = vmatpush.msra.mxu0 %v2567
    %2586 = vmatpush.msra.mxu0 %v2566
    %2587 = vmatpush.msra.mxu0 %v2565
    %2588 = vmatpush.msra.mxu0 %v2564
    %2589 = vmatpush.msra.mxu0 %v2563
    %2590 = vmatpush.msra.mxu0 %v2562
    %2591 = vmatpush.msra.mxu0 %v2561
    %2592 = vmatpush.msra.mxu0 %v2560
    %2593 = vmatmul.f32.gmra.mxu0 %v2576
    %v2594 = vpop.f32.mrf.mxu0
    %v2595 = vadd.f32 0.0, %v2594
    %2596 = vdwg.mxu0
    %2597 = vst [vmem:[#allocation5] sm:$0xf] %v2595
    %v2598 = vpack.c.bf16 %v1299, %v1284
    %v2599 = vpack.c.bf16 %v1329, %v1314
    %v2600 = vpack.c.bf16 %v1359, %v1344
    %v2601 = vpack.c.bf16 %v1389, %v1374
    %v2602 = vpack.c.bf16 %v1419, %v1404
    %v2603 = vpack.c.bf16 %v1449, %v1434
    %v2604 = vpack.c.bf16 %v1479, %v1464
    %v2605 = vpack.c.bf16 %v1509, %v1494
    %2606 = vmatpush.bf16.msra.mxu0 %v2605
    %2607 = vmatpush.bf16.msra.mxu0 %v2604
    %2608 = vmatpush.bf16.msra.mxu0 %v2603
    %2609 = vmatpush.bf16.msra.mxu0 %v2602
    %2610 = vmatpush.bf16.msra.mxu0 %v2601
    %2611 = vmatpush.bf16.msra.mxu0 %v2600
    %2612 = vmatpush.bf16.msra.mxu0 %v2599
    %2613 = vmatpush.bf16.msra.mxu0 %v2598
    %2614 = vmatmul.bf16.gmra.mxu0 %v288
    %v2615 = vpop.f32.mrf.mxu0
    %v2616 = vadd.f32 0.0, %v2615
    %v2617 = vpop.f32.mrf.mxu0
    %v2618 = vadd.f32 0.0, %v2617
    %2619 = vmatmul.bf16.gmra.mxu0 %v289
    %v2620 = vpop.f32.mrf.mxu0
    %v2621 = vadd.f32 0.0, %v2620
    %v2622 = vpop.f32.mrf.mxu0
    %v2623 = vadd.f32 0.0, %v2622
    %2624 = vmatmul.bf16.gmra.mxu0 %v290
    %v2625 = vpop.f32.mrf.mxu0
    %v2626 = vadd.f32 0.0, %v2625
    %v2627 = vpop.f32.mrf.mxu0
    %v2628 = vadd.f32 0.0, %v2627
    %2629 = vmatmul.bf16.gmra.mxu0 %v291
    %v2630 = vpop.f32.mrf.mxu0
    %v2631 = vadd.f32 0.0, %v2630
    %v2632 = vpop.f32.mrf.mxu0
    %v2633 = vadd.f32 0.0, %v2632
    %2634 = vmatmul.bf16.gmra.mxu0 %v292
    %v2635 = vpop.f32.mrf.mxu0
    %v2636 = vadd.f32 0.0, %v2635
    %v2637 = vpop.f32.mrf.mxu0
    %v2638 = vadd.f32 0.0, %v2637
    %2639 = vmatmul.bf16.gmra.mxu0 %v293
    %v2640 = vpop.f32.mrf.mxu0
    %v2641 = vadd.f32 0.0, %v2640
    %v2642 = vpop.f32.mrf.mxu0
    %v2643 = vadd.f32 0.0, %v2642
    %2644 = vmatmul.bf16.gmra.mxu0 %v294
    %v2645 = vpop.f32.mrf.mxu0
    %v2646 = vadd.f32 0.0, %v2645
    %v2647 = vpop.f32.mrf.mxu0
    %v2648 = vadd.f32 0.0, %v2647
    %2649 = vmatmul.bf16.gmra.mxu0 %v295
    %v2650 = vpop.f32.mrf.mxu0
    %v2651 = vadd.f32 0.0, %v2650
    %v2652 = vpop.f32.mrf.mxu0
    %v2653 = vadd.f32 0.0, %v2652
    %2654 = vdwg.mxu0
    %2655 = vmatpush.bf16.msra.mxu0 1065369472
    %2656 = vmatpush.bf16.msra.mxu0 1065369472
    %2657 = vmatpush.bf16.msra.mxu0 1065369472
    %2658 = vmatpush.bf16.msra.mxu0 1065369472
    %2659 = vmatpush.bf16.msra.mxu0 1065369472
    %2660 = vmatpush.bf16.msra.mxu0 1065369472
    %2661 = vmatpush.bf16.msra.mxu0 1065369472
    %2662 = vmatpush.bf16.msra.mxu0 1065369472
    %2663 = vmatmul.bf16.gmra.mxu0 %v288
    %v2664 = vpop.f32.mrf.mxu0
    %v2665 = vadd.f32 0.0, %v2664
    %v2666 = vpop.f32.mrf.mxu0
    %v2667 = vadd.f32 0.0, %v2666
    %2668 = vmatmul.bf16.gmra.mxu0 %v289
    %v2669 = vpop.f32.mrf.mxu0
    %v2670 = vadd.f32 0.0, %v2669
    %v2671 = vpop.f32.mrf.mxu0
    %v2672 = vadd.f32 0.0, %v2671
    %2673 = vmatmul.bf16.gmra.mxu0 %v290
    %v2674 = vpop.f32.mrf.mxu0
    %v2675 = vadd.f32 0.0, %v2674
    %v2676 = vpop.f32.mrf.mxu0
    %v2677 = vadd.f32 0.0, %v2676
    %2678 = vmatmul.bf16.gmra.mxu0 %v291
    %v2679 = vpop.f32.mrf.mxu0
    %v2680 = vadd.f32 0.0, %v2679
    %v2681 = vpop.f32.mrf.mxu0
    %v2682 = vadd.f32 0.0, %v2681
    %2683 = vmatmul.bf16.gmra.mxu0 %v292
    %v2684 = vpop.f32.mrf.mxu0
    %v2685 = vadd.f32 0.0, %v2684
    %v2686 = vpop.f32.mrf.mxu0
    %v2687 = vadd.f32 0.0, %v2686
    %2688 = vmatmul.bf16.gmra.mxu0 %v293
    %v2689 = vpop.f32.mrf.mxu0
    %v2690 = vadd.f32 0.0, %v2689
    %v2691 = vpop.f32.mrf.mxu0
    %v2692 = vadd.f32 0.0, %v2691
    %2693 = vmatmul.bf16.gmra.mxu0 %v294
    %v2694 = vpop.f32.mrf.mxu0
    %v2695 = vadd.f32 0.0, %v2694
    %v2696 = vpop.f32.mrf.mxu0
    %v2697 = vadd.f32 0.0, %v2696
    %2698 = vmatmul.bf16.gmra.mxu0 %v295
    %v2699 = vpop.f32.mrf.mxu0
    %v2700 = vadd.f32 0.0, %v2699
    %v2701 = vpop.f32.mrf.mxu0
    %v2702 = vadd.f32 0.0, %v2701
    %2703 = vdwg.mxu0
    %v2704 = vsub.f32 %v2665, %v2616
    %v2705 = vsub.f32 %v2667, %v2618
    %v2706 = vsub.f32 %v2670, %v2621
    %v2707 = vsub.f32 %v2672, %v2623
    %v2708 = vsub.f32 %v2675, %v2626
    %v2709 = vsub.f32 %v2677, %v2628
    %v2710 = vsub.f32 %v2680, %v2631
    %v2711 = vsub.f32 %v2682, %v2633
    %v2712 = vsub.f32 %v2685, %v2636
    %v2713 = vsub.f32 %v2687, %v2638
    %v2714 = vsub.f32 %v2690, %v2641
    %v2715 = vsub.f32 %v2692, %v2643
    %v2716 = vsub.f32 %v2695, %v2646
    %v2717 = vsub.f32 %v2697, %v2648
    %v2718 = vsub.f32 %v2700, %v2651
    %v2719 = vsub.f32 %v2702, %v2653
    %v2720 = vmul.f32 %v1284, %v2616
    %v2721 = vmul.f32 %v1299, %v2618
    %v2722 = vmul.f32 %v1314, %v2621
    %v2723 = vmul.f32 %v1329, %v2623
    %v2724 = vmul.f32 %v1344, %v2626
    %v2725 = vmul.f32 %v1359, %v2628
    %v2726 = vmul.f32 %v1374, %v2631
    %v2727 = vmul.f32 %v1389, %v2633
    %v2728 = vmul.f32 %v1404, %v2636
    %v2729 = vmul.f32 %v1419, %v2638
    %v2730 = vmul.f32 %v1434, %v2641
    %v2731 = vmul.f32 %v1449, %v2643
    %v2732 = vmul.f32 %v1464, %v2646
    %v2733 = vmul.f32 %v1479, %v2648
    %v2734 = vmul.f32 %v1494, %v2651
    %v2735 = vmul.f32 %v1509, %v2653
    %v2736 = vsel %vm1942, %v2720, 0.0
    %v2737 = vsel %vm1942, %v2721, 0.0
    %v2738 = vadd.f32 %v2736, %v2737
    %v2739 = vsel %vm1942, %v2722, 0.0
    %v2740 = vadd.f32 %v2738, %v2739
    %v2741 = vsel %vm1942, %v2723, 0.0
    %v2742 = vadd.f32 %v2740, %v2741
    %v2743 = vsel %vm1942, %v2724, 0.0
    %v2744 = vadd.f32 %v2742, %v2743
    %v2745 = vsel %vm1942, %v2725, 0.0
    %v2746 = vadd.f32 %v2744, %v2745
    %v2747 = vsel %vm1942, %v2726, 0.0
    %v2748 = vadd.f32 %v2746, %v2747
    %v2749 = vsel %vm1942, %v2727, 0.0
    %v2750 = vadd.f32 %v2748, %v2749
    %v2751 = vsel %vm1942, %v2728, 0.0
    %v2752 = vadd.f32 %v2750, %v2751
    %v2753 = vsel %vm1942, %v2729, 0.0
    %v2754 = vadd.f32 %v2752, %v2753
    %v2755 = vsel %vm1942, %v2730, 0.0
    %v2756 = vadd.f32 %v2754, %v2755
    %v2757 = vsel %vm1942, %v2731, 0.0
    %v2758 = vadd.f32 %v2756, %v2757
    %v2759 = vsel %vm1942, %v2732, 0.0
    %v2760 = vadd.f32 %v2758, %v2759
    %v2761 = vsel %vm1942, %v2733, 0.0
    %v2762 = vadd.f32 %v2760, %v2761
    %v2763 = vsel %vm1942, %v2734, 0.0
    %v2764 = vadd.f32 %v2762, %v2763
    %v2765 = vsel %vm1942, %v2735, 0.0
    %v2766 = vadd.f32 %v2764, %v2765
    %2767 = vadd.xlane.f32.xlu0 %v2766
    %v2768 = vpop.xlane.xlu0 %2767
    %v2769 = vrot.slane %v2768, 4
    %v2770 = vadd.f32 %v2768, %v2769
    %v2771 = vrot.slane %v2770, 2
    %v2772 = vadd.f32 %v2770, %v2771
    %v2773 = vrot.slane %v2772, 1
    %v2774 = vadd.f32 %v2772, %v2773
    %s2775 = vtos %v2774
    %v2776 = vstv %s2775
    %v2777 = vmul.f32 %v1284, %v2704
    %v2778 = vmul.f32 %v1299, %v2705
    %v2779 = vmul.f32 %v1314, %v2706
    %v2780 = vmul.f32 %v1329, %v2707
    %v2781 = vmul.f32 %v1344, %v2708
    %v2782 = vmul.f32 %v1359, %v2709
    %v2783 = vmul.f32 %v1374, %v2710
    %v2784 = vmul.f32 %v1389, %v2711
    %v2785 = vmul.f32 %v1404, %v2712
    %v2786 = vmul.f32 %v1419, %v2713
    %v2787 = vmul.f32 %v1434, %v2714
    %v2788 = vmul.f32 %v1449, %v2715
    %v2789 = vmul.f32 %v1464, %v2716
    %v2790 = vmul.f32 %v1479, %v2717
    %v2791 = vmul.f32 %v1494, %v2718
    %v2792 = vmul.f32 %v1509, %v2719
    %v2793 = vsel %vm1942, %v2777, 0.0
    %v2794 = vsel %vm1942, %v2778, 0.0
    %v2795 = vadd.f32 %v2793, %v2794
    %v2796 = vsel %vm1942, %v2779, 0.0
    %v2797 = vadd.f32 %v2795, %v2796
    %v2798 = vsel %vm1942, %v2780, 0.0
    %v2799 = vadd.f32 %v2797, %v2798
    %v2800 = vsel %vm1942, %v2781, 0.0
    %v2801 = vadd.f32 %v2799, %v2800
    %v2802 = vsel %vm1942, %v2782, 0.0
    %v2803 = vadd.f32 %v2801, %v2802
    %v2804 = vsel %vm1942, %v2783, 0.0
    %v2805 = vadd.f32 %v2803, %v2804
    %v2806 = vsel %vm1942, %v2784, 0.0
    %v2807 = vadd.f32 %v2805, %v2806
    %v2808 = vsel %vm1942, %v2785, 0.0
    %v2809 = vadd.f32 %v2807, %v2808
    %v2810 = vsel %vm1942, %v2786, 0.0
    %v2811 = vadd.f32 %v2809, %v2810
    %v2812 = vsel %vm1942, %v2787, 0.0
    %v2813 = vadd.f32 %v2811, %v2812
    %v2814 = vsel %vm1942, %v2788, 0.0
    %v2815 = vadd.f32 %v2813, %v2814
    %v2816 = vsel %vm1942, %v2789, 0.0
    %v2817 = vadd.f32 %v2815, %v2816
    %v2818 = vsel %vm1942, %v2790, 0.0
    %v2819 = vadd.f32 %v2817, %v2818
    %v2820 = vsel %vm1942, %v2791, 0.0
    %v2821 = vadd.f32 %v2819, %v2820
    %v2822 = vsel %vm1942, %v2792, 0.0
    %v2823 = vadd.f32 %v2821, %v2822
    %2824 = vadd.xlane.f32.xlu0 %v2823
    %v2825 = vpop.xlane.xlu0 %2824
    %v2826 = vrot.slane %v2825, 4
    %v2827 = vadd.f32 %v2825, %v2826
    %v2828 = vrot.slane %v2827, 2
    %v2829 = vadd.f32 %v2827, %v2828
    %v2830 = vrot.slane %v2829, 1
    %v2831 = vadd.f32 %v2829, %v2830
    %s2832 = vtos %v2831
    %v2833 = vstv %s2832
    %v2834 = vmul.f32 %v1510, %v2616
    %v2835 = vmul.f32 %v1511, %v2618
    %v2836 = vmul.f32 %v1512, %v2621
    %v2837 = vmul.f32 %v1513, %v2623
    %v2838 = vmul.f32 %v1514, %v2626
    %v2839 = vmul.f32 %v1515, %v2628
    %v2840 = vmul.f32 %v1516, %v2631
    %v2841 = vmul.f32 %v1517, %v2633
    %v2842 = vmul.f32 %v1518, %v2636
    %v2843 = vmul.f32 %v1519, %v2638
    %v2844 = vmul.f32 %v1520, %v2641
    %v2845 = vmul.f32 %v1521, %v2643
    %v2846 = vmul.f32 %v1522, %v2646
    %v2847 = vmul.f32 %v1523, %v2648
    %v2848 = vmul.f32 %v1524, %v2651
    %v2849 = vmul.f32 %v1525, %v2653
    %v2850 = vsel %vm1942, %v2834, 0.0
    %v2851 = vsel %vm1942, %v2835, 0.0
    %v2852 = vadd.f32 %v2850, %v2851
    %v2853 = vsel %vm1942, %v2836, 0.0
    %v2854 = vadd.f32 %v2852, %v2853
    %v2855 = vsel %vm1942, %v2837, 0.0
    %v2856 = vadd.f32 %v2854, %v2855
    %v2857 = vsel %vm1942, %v2838, 0.0
    %v2858 = vadd.f32 %v2856, %v2857
    %v2859 = vsel %vm1942, %v2839, 0.0
    %v2860 = vadd.f32 %v2858, %v2859
    %v2861 = vsel %vm1942, %v2840, 0.0
    %v2862 = vadd.f32 %v2860, %v2861
    %v2863 = vsel %vm1942, %v2841, 0.0
    %v2864 = vadd.f32 %v2862, %v2863
    %v2865 = vsel %vm1942, %v2842, 0.0
    %v2866 = vadd.f32 %v2864, %v2865
    %v2867 = vsel %vm1942, %v2843, 0.0
    %v2868 = vadd.f32 %v2866, %v2867
    %v2869 = vsel %vm1942, %v2844, 0.0
    %v2870 = vadd.f32 %v2868, %v2869
    %v2871 = vsel %vm1942, %v2845, 0.0
    %v2872 = vadd.f32 %v2870, %v2871
    %v2873 = vsel %vm1942, %v2846, 0.0
    %v2874 = vadd.f32 %v2872, %v2873
    %v2875 = vsel %vm1942, %v2847, 0.0
    %v2876 = vadd.f32 %v2874, %v2875
    %v2877 = vsel %vm1942, %v2848, 0.0
    %v2878 = vadd.f32 %v2876, %v2877
    %v2879 = vsel %vm1942, %v2849, 0.0
    %v2880 = vadd.f32 %v2878, %v2879
    %2881 = vadd.xlane.f32.xlu0 %v2880
    %v2882 = vpop.xlane.xlu0 %2881
    %v2883 = vrot.slane %v2882, 4
    %v2884 = vadd.f32 %v2882, %v2883
    %v2885 = vrot.slane %v2884, 2
    %v2886 = vadd.f32 %v2884, %v2885
    %v2887 = vrot.slane %v2886, 1
    %v2888 = vadd.f32 %v2886, %v2887
    %s2889 = vtos %v2888
    %v2890 = vstv %s2889
    %v2891 = vmul.f32 %v1510, %v2704
    %v2892 = vmul.f32 %v1511, %v2705
    %v2893 = vmul.f32 %v1512, %v2706
    %v2894 = vmul.f32 %v1513, %v2707
    %v2895 = vmul.f32 %v1514, %v2708
    %v2896 = vmul.f32 %v1515, %v2709
    %v2897 = vmul.f32 %v1516, %v2710
    %v2898 = vmul.f32 %v1517, %v2711
    %v2899 = vmul.f32 %v1518, %v2712
    %v2900 = vmul.f32 %v1519, %v2713
    %v2901 = vmul.f32 %v1520, %v2714
    %v2902 = vmul.f32 %v1521, %v2715
    %v2903 = vmul.f32 %v1522, %v2716
    %v2904 = vmul.f32 %v1523, %v2717
    %v2905 = vmul.f32 %v1524, %v2718
    %v2906 = vmul.f32 %v1525, %v2719
    %v2907 = vsel %vm1942, %v2891, 0.0
    %v2908 = vsel %vm1942, %v2892, 0.0
    %v2909 = vadd.f32 %v2907, %v2908
    %v2910 = vsel %vm1942, %v2893, 0.0
    %v2911 = vadd.f32 %v2909, %v2910
    %v2912 = vsel %vm1942, %v2894, 0.0
    %v2913 = vadd.f32 %v2911, %v2912
    %v2914 = vsel %vm1942, %v2895, 0.0
    %v2915 = vadd.f32 %v2913, %v2914
    %v2916 = vsel %vm1942, %v2896, 0.0
    %v2917 = vadd.f32 %v2915, %v2916
    %v2918 = vsel %vm1942, %v2897, 0.0
    %v2919 = vadd.f32 %v2917, %v2918
    %v2920 = vsel %vm1942, %v2898, 0.0
    %v2921 = vadd.f32 %v2919, %v2920
    %v2922 = vsel %vm1942, %v2899, 0.0
    %v2923 = vadd.f32 %v2921, %v2922
    %v2924 = vsel %vm1942, %v2900, 0.0
    %v2925 = vadd.f32 %v2923, %v2924
    %v2926 = vsel %vm1942, %v2901, 0.0
    %v2927 = vadd.f32 %v2925, %v2926
    %v2928 = vsel %vm1942, %v2902, 0.0
    %v2929 = vadd.f32 %v2927, %v2928
    %v2930 = vsel %vm1942, %v2903, 0.0
    %v2931 = vadd.f32 %v2929, %v2930
    %v2932 = vsel %vm1942, %v2904, 0.0
    %v2933 = vadd.f32 %v2931, %v2932
    %v2934 = vsel %vm1942, %v2905, 0.0
    %v2935 = vadd.f32 %v2933, %v2934
    %v2936 = vsel %vm1942, %v2906, 0.0
    %v2937 = vadd.f32 %v2935, %v2936
    %2938 = vadd.xlane.f32.xlu0 %v2937
    %v2939 = vpop.xlane.xlu0 %2938
    %v2940 = vrot.slane %v2939, 4
    %v2941 = vadd.f32 %v2939, %v2940
    %v2942 = vrot.slane %v2941, 2
    %v2943 = vadd.f32 %v2941, %v2942
    %v2944 = vrot.slane %v2943, 1
    %v2945 = vadd.f32 %v2943, %v2944
    %s2946 = vtos %v2945
    %v2947 = vstv %s2946
    %v2948 = vand.u32 2147483647, %v2776
    %v2949 = vand.u32 2147483647, %v2833
    %v2950 = vadd.f32 %v2948, %v2949
    %v2951 = vmax.f32 %v2950, 1e-12
    %v2952 = vrcp.pop %v2951
    %v2953 = vmul.f32 %v2951, %v2952
    %v2954 = vsub.f32 1.0, %v2953
    %v2955 = vmul.f32 %v2952, %v2954
    %v2956 = vadd.f32 %v2952, %v2955
    %vm2957 = vweird.f32 %v2951
    %vm2958 = vweird.f32 %v2952
    %vm2959 = vmor %vm2957, %vm2958
    %v2960 = vsel %vm2959, %v2952, %v2956
    %v2961 = vand.u32 2147483647, %v2951
    %vm2962 = vcmp.eq.f32.partialorder %v2961, 8.507059e+37
    %v2963 = vand.u32 %v2951, 2147483648
    %v2964 = vor.u32 1.1754944e-38, %v2963
    %v2965 = vsel %vm2962, %v2964, %v2960
    %v2966 = vmul.f32 %v2776, %v2965
    %v2967 = vand.u32 2147483647, %v2890
    %v2968 = vand.u32 2147483647, %v2947
    %v2969 = vadd.f32 %v2967, %v2968
    %v2970 = vmax.f32 %v2969, 1e-12
    %v2971 = vrcp.pop %v2970
    %v2972 = vmul.f32 %v2970, %v2971
    %v2973 = vsub.f32 1.0, %v2972
    %v2974 = vmul.f32 %v2971, %v2973
    %v2975 = vadd.f32 %v2971, %v2974
    %vm2976 = vweird.f32 %v2970
    %vm2977 = vweird.f32 %v2971
    %vm2978 = vmor %vm2976, %vm2977
    %v2979 = vsel %vm2978, %v2971, %v2975
    %v2980 = vand.u32 2147483647, %v2970
    %vm2981 = vcmp.eq.f32.partialorder %v2980, 8.507059e+37
    %v2982 = vand.u32 %v2970, 2147483648
    %v2983 = vor.u32 1.1754944e-38, %v2982
    %v2984 = vsel %vm2981, %v2983, %v2979
    %v2985 = vmul.f32 %v2947, %v2984
    %v2986 = vsub.f32 %v2966, 1.0
    %v2987 = vmul.f32 %v2986, %v2986
    %v2988 = vsub.f32 %v2985, 1.0
    %v2989 = vmul.f32 %v2988, %v2988
    %v2990 = vadd.f32 %v2987, %v2989
    %v2991 = vmul.f32 %v2990, 0.5
    %v2992 = vld [vmem:[%s19] sm:$0xff]
    %v2993 = vld [vmem:[%s19 + $0x8] sm:$0xff]
    %v2994 = vld [vmem:[%s19 + $0x10] sm:$0xff]
    %v2995 = vld [vmem:[%s19 + $0x18] sm:$0xff]
    %v2996 = vld [vmem:[%s19 + $0x20] sm:$0xff]
    %v2997 = vld [vmem:[%s19 + $0x28] sm:$0xff]
    %v2998 = vld [vmem:[%s19 + $0x30] sm:$0xff]
    %v2999 = vld [vmem:[%s19 + $0x38] sm:$0xff]
    %v3000 = vld [vmem:[%s19 + $0x40] sm:$0xff]
    %v3001 = vld [vmem:[%s19 + $0x48] sm:$0xff]
    %v3002 = vld [vmem:[%s19 + $0x50] sm:$0xff]
    %v3003 = vld [vmem:[%s19 + $0x58] sm:$0xff]
    %v3004 = vld [vmem:[%s19 + $0x60] sm:$0xff]
    %v3005 = vld [vmem:[%s19 + $0x68] sm:$0xff]
    %v3006 = vld [vmem:[%s19 + $0x70] sm:$0xff]
    %v3007 = vld [vmem:[%s19 + $0x78] sm:$0xff]
    %3008 = vmatpush.msra.mxu0 %v3007
    %3009 = vmatpush.msra.mxu0 %v3006
    %3010 = vmatpush.msra.mxu0 %v3005
    %3011 = vmatpush.msra.mxu0 %v3004
    %3012 = vmatpush.msra.mxu0 %v3003
    %3013 = vmatpush.msra.mxu0 %v3002
    %3014 = vmatpush.msra.mxu0 %v3001
    %3015 = vmatpush.msra.mxu0 %v3000
    %3016 = vmatpush.msra.mxu0 %v2999
    %3017 = vmatpush.msra.mxu0 %v2998
    %3018 = vmatpush.msra.mxu0 %v2997
    %3019 = vmatpush.msra.mxu0 %v2996
    %3020 = vmatpush.msra.mxu0 %v2995
    %3021 = vmatpush.msra.mxu0 %v2994
    %3022 = vmatpush.msra.mxu0 %v2993
    %3023 = vmatpush.msra.mxu0 %v2992
    %3024 = vmatmul.f32.gmra.mxu0 %v2595
    %v3025 = vpop.f32.mrf.mxu0
    %v3026 = vadd.f32 0.0, %v3025
    %3027 = vdwg.mxu0
    %v3028 = vmul.f32 %v2595, %v2595
    %vm3029 = vcmask 1043456
    %v3030 = vsel %vm3029, %v3028, 0.0
    %3031 = vadd.xlane.f32.xlu0 %v3030
    %v3032 = vpop.xlane.xlu0 %3031
    %v3033 = vmul.f32 %v2992, %v2992
    %v3034 = vmul.f32 %v2993, %v2993
    %v3035 = vmul.f32 %v2994, %v2994
    %v3036 = vmul.f32 %v2995, %v2995
    %v3037 = vmul.f32 %v2996, %v2996
    %v3038 = vmul.f32 %v2997, %v2997
    %v3039 = vmul.f32 %v2998, %v2998
    %v3040 = vmul.f32 %v2999, %v2999
    %v3041 = vmul.f32 %v3000, %v3000
    %v3042 = vmul.f32 %v3001, %v3001
    %v3043 = vmul.f32 %v3002, %v3002
    %v3044 = vmul.f32 %v3003, %v3003
    %v3045 = vmul.f32 %v3004, %v3004
    %v3046 = vmul.f32 %v3005, %v3005
    %v3047 = vmul.f32 %v3006, %v3006
    %v3048 = vmul.f32 %v3007, %v3007
    %vm3049 = vcmask 64512
    %v3050 = vsel %vm3049, %v3033, 0.0
    %v3051 = vsel %vm3049, %v3034, 0.0
    %v3052 = vadd.f32 %v3050, %v3051
    %v3053 = vsel %vm3049, %v3035, 0.0
    %v3054 = vadd.f32 %v3052, %v3053
    %v3055 = vsel %vm3049, %v3036, 0.0
    %v3056 = vadd.f32 %v3054, %v3055
    %v3057 = vsel %vm3049, %v3037, 0.0
    %v3058 = vadd.f32 %v3056, %v3057
    %v3059 = vsel %vm3049, %v3038, 0.0
    %v3060 = vadd.f32 %v3058, %v3059
    %v3061 = vsel %vm3049, %v3039, 0.0
    %v3062 = vadd.f32 %v3060, %v3061
    %v3063 = vsel %vm3049, %v3040, 0.0
    %v3064 = vadd.f32 %v3062, %v3063
    %v3065 = vsel %vm3049, %v3041, 0.0
    %v3066 = vadd.f32 %v3064, %v3065
    %v3067 = vsel %vm3049, %v3042, 0.0
    %v3068 = vadd.f32 %v3066, %v3067
    %v3069 = vsel %vm3049, %v3043, 0.0
    %v3070 = vadd.f32 %v3068, %v3069
    %v3071 = vsel %vm3049, %v3044, 0.0
    %v3072 = vadd.f32 %v3070, %v3071
    %v3073 = vsel %vm3049, %v3045, 0.0
    %v3074 = vadd.f32 %v3072, %v3073
    %v3075 = vsel %vm3049, %v3046, 0.0
    %v3076 = vadd.f32 %v3074, %v3075
    %v3077 = vsel %vm3049, %v3047, 0.0
    %v3078 = vadd.f32 %v3076, %v3077
    %v3079 = vsel %vm3049, %v3048, 0.0
    %v3080 = vadd.f32 %v3078, %v3079
    %v3081 = vrot.slane %v3080, 4
    %v3082 = vadd.f32 %v3080, %v3081
    %v3083 = vrot.slane %v3082, 2
    %v3084 = vadd.f32 %v3082, %v3083
    %v3085 = vrot.slane %v3084, 1
    %v3086 = vadd.f32 %v3084, %v3085
    %v3087 = vmul.f32 %v3026, -2.0
    %v3088 = vadd.f32 %v3087, %v3032
    %v3089 = vadd.f32 %v3088, %v3086
    %v3090 = vmax.f32 %v3089, 0.0
    %v3091 = vadd.f32 %v3090, 1.0
    %v3092 = vadd.f32 %v3090, 0.0001
    %v3093 = vrcp.pop %v3092
    %v3094 = vmul.f32 %v3092, %v3093
    %v3095 = vsub.f32 1.0, %v3094
    %v3096 = vmul.f32 %v3093, %v3095
    %v3097 = vadd.f32 %v3093, %v3096
    %vm3098 = vweird.f32 %v3092
    %vm3099 = vweird.f32 %v3093
    %vm3100 = vmor %vm3098, %vm3099
    %v3101 = vsel %vm3100, %v3093, %v3097
    %v3102 = vand.u32 2147483647, %v3092
    %vm3103 = vcmp.eq.f32.partialorder %v3102, 8.507059e+37
    %v3104 = vand.u32 %v3092, 2147483648
    %v3105 = vor.u32 1.1754944e-38, %v3104
    %v3106 = vsel %vm3103, %v3105, %v3101
    %v3107 = vmul.f32 %v3091, %v3106
    %v3108 = vlog2.pop %v3107
    %v3109 = vmul.f32 %v3108, 0.6931472
    %v3110 = vld [vmem:[%s20] sm:$0xff]
    %v3111 = vld [vmem:[%s21] sm:$0xff]
    %v3112 = vld [vmem:[%s21 + $0x8] sm:$0xff]
    %v3113 = vld [vmem:[%s21 + $0x10] sm:$0xff]
    %v3114 = vld [vmem:[%s21 + $0x18] sm:$0xff]
    %v3115 = vld [vmem:[%s21 + $0x20] sm:$0xff]
    %v3116 = vld [vmem:[%s21 + $0x28] sm:$0xff]
    %v3117 = vld [vmem:[%s21 + $0x30] sm:$0xff]
    %v3118 = vld [vmem:[%s21 + $0x38] sm:$0xff]
    %v3119 = vld [vmem:[%s21 + $0x40] sm:$0xff]
    %v3120 = vld [vmem:[%s21 + $0x48] sm:$0xff]
    %v3121 = vld [vmem:[%s21 + $0x50] sm:$0xff]
    %v3122 = vld [vmem:[%s21 + $0x58] sm:$0xff]
    %v3123 = vld [vmem:[%s21 + $0x60] sm:$0xff]
    %v3124 = vld [vmem:[%s21 + $0x68] sm:$0xff]
    %v3125 = vld [vmem:[%s21 + $0x70] sm:$0xff]
    %v3126 = vld [vmem:[%s21 + $0x78] sm:$0xff]
    %3127 = vmatpush.msra.mxu0 %v3126
    %3128 = vmatpush.msra.mxu0 %v3125
    %3129 = vmatpush.msra.mxu0 %v3124
    %3130 = vmatpush.msra.mxu0 %v3123
    %3131 = vmatpush.msra.mxu0 %v3122
    %3132 = vmatpush.msra.mxu0 %v3121
    %3133 = vmatpush.msra.mxu0 %v3120
    %3134 = vmatpush.msra.mxu0 %v3119
    %3135 = vmatpush.msra.mxu0 %v3118
    %3136 = vmatpush.msra.mxu0 %v3117
    %3137 = vmatpush.msra.mxu0 %v3116
    %3138 = vmatpush.msra.mxu0 %v3115
    %3139 = vmatpush.msra.mxu0 %v3114
    %3140 = vmatpush.msra.mxu0 %v3113
    %3141 = vmatpush.msra.mxu0 %v3112
    %3142 = vmatpush.msra.mxu0 %v3111
    %3143 = vmatmul.f32.gmra.mxu0 %v2595
    %v3144 = vpop.f32.mrf.mxu0
    %v3145 = vadd.f32 0.0, %v3144
    %3146 = vdwg.mxu0
    %v3148 = vsel %vm3049, %v3109, 0
    %3150 = vmatpush.msra.mxu0 0.0
    %3151 = vmatpush.msra.mxu0 0.0
    %3152 = vmatpush.msra.mxu0 0.0
    %3153 = vmatpush.msra.mxu0 0.0
    %3154 = vmatpush.msra.mxu0 0.0
    %3155 = vmatpush.msra.mxu0 0.0
    %3156 = vmatpush.msra.mxu0 0.0
    %3157 = vmatpush.msra.mxu0 0.0
    %3158 = vmatpush.msra.mxu0 0.0
    %3159 = vmatpush.msra.mxu0 0.0
    %3160 = vmatpush.msra.mxu0 0.0
    %3161 = vmatpush.msra.mxu0 0.0
    %3162 = vmatpush.msra.mxu0 0.0
    %3163 = vmatpush.msra.mxu0 0.0
    %3164 = vmatpush.msra.mxu0 0.0
    %3165 = vmatpush.msra.mxu0 %v3110
    %3166 = vmatmul.f32.gmra.mxu0 %v3148
    %v3167 = vpop.f32.mrf.mxu0
    %v3168 = vadd.f32 %v3145, %v3167
    %3169 = vdwg.mxu0
    %vm3170 = vcmask 11264
    %v3171 = vsel %vm3170, %v3168, -inf
    %3172 = vmax.xlane.f32.xlu0 %v3171
    %v3173 = vpop.xlane.xlu0 %3172
    %v3174 = vsub.f32 %v3168, %v3173
    %v3175 = vmul.f32 %v3174, 1.442695
    %v3176 = vpow.pop %v3175
    %v3177 = vsel %vm3170, %v3176, 0.0
    %3178 = vadd.xlane.f32.xlu0 %v3177
    %v3179 = vpop.xlane.xlu0 %3178
    %v3180 = vrcp.pop %v3179
    %v3181 = vmul.f32 %v3179, %v3180
    %v3182 = vsub.f32 1.0, %v3181
    %v3183 = vmul.f32 %v3180, %v3182
    %v3184 = vadd.f32 %v3180, %v3183
    %vm3185 = vweird.f32 %v3179
    %vm3186 = vweird.f32 %v3180
    %vm3187 = vmor %vm3185, %vm3186
    %v3188 = vsel %vm3187, %v3180, %v3184
    %v3189 = vand.u32 2147483647, %v3179
    %vm3190 = vcmp.eq.f32.partialorder %v3189, 8.507059e+37
    %v3191 = vand.u32 %v3179, 2147483648
    %v3192 = vor.u32 1.1754944e-38, %v3191
    %v3193 = vsel %vm3190, %v3192, %v3188
    %v3194 = vmul.f32 %v3176, %v3193
    %3195 = vst [vmem:[#allocation3] sm:$0xf] 0.0
    %3196 = vst.msk [vmem:[#allocation3] sm:$0xf] %vm3170, %v3168
    %3198 = vrot.lane.b32.xlu0 %v3194, 2
    %v3199 = vpop.permute.xlu0 %3198
    %vm3201 = vcmask 27664
    %3202 = vst.msk [vmem:[#allocation3] sm:$0xf] %vm3201, %v3199
    %3203 = vrot.lane.b32.xlu0 %v3109, 4
    %v3204 = vpop.permute.xlu0 %3203
    %vm3206 = vcmask 93216
    %3207 = vst.msk [vmem:[#allocation3] sm:$0xf] %vm3206, %v3204
    %3209 = vrot.lane.b32.xlu0 %v3090, 12
    %v3210 = vpop.permute.xlu0 %3209
    %vm3212 = vcmask 158816
    %3213 = vst.msk [vmem:[#allocation3] sm:$0xf] %vm3212, %v3210
    %vm3214 = vcmask 167072
    %3215 = vst.msk [vmem:[#allocation3] sm:$0xf] %vm3214, %v2302
    %vm3216 = vcmask 175272
    %3217 = vst.msk [vmem:[#allocation3] sm:$0xf] %vm3216, %v2991
    // Predicated region
    $region90: #{tpu_custom_call.1} parent=1 // pred_check
      _
    $region91: #{tpu_custom_call.1} parent=1 // pred_check_branch
      %3219 = sbr.rel (0) target = $region93
    $region92: #{tpu_custom_call.1} parent=1 // pred_region
      %3221 = vsyncadd [#allocation4], 0
      %s3223 = sshll.u32 [#allocation3], 4
      %s3224 = int_to_ptr.vmem [resolvable:$true] %s3223
      %s3225 = sshll.u32 %s22, 4
      %s3226 = int_to_ptr.hbm [resolvable:$true] %s3225
      %3228 = dma.vmem_to_hbm [thread:$0]  %s3224, 64, %s3226, [#allocation4]
    $region93: #{tpu_custom_call.1} parent=1 // pred_fallthru
      _
    // Predicated region
    $region94: #{tpu_custom_call.1} parent=1 // pred_check
      _
    $region95: #{tpu_custom_call.1} parent=1 // pred_check_branch
      %3230 = sbr.rel (0) target = $region97
    $region96: #{tpu_custom_call.1} parent=1 // pred_region
      %3232 = vsyncadd [#allocation6], 0
      %s3234 = sshll.u32 [#allocation5], 4
      %s3235 = int_to_ptr.vmem [resolvable:$true] %s3234
      %s3236 = sshll.u32 %s23, 4
      %s3237 = int_to_ptr.hbm [resolvable:$true] %s3236
      %3239 = dma.vmem_to_hbm [thread:$0]  %s3235, 64, %s3237, [#allocation6]
    $region97: #{tpu_custom_call.1} parent=1 // pred_fallthru
      _
    // Predicated region
    $region98: #{tpu_custom_call.1} parent=1 // pred_check
      _
    $region99: #{tpu_custom_call.1} parent=1 // pred_check_branch
      %3241 = sbr.rel (0) target = $region101
    $region100: #{tpu_custom_call.1} parent=1 // pred_region
      _
    $region101: #{tpu_custom_call.1} parent=1 // pred_fallthru
      _
    // Predicated region
    $region102: #{tpu_custom_call.1} parent=1 // pred_check
      _
    $region103: #{tpu_custom_call.1} parent=1 // pred_check_branch
      %3243 = sbr.rel (0) target = $region105
    $region104: #{tpu_custom_call.1} parent=1 // pred_region
      %3245 = dma.done [#allocation4], 64
    $region105: #{tpu_custom_call.1} parent=1 // pred_fallthru
      _
    // Predicated region
    $region106: #{tpu_custom_call.1} parent=1 // pred_check
      _
    $region107: #{tpu_custom_call.1} parent=1 // pred_check_branch
      %3247 = sbr.rel (0) target = $region109
    $region108: #{tpu_custom_call.1} parent=1 // pred_region
      %3249 = dma.done [#allocation6], 64
    $region109: #{tpu_custom_call.1} parent=1 // pred_fallthru
      _
    // Predicated region
    $region110: #{tpu_custom_call.1} parent=1 // pred_check
      _
    $region111: #{tpu_custom_call.1} parent=1 // pred_check_branch
      %3251 = sbr.rel (0) target = $region113
    $region112: #{tpu_custom_call.1} parent=1 // pred_region
      _
    $region113: #{tpu_custom_call.1} parent=1 // pred_fallthru
      _
    %3252 = vsyncpa [#allocation4], 1
    %3253 = vsyncpa [#allocation6], 1

</llo_original>
